<compile_context>
chip_gen: v5e
topology: v5e:2x2
jax: 0.10.0
libtpu: 0.0.40
codegen_flags: <defaults>
</compile_context>

<pallas_src>
from functools import partial

import jax
import jax.numpy as jnp
import numpy as np
from jax.experimental import pallas as pl
from jax.experimental.pallas import tpu as pltpu

LANE = 128


def _round_up(x, m):
    return (x + m - 1) // m * m


# ----------------------------- Pallas kernels ------------------------------ #

def _direct_conv_taps(ph_ref, w_ref, *, ksize, stride, Ho, Wo):
    """Direct KxK conv for one image, given a stride-phase-decomposed input.

    ph_ref : (1, stride*stride, Hs, Ws, Cin_pad) bf16  phase-split padded input
    w_ref  : (ksize*ksize, Cin_pad, Cout_pad)    bf16  per-tap weights (BN scale folded)
    returns: (Ho*Wo, Cout_pad) f32 accumulator
    """
    cin = ph_ref.shape[-1]
    cout = w_ref.shape[-1]
    acc = jnp.zeros((Ho * Wo, cout), jnp.float32)
    for t in range(ksize * ksize):
        dh, dw = t // ksize, t % ksize
        p = (dh % stride) * stride + (dw % stride)       # phase index (static)
        qh, qw = dh // stride, dw // stride              # offset inside phase
        tap = ph_ref[0, p, pl.ds(qh, Ho), pl.ds(qw, Wo), :]        # (Ho, Wo, Cin)
        acc = acc + jnp.dot(tap.reshape(Ho * Wo, cin), w_ref[t],
                            preferred_element_type=jnp.float32)
    return acc


def conv_bn_relu_kernel(ph_ref, w_ref, b_ref, o_ref, *, ksize, stride, Ho, Wo):
    """o = relu( conv(x) * bn_scale + bn_bias )   (scale pre-folded into w)."""
    acc = _direct_conv_taps(ph_ref, w_ref, ksize=ksize, stride=stride, Ho=Ho, Wo=Wo)
    o_ref[0] = jnp.maximum(acc + b_ref[...], 0.0).astype(o_ref.dtype)


def conv_bn_relu_add_relu_kernel(ph_ref, w_ref, b_ref, xs_ref, ws_ref, bs_ref,
                                 o_ref, *, ksize, stride, Ho, Wo):
    """o = relu( relu(conv2(y)*s2 + b2) + (xs @ ws + bs) )  — fused shortcut."""
    acc = _direct_conv_taps(ph_ref, w_ref, ksize=ksize, stride=stride, Ho=Ho, Wo=Wo)
    out = jnp.maximum(acc + b_ref[...], 0.0)                       # bn2 + relu2
    xs = xs_ref[0].reshape(Ho * Wo, xs_ref.shape[-1])
    res = jnp.dot(xs, ws_ref[...], preferred_element_type=jnp.float32) + bs_ref[...]
    o_ref[0] = jnp.maximum(out + res, 0.0).astype(o_ref.dtype)     # += shortcut; out_relu


# ------------------------------ pallas_call glue ---------------------------- #

def _compiler_params():
    return pltpu.CompilerParams(
        dimension_semantics=("parallel",),
        vmem_limit_bytes=32 * 1024 * 1024,
    )


def _nbytes(*arrs):
    return int(sum(a.size * a.dtype.itemsize for a in arrs))


def pallas_conv_bn_relu(ph, w_taps, bias, *, ksize, stride, Ho, Wo,
                        out_dtype=jnp.bfloat16):
    n = ph.shape[0]
    cout = w_taps.shape[-1]
    flops = 2 * n * Ho * Wo * (ksize * ksize * ph.shape[-1]) * cout
    cost = pl.CostEstimate(
        flops=int(flops), transcendentals=0,
        bytes_accessed=_nbytes(ph, w_taps, bias)
        + int(n * Ho * Wo * cout * jnp.dtype(out_dtype).itemsize))
    kern = partial(conv_bn_relu_kernel, ksize=ksize, stride=stride, Ho=Ho, Wo=Wo)
    return pl.pallas_call(
        kern,
        grid=(n,),
        in_specs=[
            pl.BlockSpec((1,) + ph.shape[1:], lambda i: (i, 0, 0, 0, 0)),
            pl.BlockSpec(w_taps.shape, lambda i: (0, 0, 0)),   # VMEM-resident
            pl.BlockSpec(bias.shape, lambda i: (0, 0)),        # VMEM-resident
        ],
        out_specs=pl.BlockSpec((1, Ho * Wo, cout), lambda i: (i, 0, 0)),
        out_shape=jax.ShapeDtypeStruct((n, Ho * Wo, cout), out_dtype),
        compiler_params=_compiler_params(),
        cost_estimate=cost,
    )(ph, w_taps, bias)


def pallas_conv_bn_relu_add_relu(ph, w_taps, bias, xs, ws, bs, *, ksize, Ho, Wo,
                                 out_dtype=jnp.float32):
    n = ph.shape[0]
    cout = w_taps.shape[-1]
    flops = 2 * n * Ho * Wo * (ksize * ksize * ph.shape[-1] + xs.shape[-1]) * cout
    cost = pl.CostEstimate(
        flops=int(flops), transcendentals=0,
        bytes_accessed=_nbytes(ph, w_taps, bias, xs, ws, bs)
        + int(n * Ho * Wo * cout * jnp.dtype(out_dtype).itemsize))
    kern = partial(conv_bn_relu_add_relu_kernel, ksize=ksize, stride=1, Ho=Ho, Wo=Wo)
    return pl.pallas_call(
        kern,
        grid=(n,),
        in_specs=[
            pl.BlockSpec((1,) + ph.shape[1:], lambda i: (i, 0, 0, 0, 0)),
            pl.BlockSpec(w_taps.shape, lambda i: (0, 0, 0)),
            pl.BlockSpec(bias.shape, lambda i: (0, 0)),
            pl.BlockSpec((1,) + xs.shape[1:], lambda i: (i, 0, 0, 0)),
            pl.BlockSpec(ws.shape, lambda i: (0, 0)),
            pl.BlockSpec(bs.shape, lambda i: (0, 0)),
        ],
        out_specs=pl.BlockSpec((1, Ho * Wo, cout), lambda i: (i, 0, 0)),
        out_shape=jax.ShapeDtypeStruct((n, Ho * Wo, cout), out_dtype),
        compiler_params=_compiler_params(),
        cost_estimate=cost,
    )(ph, w_taps, bias, xs, ws, bs)


# ------------------------------ host-side glue ------------------------------ #

def _pad_channels(x, c_pad):
    c = x.shape[-1]
    if c == c_pad:
        return x
    return jnp.pad(x, [(0, 0)] * (x.ndim - 1) + [(0, c_pad - c)])


def phase_decompose(x_nhwc, *, pad, stride, c_pad):
    """Zero-pad spatially, pad channels to c_pad, split into stride^2 phases.

    Returns bf16 (N, stride*stride, Hs, Ws, c_pad); phase p = a*stride + b
    holds x_pad[:, a::stride, b::stride, :].  Pure reshape/transpose — total
    bytes equal the padded input (no im2col blow-up).
    """
    n, h, w, _ = x_nhwc.shape
    xp = _pad_channels(x_nhwc, c_pad)
    xp = jnp.pad(xp, ((0, 0), (pad, pad), (pad, pad), (0, 0)))
    hp, wp = h + 2 * pad, w + 2 * pad
    s = stride
    hs, ws = -(-hp // s), -(-wp // s)
    xp = jnp.pad(xp, ((0, 0), (0, hs * s - hp), (0, ws * s - wp), (0, 0)))
    xp = xp.reshape(n, hs, s, ws, s, c_pad)
    xp = jnp.transpose(xp, (0, 2, 4, 1, 3, 5)).reshape(n, s * s, hs, ws, c_pad)
    return xp.astype(jnp.bfloat16)


def weight_taps(w_oihw, scale, c_in_pad, c_out_pad):
    """OIHW -> (kh*kw, Cin_pad, Cout_pad) bf16 with BN scale folded into columns."""
    cout, cin, kh, kw = w_oihw.shape
    w = jnp.transpose(w_oihw, (2, 3, 1, 0)).reshape(kh * kw, cin, cout)
    w = w * scale.reshape(1, 1, cout)
    w = jnp.pad(w, ((0, 0), (0, c_in_pad - cin), (0, c_out_pad - cout)))
    return w.astype(jnp.bfloat16)


def bn_fold(gamma, beta, mean, var, eps=1e-5):
    scale = gamma / jnp.sqrt(var + eps)
    bias = beta - mean * scale
    return scale, bias


def _pad_bias(bias, c_out_pad):
    return jnp.pad(bias, (0, c_out_pad - bias.shape[0])).reshape(1, c_out_pad)


def basic_block_forward(x_nchw, params, stride):
    """Pallas implementation of BasicBlock.forward (BatchNorm in eval mode)."""
    n, cin, h, w = x_nchw.shape
    planes = params["conv1"].shape[0]
    x = jnp.transpose(x_nchw, (0, 2, 3, 1)).astype(jnp.float32)        # NHWC

    cin_pad = _round_up(cin, LANE)
    cmid_pad = _round_up(planes, LANE)
    cout_pad = _round_up(planes, LANE)

    ho = (h + 2 - 3) // stride + 1
    wo = (w + 2 - 3) // stride + 1

    # ---- conv1 (3x3, stride) + bn1 + relu1 ---------------------------------
    s1, b1 = bn_fold(*params["bn1"])
    ph1 = phase_decompose(x, pad=1, stride=stride, c_pad=cin_pad)
    w1 = weight_taps(params["conv1"], s1, cin_pad, cmid_pad)
    y1 = pallas_conv_bn_relu(ph1, w1, _pad_bias(b1, cmid_pad),
                             ksize=3, stride=stride, Ho=ho, Wo=wo,
                             out_dtype=jnp.bfloat16)           # (N, Ho*Wo, Cmid)

    # ---- shortcut operands (fused into the conv2 kernel) -------------------
    if stride != 1 or cin != planes:
        ss, sb = bn_fold(*params["bn_s"])
        xs = _pad_channels(x[:, ::stride, ::stride, :], cin_pad).astype(jnp.bfloat16)
        ws = jnp.transpose(params["conv_s"][:, :, 0, 0]) * ss.reshape(1, -1)
        ws = jnp.pad(ws, ((0, cin_pad - cin), (0, cout_pad - planes))).astype(jnp.bfloat16)
        bs = _pad_bias(sb, cout_pad)
    else:
        # identity shortcut: pass x through an identity 1x1 "projection"
        xs = _pad_channels(x, cout_pad).astype(jnp.bfloat16)
        ws = jnp.pad(jnp.eye(planes, dtype=jnp.float32),
                     ((0, cout_pad - planes), (0, cout_pad - planes))).astype(jnp.bfloat16)
        bs = jnp.zeros((1, cout_pad), jnp.float32)

    # ---- conv2 (3x3, stride 1) + bn2 + relu2, += shortcut, out_relu --------
    s2, b2 = bn_fold(*params["bn2"])
    y1_nhwc = y1.reshape(n, ho, wo, cmid_pad)
    ph2 = phase_decompose(y1_nhwc, pad=1, stride=1, c_pad=cmid_pad)
    w2 = weight_taps(params["conv2"], s2, cmid_pad, cout_pad)
    y2 = pallas_conv_bn_relu_add_relu(ph2, w2, _pad_bias(b2, cout_pad),
                                      xs, ws, bs, ksize=3, Ho=ho, Wo=wo,
                                      out_dtype=jnp.float32)   # (N, Ho*Wo, Cout)

    out = y2[:, :, :planes].reshape(n, ho, wo, planes)
    return jnp.transpose(out, (0, 3, 1, 2))                    # back to NCHW


# ----------------------------- pure-JAX reference --------------------------- #

def _ref_conv(x_nhwc, w_oihw, stride, padding):
    w = jnp.transpose(w_oihw, (2, 3, 1, 0))                    # HWIO
    return jax.lax.conv_general_dilated(
        x_nhwc, w, window_strides=(stride, stride),
        padding=[(padding, padding), (padding, padding)],
        dimension_numbers=("NHWC", "HWIO", "NHWC"))


def basic_block_reference(x_nchw, params, stride):
    x = jnp.transpose(x_nchw, (0, 2, 3, 1)).astype(jnp.float32)
    planes = params["conv1"].shape[0]
    s1, b1 = bn_fold(*params["bn1"])
    y = jnp.maximum(_ref_conv(x, params["conv1"], stride, 1) * s1 + b1, 0.0)
    s2, b2 = bn_fold(*params["bn2"])
    y = jnp.maximum(_ref_conv(y, params["conv2"], 1, 1) * s2 + b2, 0.0)   # relu2
    if stride != 1 or x.shape[-1] != planes:
        ss, sb = bn_fold(*params["bn_s"])
        res = _ref_conv(x, params["conv_s"], stride, 0) * ss + sb
    else:
        res = x
    out = jnp.maximum(y + res, 0.0)
    return jnp.transpose(out, (0, 3, 1, 2))


# ----------------------------------- main ----------------------------------- #

def _make_params(key, in_planes, planes, stride):
    ks = jax.random.split(key, 6)

    def bn_params(k):
        k1, k2, k3, k4 = jax.random.split(k, 4)
        gamma = 1.0 + 0.1 * jax.random.normal(k1, (planes,), jnp.float32)
        beta = 0.1 * jax.random.normal(k2, (planes,), jnp.float32)
        mean = 0.1 * jax.random.normal(k3, (planes,), jnp.float32)
        var = 0.5 + jnp.abs(jax.random.normal(k4, (planes,), jnp.float32))
        return (gamma, beta, mean, var)

    params = {
        "conv1": 0.1 * jax.random.normal(ks[0], (planes, in_planes, 3, 3), jnp.float32),
        "bn1": bn_params(ks[1]),
        "conv2": 0.1 * jax.random.normal(ks[2], (planes, planes, 3, 3), jnp.float32),
        "bn2": bn_params(ks[3]),
    }
    if stride != 1 or in_planes != planes:
        params["conv_s"] = 0.1 * jax.random.normal(
            ks[4], (planes, in_planes, 1, 1), jnp.float32)
        params["bn_s"] = bn_params(ks[5])
    return params


if __name__ == "__main__":
    key = jax.random.PRNGKey(0)
    fwd = jax.jit(basic_block_forward, static_argnums=2)

    # Config 1: projection shortcut (stride=2, in_planes != planes).
    N, in_planes, H, W, planes, stride = 2, 4, 16, 16, 8, 2
    k1, k2, key = jax.random.split(key, 3)
    x = jax.random.normal(k1, (N, in_planes, H, W), jnp.float32)
    params = _make_params(k2, in_planes, planes, stride)
    out = jax.block_until_ready(fwd(x, params, stride))
    ref = jax.block_until_ready(basic_block_reference(x, params, stride))
    assert out.shape == (N, planes, H // stride, W // stride)
    np.testing.assert_allclose(np.asarray(out), np.asarray(ref), rtol=5e-2, atol=5e-2)

    # Config 2: identity shortcut (stride=1, in_planes == planes).
    k1, k2, key = jax.random.split(key, 3)
    x2 = jax.random.normal(k1, (N, planes, H, W), jnp.float32)
    params2 = _make_params(k2, planes, planes, 1)
    out2 = jax.block_until_ready(fwd(x2, params2, 1))
    ref2 = jax.block_until_ready(basic_block_reference(x2, params2, 1))
    assert out2.shape == (N, planes, H, W)
    np.testing.assert_allclose(np.asarray(out2), np.asarray(ref2), rtol=5e-2, atol=5e-2)

    print("KERNEL_OK")
</pallas_src>

<mosaic_0001>
module attributes {stable_mosaic.version = 11 : i64} {
  func.func @conv_bn_relu_kernel(%arg0: i32, %arg1: memref<1x4x9x9x128xbf16, #tpu.memory_space<vmem>>, %arg2: memref<9x128x128xbf16, #tpu.memory_space<vmem>>, %arg3: memref<1x128xf32, #tpu.memory_space<vmem>>, %arg4: memref<1x64x128xbf16, #tpu.memory_space<vmem>>) attributes {dimension_semantics = [#tpu.dimension_semantics<parallel>], iteration_bounds = array<i64: 2>, scalar_prefetch = 0 : i64, scratch_operands = 0 : i64, tpu.core_type = #tpu.core_type<tc>, window_params = [{transform_indices = @transform_0, window_bounds = array<i64: 1, 4, 9, 9, 128>}, {pipeline_mode = #tpu.pipeline_mode<synchronous>, transform_indices = @transform_1, window_bounds = array<i64: 9, 128, 128>}, {pipeline_mode = #tpu.pipeline_mode<synchronous>, transform_indices = @transform_2, window_bounds = array<i64: 1, 128>}, {transform_indices = @transform_3, window_bounds = array<i64: 1, 64, 128>}]} {
    %cst = arith.constant 0.000000e+00 : f32
    %0 = vector.broadcast %cst : f32 to vector<64x128xf32>
    %c0 = arith.constant 0 : index
    %c0_0 = arith.constant 0 : index
    %c0_1 = arith.constant 0 : index
    %c0_2 = arith.constant 0 : index
    %c0_3 = arith.constant 0 : index
    %1 = vector.load %arg1[%c0, %c0_0, %c0_1, %c0_2, %c0_3] : memref<1x4x9x9x128xbf16, #tpu.memory_space<vmem>>, vector<1x1x8x8x128xbf16>
    %2 = vector.shape_cast %1 : vector<1x1x8x8x128xbf16> to vector<8x8x128xbf16>
    %3 = vector.shape_cast %2 : vector<8x8x128xbf16> to vector<64x128xbf16>
    %c0_4 = arith.constant 0 : index
    %c0_5 = arith.constant 0 : index
    %c0_6 = arith.constant 0 : index
    %4 = vector.load %arg2[%c0_4, %c0_5, %c0_6] : memref<9x128x128xbf16, #tpu.memory_space<vmem>>, vector<1x128x128xbf16>
    %5 = vector.shape_cast %4 : vector<1x128x128xbf16> to vector<128x128xbf16>
    %cst_7 = arith.constant dense<0.000000e+00> : vector<64x128xf32>
    %6 = tpu.matmul %3, %5, %cst_7 {dimension_numbers = #tpu.dot_dimension_numbers<[1], [0], [0], [1], [0, 0, 1, 1], [], []>} : vector<64x128xbf16>, vector<128x128xbf16>, vector<64x128xf32> -> vector<64x128xf32>
    %7 = arith.addf %0, %6 : vector<64x128xf32>
    %c0_8 = arith.constant 0 : index
    %c1 = arith.constant 1 : index
    %c0_9 = arith.constant 0 : index
    %c0_10 = arith.constant 0 : index
    %c0_11 = arith.constant 0 : index
    %8 = vector.load %arg1[%c0_8, %c1, %c0_9, %c0_10, %c0_11] : memref<1x4x9x9x128xbf16, #tpu.memory_space<vmem>>, vector<1x1x8x8x128xbf16>
    %9 = vector.shape_cast %8 : vector<1x1x8x8x128xbf16> to vector<8x8x128xbf16>
    %10 = vector.shape_cast %9 : vector<8x8x128xbf16> to vector<64x128xbf16>
    %c1_12 = arith.constant 1 : index
    %c0_13 = arith.constant 0 : index
    %c0_14 = arith.constant 0 : index
    %11 = vector.load %arg2[%c1_12, %c0_13, %c0_14] : memref<9x128x128xbf16, #tpu.memory_space<vmem>>, vector<1x128x128xbf16>
    %12 = vector.shape_cast %11 : vector<1x128x128xbf16> to vector<128x128xbf16>
    %cst_15 = arith.constant dense<0.000000e+00> : vector<64x128xf32>
    %13 = tpu.matmul %10, %12, %cst_15 {dimension_numbers = #tpu.dot_dimension_numbers<[1], [0], [0], [1], [0, 0, 1, 1], [], []>} : vector<64x128xbf16>, vector<128x128xbf16>, vector<64x128xf32> -> vector<64x128xf32>
    %14 = arith.addf %7, %13 : vector<64x128xf32>
    %c0_16 = arith.constant 0 : index
    %c0_17 = arith.constant 0 : index
    %c0_18 = arith.constant 0 : index
    %c1_19 = arith.constant 1 : index
    %c0_20 = arith.constant 0 : index
    %15 = vector.load %arg1[%c0_16, %c0_17, %c0_18, %c1_19, %c0_20] : memref<1x4x9x9x128xbf16, #tpu.memory_space<vmem>>, vector<1x1x8x8x128xbf16>
    %16 = vector.shape_cast %15 : vector<1x1x8x8x128xbf16> to vector<8x8x128xbf16>
    %17 = vector.shape_cast %16 : vector<8x8x128xbf16> to vector<64x128xbf16>
    %c2 = arith.constant 2 : index
    %c0_21 = arith.constant 0 : index
    %c0_22 = arith.constant 0 : index
    %18 = vector.load %arg2[%c2, %c0_21, %c0_22] : memref<9x128x128xbf16, #tpu.memory_space<vmem>>, vector<1x128x128xbf16>
    %19 = vector.shape_cast %18 : vector<1x128x128xbf16> to vector<128x128xbf16>
    %cst_23 = arith.constant dense<0.000000e+00> : vector<64x128xf32>
    %20 = tpu.matmul %17, %19, %cst_23 {dimension_numbers = #tpu.dot_dimension_numbers<[1], [0], [0], [1], [0, 0, 1, 1], [], []>} : vector<64x128xbf16>, vector<128x128xbf16>, vector<64x128xf32> -> vector<64x128xf32>
    %21 = arith.addf %14, %20 : vector<64x128xf32>
    %c0_24 = arith.constant 0 : index
    %c2_25 = arith.constant 2 : index
    %c0_26 = arith.constant 0 : index
    %c0_27 = arith.constant 0 : index
    %c0_28 = arith.constant 0 : index
    %22 = vector.load %arg1[%c0_24, %c2_25, %c0_26, %c0_27, %c0_28] : memref<1x4x9x9x128xbf16, #tpu.memory_space<vmem>>, vector<1x1x8x8x128xbf16>
    %23 = vector.shape_cast %22 : vector<1x1x8x8x128xbf16> to vector<8x8x128xbf16>
    %24 = vector.shape_cast %23 : vector<8x8x128xbf16> to vector<64x128xbf16>
    %c3 = arith.constant 3 : index
    %c0_29 = arith.constant 0 : index
    %c0_30 = arith.constant 0 : index
    %25 = vector.load %arg2[%c3, %c0_29, %c0_30] : memref<9x128x128xbf16, #tpu.memory_space<vmem>>, vector<1x128x128xbf16>
    %26 = vector.shape_cast %25 : vector<1x128x128xbf16> to vector<128x128xbf16>
    %cst_31 = arith.constant dense<0.000000e+00> : vector<64x128xf32>
    %27 = tpu.matmul %24, %26, %cst_31 {dimension_numbers = #tpu.dot_dimension_numbers<[1], [0], [0], [1], [0, 0, 1, 1], [], []>} : vector<64x128xbf16>, vector<128x128xbf16>, vector<64x128xf32> -> vector<64x128xf32>
    %28 = arith.addf %21, %27 : vector<64x128xf32>
    %c0_32 = arith.constant 0 : index
    %c3_33 = arith.constant 3 : index
    %c0_34 = arith.constant 0 : index
    %c0_35 = arith.constant 0 : index
    %c0_36 = arith.constant 0 : index
    %29 = vector.load %arg1[%c0_32, %c3_33, %c0_34, %c0_35, %c0_36] : memref<1x4x9x9x128xbf16, #tpu.memory_space<vmem>>, vector<1x1x8x8x128xbf16>
    %30 = vector.shape_cast %29 : vector<1x1x8x8x128xbf16> to vector<8x8x128xbf16>
    %31 = vector.shape_cast %30 : vector<8x8x128xbf16> to vector<64x128xbf16>
    %c4 = arith.constant 4 : index
    %c0_37 = arith.constant 0 : index
    %c0_38 = arith.constant 0 : index
    %32 = vector.load %arg2[%c4, %c0_37, %c0_38] : memref<9x128x128xbf16, #tpu.memory_space<vmem>>, vector<1x128x128xbf16>
    %33 = vector.shape_cast %32 : vector<1x128x128xbf16> to vector<128x128xbf16>
    %cst_39 = arith.constant dense<0.000000e+00> : vector<64x128xf32>
    %34 = tpu.matmul %31, %33, %cst_39 {dimension_numbers = #tpu.dot_dimension_numbers<[1], [0], [0], [1], [0, 0, 1, 1], [], []>} : vector<64x128xbf16>, vector<128x128xbf16>, vector<64x128xf32> -> vector<64x128xf32>
    %35 = arith.addf %28, %34 : vector<64x128xf32>
    %c0_40 = arith.constant 0 : index
    %c2_41 = arith.constant 2 : index
    %c0_42 = arith.constant 0 : index
    %c1_43 = arith.constant 1 : index
    %c0_44 = arith.constant 0 : index
    %36 = vector.load %arg1[%c0_40, %c2_41, %c0_42, %c1_43, %c0_44] : memref<1x4x9x9x128xbf16, #tpu.memory_space<vmem>>, vector<1x1x8x8x128xbf16>
    %37 = vector.shape_cast %36 : vector<1x1x8x8x128xbf16> to vector<8x8x128xbf16>
    %38 = vector.shape_cast %37 : vector<8x8x128xbf16> to vector<64x128xbf16>
    %c5 = arith.constant 5 : index
    %c0_45 = arith.constant 0 : index
    %c0_46 = arith.constant 0 : index
    %39 = vector.load %arg2[%c5, %c0_45, %c0_46] : memref<9x128x128xbf16, #tpu.memory_space<vmem>>, vector<1x128x128xbf16>
    %40 = vector.shape_cast %39 : vector<1x128x128xbf16> to vector<128x128xbf16>
    %cst_47 = arith.constant dense<0.000000e+00> : vector<64x128xf32>
    %41 = tpu.matmul %38, %40, %cst_47 {dimension_numbers = #tpu.dot_dimension_numbers<[1], [0], [0], [1], [0, 0, 1, 1], [], []>} : vector<64x128xbf16>, vector<128x128xbf16>, vector<64x128xf32> -> vector<64x128xf32>
    %42 = arith.addf %35, %41 : vector<64x128xf32>
    %c0_48 = arith.constant 0 : index
    %c0_49 = arith.constant 0 : index
    %c1_50 = arith.constant 1 : index
    %c0_51 = arith.constant 0 : index
    %c0_52 = arith.constant 0 : index
    %43 = vector.load %arg1[%c0_48, %c0_49, %c1_50, %c0_51, %c0_52] : memref<1x4x9x9x128xbf16, #tpu.memory_space<vmem>>, vector<1x1x8x8x128xbf16>
    %44 = vector.shape_cast %43 : vector<1x1x8x8x128xbf16> to vector<8x8x128xbf16>
    %45 = vector.shape_cast %44 : vector<8x8x128xbf16> to vector<64x128xbf16>
    %c6 = arith.constant 6 : index
    %c0_53 = arith.constant 0 : index
    %c0_54 = arith.constant 0 : index
    %46 = vector.load %arg2[%c6, %c0_53, %c0_54] : memref<9x128x128xbf16, #tpu.memory_space<vmem>>, vector<1x128x128xbf16>
    %47 = vector.shape_cast %46 : vector<1x128x128xbf16> to vector<128x128xbf16>
    %cst_55 = arith.constant dense<0.000000e+00> : vector<64x128xf32>
    %48 = tpu.matmul %45, %47, %cst_55 {dimension_numbers = #tpu.dot_dimension_numbers<[1], [0], [0], [1], [0, 0, 1, 1], [], []>} : vector<64x128xbf16>, vector<128x128xbf16>, vector<64x128xf32> -> vector<64x128xf32>
    %49 = arith.addf %42, %48 : vector<64x128xf32>
    %c0_56 = arith.constant 0 : index
    %c1_57 = arith.constant 1 : index
    %c1_58 = arith.constant 1 : index
    %c0_59 = arith.constant 0 : index
    %c0_60 = arith.constant 0 : index
    %50 = vector.load %arg1[%c0_56, %c1_57, %c1_58, %c0_59, %c0_60] : memref<1x4x9x9x128xbf16, #tpu.memory_space<vmem>>, vector<1x1x8x8x128xbf16>
    %51 = vector.shape_cast %50 : vector<1x1x8x8x128xbf16> to vector<8x8x128xbf16>
    %52 = vector.shape_cast %51 : vector<8x8x128xbf16> to vector<64x128xbf16>
    %c7 = arith.constant 7 : index
    %c0_61 = arith.constant 0 : index
    %c0_62 = arith.constant 0 : index
    %53 = vector.load %arg2[%c7, %c0_61, %c0_62] : memref<9x128x128xbf16, #tpu.memory_space<vmem>>, vector<1x128x128xbf16>
    %54 = vector.shape_cast %53 : vector<1x128x128xbf16> to vector<128x128xbf16>
    %cst_63 = arith.constant dense<0.000000e+00> : vector<64x128xf32>
    %55 = tpu.matmul %52, %54, %cst_63 {dimension_numbers = #tpu.dot_dimension_numbers<[1], [0], [0], [1], [0, 0, 1, 1], [], []>} : vector<64x128xbf16>, vector<128x128xbf16>, vector<64x128xf32> -> vector<64x128xf32>
    %56 = arith.addf %49, %55 : vector<64x128xf32>
    %c0_64 = arith.constant 0 : index
    %c0_65 = arith.constant 0 : index
    %c1_66 = arith.constant 1 : index
    %c1_67 = arith.constant 1 : index
    %c0_68 = arith.constant 0 : index
    %57 = vector.load %arg1[%c0_64, %c0_65, %c1_66, %c1_67, %c0_68] : memref<1x4x9x9x128xbf16, #tpu.memory_space<vmem>>, vector<1x1x8x8x128xbf16>
    %58 = vector.shape_cast %57 : vector<1x1x8x8x128xbf16> to vector<8x8x128xbf16>
    %59 = vector.shape_cast %58 : vector<8x8x128xbf16> to vector<64x128xbf16>
    %c8 = arith.constant 8 : index
    %c0_69 = arith.constant 0 : index
    %c0_70 = arith.constant 0 : index
    %60 = vector.load %arg2[%c8, %c0_69, %c0_70] : memref<9x128x128xbf16, #tpu.memory_space<vmem>>, vector<1x128x128xbf16>
    %61 = vector.shape_cast %60 : vector<1x128x128xbf16> to vector<128x128xbf16>
    %cst_71 = arith.constant dense<0.000000e+00> : vector<64x128xf32>
    %62 = tpu.matmul %59, %61, %cst_71 {dimension_numbers = #tpu.dot_dimension_numbers<[1], [0], [0], [1], [0, 0, 1, 1], [], []>} : vector<64x128xbf16>, vector<128x128xbf16>, vector<64x128xf32> -> vector<64x128xf32>
    %63 = arith.addf %56, %62 : vector<64x128xf32>
    %c0_72 = arith.constant 0 : index
    %c0_73 = arith.constant 0 : index
    %64 = vector.load %arg3[%c0_72, %c0_73] : memref<1x128xf32, #tpu.memory_space<vmem>>, vector<1x128xf32>
    %65 = vector.broadcast %64 : vector<1x128xf32> to vector<64x128xf32>
    %66 = arith.addf %63, %65 : vector<64x128xf32>
    %cst_74 = arith.constant 0.000000e+00 : f32
    %67 = vector.broadcast %cst_74 : f32 to vector<64x128xf32>
    %68 = arith.maximumf %66, %67 : vector<64x128xf32>
    %69 = arith.truncf %68 : vector<64x128xf32> to vector<64x128xbf16>
    %c0_75 = arith.constant 0 : index
    %c0_76 = arith.constant 0 : index
    %c0_77 = arith.constant 0 : index
    %70 = vector.load %arg4[%c0_75, %c0_76, %c0_77] : memref<1x64x128xbf16, #tpu.memory_space<vmem>>, vector<1x64x128xbf16>
    %71 = vector.shape_cast %70 : vector<1x64x128xbf16> to vector<64x128xbf16>
    %72 = vector.shape_cast %69 : vector<64x128xbf16> to vector<1x64x128xbf16>
    tpu.vector_store %arg4[%c0_75, %c0_76, %c0_77], %72 {strides = array<i32>} : memref<1x64x128xbf16, #tpu.memory_space<vmem>>, vector<1x64x128xbf16>,
    return
  }
  func.func @transform_0(%arg0: i32) -> (i32, i32, i32, i32, i32) {
    %c0_i32 = arith.constant 0 : i32
    %c0_i32_0 = arith.constant 0 : i32
    %c0_i32_1 = arith.constant 0 : i32
    %c0_i32_2 = arith.constant 0 : i32
    %c0_i32_3 = arith.constant 0 : i32
    return %arg0, %c0_i32, %c0_i32_0, %c0_i32_1, %c0_i32_2 : i32, i32, i32, i32, i32
  }
  func.func @transform_1(%arg0: i32) -> (i32, i32, i32) {
    %c0_i32 = arith.constant 0 : i32
    %c0_i32_0 = arith.constant 0 : i32
    %c0_i32_1 = arith.constant 0 : i32
    %c0_i32_2 = arith.constant 0 : i32
    return %c0_i32, %c0_i32_0, %c0_i32_1 : i32, i32, i32
  }
  func.func @transform_2(%arg0: i32) -> (i32, i32) {
    %c0_i32 = arith.constant 0 : i32
    %c0_i32_0 = arith.constant 0 : i32
    %c0_i32_1 = arith.constant 0 : i32
    return %c0_i32, %c0_i32_0 : i32, i32
  }
  func.func @transform_3(%arg0: i32) -> (i32, i32, i32) {
    %c0_i32 = arith.constant 0 : i32
    %c0_i32_0 = arith.constant 0 : i32
    %c0_i32_1 = arith.constant 0 : i32
    return %arg0, %c0_i32, %c0_i32_0 : i32, i32, i32
  }
}

module attributes {stable_mosaic.version = 11 : i64} {
  func.func @conv_bn_relu_add_relu_kernel(%arg0: i32, %arg1: memref<1x1x10x10x128xbf16, #tpu.memory_space<vmem>>, %arg2: memref<9x128x128xbf16, #tpu.memory_space<vmem>>, %arg3: memref<1x128xf32, #tpu.memory_space<vmem>>, %arg4: memref<1x8x8x128xbf16, #tpu.memory_space<vmem>>, %arg5: memref<128x128xbf16, #tpu.memory_space<vmem>>, %arg6: memref<1x128xf32, #tpu.memory_space<vmem>>, %arg7: memref<1x64x128xf32, #tpu.memory_space<vmem>>) attributes {dimension_semantics = [#tpu.dimension_semantics<parallel>], iteration_bounds = array<i64: 2>, scalar_prefetch = 0 : i64, scratch_operands = 0 : i64, tpu.core_type = #tpu.core_type<tc>, window_params = [{transform_indices = @transform_0, window_bounds = array<i64: 1, 1, 10, 10, 128>}, {pipeline_mode = #tpu.pipeline_mode<synchronous>, transform_indices = @transform_1, window_bounds = array<i64: 9, 128, 128>}, {pipeline_mode = #tpu.pipeline_mode<synchronous>, transform_indices = @transform_2, window_bounds = array<i64: 1, 128>}, {transform_indices = @transform_3, window_bounds = array<i64: 1, 8, 8, 128>}, {pipeline_mode = #tpu.pipeline_mode<synchronous>, transform_indices = @transform_4, window_bounds = array<i64: 128, 128>}, {pipeline_mode = #tpu.pipeline_mode<synchronous>, transform_indices = @transform_5, window_bounds = array<i64: 1, 128>}, {transform_indices = @transform_6, window_bounds = array<i64: 1, 64, 128>}]} {
    %cst = arith.constant 0.000000e+00 : f32
    %0 = vector.broadcast %cst : f32 to vector<64x128xf32>
    %c0 = arith.constant 0 : index
    %c0_0 = arith.constant 0 : index
    %c0_1 = arith.constant 0 : index
    %c0_2 = arith.constant 0 : index
    %c0_3 = arith.constant 0 : index
    %1 = vector.load %arg1[%c0, %c0_0, %c0_1, %c0_2, %c0_3] : memref<1x1x10x10x128xbf16, #tpu.memory_space<vmem>>, vector<1x1x8x8x128xbf16>
    %2 = vector.shape_cast %1 : vector<1x1x8x8x128xbf16> to vector<8x8x128xbf16>
    %3 = vector.shape_cast %2 : vector<8x8x128xbf16> to vector<64x128xbf16>
    %c0_4 = arith.constant 0 : index
    %c0_5 = arith.constant 0 : index
    %c0_6 = arith.constant 0 : index
    %4 = vector.load %arg2[%c0_4, %c0_5, %c0_6] : memref<9x128x128xbf16, #tpu.memory_space<vmem>>, vector<1x128x128xbf16>
    %5 = vector.shape_cast %4 : vector<1x128x128xbf16> to vector<128x128xbf16>
    %cst_7 = arith.constant dense<0.000000e+00> : vector<64x128xf32>
    %6 = tpu.matmul %3, %5, %cst_7 {dimension_numbers = #tpu.dot_dimension_numbers<[1], [0], [0], [1], [0, 0, 1, 1], [], []>} : vector<64x128xbf16>, vector<128x128xbf16>, vector<64x128xf32> -> vector<64x128xf32>
    %7 = arith.addf %0, %6 : vector<64x128xf32>
    %c0_8 = arith.constant 0 : index
    %c0_9 = arith.constant 0 : index
    %c0_10 = arith.constant 0 : index
    %c1 = arith.constant 1 : index
    %c0_11 = arith.constant 0 : index
    %8 = vector.load %arg1[%c0_8, %c0_9, %c0_10, %c1, %c0_11] : memref<1x1x10x10x128xbf16, #tpu.memory_space<vmem>>, vector<1x1x8x8x128xbf16>
    %9 = vector.shape_cast %8 : vector<1x1x8x8x128xbf16> to vector<8x8x128xbf16>
    %10 = vector.shape_cast %9 : vector<8x8x128xbf16> to vector<64x128xbf16>
    %c1_12 = arith.constant 1 : index
    %c0_13 = arith.constant 0 : index
    %c0_14 = arith.constant 0 : index
    %11 = vector.load %arg2[%c1_12, %c0_13, %c0_14] : memref<9x128x128xbf16, #tpu.memory_space<vmem>>, vector<1x128x128xbf16>
    %12 = vector.shape_cast %11 : vector<1x128x128xbf16> to vector<128x128xbf16>
    %cst_15 = arith.constant dense<0.000000e+00> : vector<64x128xf32>
    %13 = tpu.matmul %10, %12, %cst_15 {dimension_numbers = #tpu.dot_dimension_numbers<[1], [0], [0], [1], [0, 0, 1, 1], [], []>} : vector<64x128xbf16>, vector<128x128xbf16>, vector<64x128xf32> -> vector<64x128xf32>
    %14 = arith.addf %7, %13 : vector<64x128xf32>
    %c0_16 = arith.constant 0 : index
    %c0_17 = arith.constant 0 : index
    %c0_18 = arith.constant 0 : index
    %c2 = arith.constant 2 : index
    %c0_19 = arith.constant 0 : index
    %15 = vector.load %arg1[%c0_16, %c0_17, %c0_18, %c2, %c0_19] : memref<1x1x10x10x128xbf16, #tpu.memory_space<vmem>>, vector<1x1x8x8x128xbf16>
    %16 = vector.shape_cast %15 : vector<1x1x8x8x128xbf16> to vector<8x8x128xbf16>
    %17 = vector.shape_cast %16 : vector<8x8x128xbf16> to vector<64x128xbf16>
    %c2_20 = arith.constant 2 : index
    %c0_21 = arith.constant 0 : index
    %c0_22 = arith.constant 0 : index
    %18 = vector.load %arg2[%c2_20, %c0_21, %c0_22] : memref<9x128x128xbf16, #tpu.memory_space<vmem>>, vector<1x128x128xbf16>
    %19 = vector.shape_cast %18 : vector<1x128x128xbf16> to vector<128x128xbf16>
    %cst_23 = arith.constant dense<0.000000e+00> : vector<64x128xf32>
    %20 = tpu.matmul %17, %19, %cst_23 {dimension_numbers = #tpu.dot_dimension_numbers<[1], [0], [0], [1], [0, 0, 1, 1], [], []>} : vector<64x128xbf16>, vector<128x128xbf16>, vector<64x128xf32> -> vector<64x128xf32>
    %21 = arith.addf %14, %20 : vector<64x128xf32>
    %c0_24 = arith.constant 0 : index
    %c0_25 = arith.constant 0 : index
    %c1_26 = arith.constant 1 : index
    %c0_27 = arith.constant 0 : index
    %c0_28 = arith.constant 0 : index
    %22 = vector.load %arg1[%c0_24, %c0_25, %c1_26, %c0_27, %c0_28] : memref<1x1x10x10x128xbf16, #tpu.memory_space<vmem>>, vector<1x1x8x8x128xbf16>
    %23 = vector.shape_cast %22 : vector<1x1x8x8x128xbf16> to vector<8x8x128xbf16>
    %24 = vector.shape_cast %23 : vector<8x8x128xbf16> to vector<64x128xbf16>
    %c3 = arith.constant 3 : index
    %c0_29 = arith.constant 0 : index
    %c0_30 = arith.constant 0 : index
    %25 = vector.load %arg2[%c3, %c0_29, %c0_30] : memref<9x128x128xbf16, #tpu.memory_space<vmem>>, vector<1x128x128xbf16>
    %26 = vector.shape_cast %25 : vector<1x128x128xbf16> to vector<128x128xbf16>
    %cst_31 = arith.constant dense<0.000000e+00> : vector<64x128xf32>
    %27 = tpu.matmul %24, %26, %cst_31 {dimension_numbers = #tpu.dot_dimension_numbers<[1], [0], [0], [1], [0, 0, 1, 1], [], []>} : vector<64x128xbf16>, vector<128x128xbf16>, vector<64x128xf32> -> vector<64x128xf32>
    %28 = arith.addf %21, %27 : vector<64x128xf32>
    %c0_32 = arith.constant 0 : index
    %c0_33 = arith.constant 0 : index
    %c1_34 = arith.constant 1 : index
    %c1_35 = arith.constant 1 : index
    %c0_36 = arith.constant 0 : index
    %29 = vector.load %arg1[%c0_32, %c0_33, %c1_34, %c1_35, %c0_36] : memref<1x1x10x10x128xbf16, #tpu.memory_space<vmem>>, vector<1x1x8x8x128xbf16>
    %30 = vector.shape_cast %29 : vector<1x1x8x8x128xbf16> to vector<8x8x128xbf16>
    %31 = vector.shape_cast %30 : vector<8x8x128xbf16> to vector<64x128xbf16>
    %c4 = arith.constant 4 : index
    %c0_37 = arith.constant 0 : index
    %c0_38 = arith.constant 0 : index
    %32 = vector.load %arg2[%c4, %c0_37, %c0_38] : memref<9x128x128xbf16, #tpu.memory_space<vmem>>, vector<1x128x128xbf16>
    %33 = vector.shape_cast %32 : vector<1x128x128xbf16> to vector<128x128xbf16>
    %cst_39 = arith.constant dense<0.000000e+00> : vector<64x128xf32>
    %34 = tpu.matmul %31, %33, %cst_39 {dimension_numbers = #tpu.dot_dimension_numbers<[1], [0], [0], [1], [0, 0, 1, 1], [], []>} : vector<64x128xbf16>, vector<128x128xbf16>, vector<64x128xf32> -> vector<64x128xf32>
    %35 = arith.addf %28, %34 : vector<64x128xf32>
    %c0_40 = arith.constant 0 : index
    %c0_41 = arith.constant 0 : index
    %c1_42 = arith.constant 1 : index
    %c2_43 = arith.constant 2 : index
    %c0_44 = arith.constant 0 : index
    %36 = vector.load %arg1[%c0_40, %c0_41, %c1_42, %c2_43, %c0_44] : memref<1x1x10x10x128xbf16, #tpu.memory_space<vmem>>, vector<1x1x8x8x128xbf16>
    %37 = vector.shape_cast %36 : vector<1x1x8x8x128xbf16> to vector<8x8x128xbf16>
    %38 = vector.shape_cast %37 : vector<8x8x128xbf16> to vector<64x128xbf16>
    %c5 = arith.constant 5 : index
    %c0_45 = arith.constant 0 : index
    %c0_46 = arith.constant 0 : index
    %39 = vector.load %arg2[%c5, %c0_45, %c0_46] : memref<9x128x128xbf16, #tpu.memory_space<vmem>>, vector<1x128x128xbf16>
    %40 = vector.shape_cast %39 : vector<1x128x128xbf16> to vector<128x128xbf16>
    %cst_47 = arith.constant dense<0.000000e+00> : vector<64x128xf32>
    %41 = tpu.matmul %38, %40, %cst_47 {dimension_numbers = #tpu.dot_dimension_numbers<[1], [0], [0], [1], [0, 0, 1, 1], [], []>} : vector<64x128xbf16>, vector<128x128xbf16>, vector<64x128xf32> -> vector<64x128xf32>
    %42 = arith.addf %35, %41 : vector<64x128xf32>
    %c0_48 = arith.constant 0 : index
    %c0_49 = arith.constant 0 : index
    %c2_50 = arith.constant 2 : index
    %c0_51 = arith.constant 0 : index
    %c0_52 = arith.constant 0 : index
    %43 = vector.load %arg1[%c0_48, %c0_49, %c2_50, %c0_51, %c0_52] : memref<1x1x10x10x128xbf16, #tpu.memory_space<vmem>>, vector<1x1x8x8x128xbf16>
    %44 = vector.shape_cast %43 : vector<1x1x8x8x128xbf16> to vector<8x8x128xbf16>
    %45 = vector.shape_cast %44 : vector<8x8x128xbf16> to vector<64x128xbf16>
    %c6 = arith.constant 6 : index
    %c0_53 = arith.constant 0 : index
    %c0_54 = arith.constant 0 : index
    %46 = vector.load %arg2[%c6, %c0_53, %c0_54] : memref<9x128x128xbf16, #tpu.memory_space<vmem>>, vector<1x128x128xbf16>
    %47 = vector.shape_cast %46 : vector<1x128x128xbf16> to vector<128x128xbf16>
    %cst_55 = arith.constant dense<0.000000e+00> : vector<64x128xf32>
    %48 = tpu.matmul %45, %47, %cst_55 {dimension_numbers = #tpu.dot_dimension_numbers<[1], [0], [0], [1], [0, 0, 1, 1], [], []>} : vector<64x128xbf16>, vector<128x128xbf16>, vector<64x128xf32> -> vector<64x128xf32>
    %49 = arith.addf %42, %48 : vector<64x128xf32>
    %c0_56 = arith.constant 0 : index
    %c0_57 = arith.constant 0 : index
    %c2_58 = arith.constant 2 : index
    %c1_59 = arith.constant 1 : index
    %c0_60 = arith.constant 0 : index
    %50 = vector.load %arg1[%c0_56, %c0_57, %c2_58, %c1_59, %c0_60] : memref<1x1x10x10x128xbf16, #tpu.memory_space<vmem>>, vector<1x1x8x8x128xbf16>
    %51 = vector.shape_cast %50 : vector<1x1x8x8x128xbf16> to vector<8x8x128xbf16>
    %52 = vector.shape_cast %51 : vector<8x8x128xbf16> to vector<64x128xbf16>
    %c7 = arith.constant 7 : index
    %c0_61 = arith.constant 0 : index
    %c0_62 = arith.constant 0 : index
    %53 = vector.load %arg2[%c7, %c0_61, %c0_62] : memref<9x128x128xbf16, #tpu.memory_space<vmem>>, vector<1x128x128xbf16>
    %54 = vector.shape_cast %53 : vector<1x128x128xbf16> to vector<128x128xbf16>
    %cst_63 = arith.constant dense<0.000000e+00> : vector<64x128xf32>
    %55 = tpu.matmul %52, %54, %cst_63 {dimension_numbers = #tpu.dot_dimension_numbers<[1], [0], [0], [1], [0, 0, 1, 1], [], []>} : vector<64x128xbf16>, vector<128x128xbf16>, vector<64x128xf32> -> vector<64x128xf32>
    %56 = arith.addf %49, %55 : vector<64x128xf32>
    %c0_64 = arith.constant 0 : index
    %c0_65 = arith.constant 0 : index
    %c2_66 = arith.constant 2 : index
    %c2_67 = arith.constant 2 : index
    %c0_68 = arith.constant 0 : index
    %57 = vector.load %arg1[%c0_64, %c0_65, %c2_66, %c2_67, %c0_68] : memref<1x1x10x10x128xbf16, #tpu.memory_space<vmem>>, vector<1x1x8x8x128xbf16>
    %58 = vector.shape_cast %57 : vector<1x1x8x8x128xbf16> to vector<8x8x128xbf16>
    %59 = vector.shape_cast %58 : vector<8x8x128xbf16> to vector<64x128xbf16>
    %c8 = arith.constant 8 : index
    %c0_69 = arith.constant 0 : index
    %c0_70 = arith.constant 0 : index
    %60 = vector.load %arg2[%c8, %c0_69, %c0_70] : memref<9x128x128xbf16, #tpu.memory_space<vmem>>, vector<1x128x128xbf16>
    %61 = vector.shape_cast %60 : vector<1x128x128xbf16> to vector<128x128xbf16>
    %cst_71 = arith.constant dense<0.000000e+00> : vector<64x128xf32>
    %62 = tpu.matmul %59, %61, %cst_71 {dimension_numbers = #tpu.dot_dimension_numbers<[1], [0], [0], [1], [0, 0, 1, 1], [], []>} : vector<64x128xbf16>, vector<128x128xbf16>, vector<64x128xf32> -> vector<64x128xf32>
    %63 = arith.addf %56, %62 : vector<64x128xf32>
    %c0_72 = arith.constant 0 : index
    %c0_73 = arith.constant 0 : index
    %64 = vector.load %arg3[%c0_72, %c0_73] : memref<1x128xf32, #tpu.memory_space<vmem>>, vector<1x128xf32>
    %65 = vector.broadcast %64 : vector<1x128xf32> to vector<64x128xf32>
    %66 = arith.addf %63, %65 : vector<64x128xf32>
    %cst_74 = arith.constant 0.000000e+00 : f32
    %67 = vector.broadcast %cst_74 : f32 to vector<64x128xf32>
    %68 = arith.maximumf %66, %67 : vector<64x128xf32>
    %c0_75 = arith.constant 0 : index
    %c0_76 = arith.constant 0 : index
    %c0_77 = arith.constant 0 : index
    %c0_78 = arith.constant 0 : index
    %69 = vector.load %arg4[%c0_75, %c0_76, %c0_77, %c0_78] : memref<1x8x8x128xbf16, #tpu.memory_space<vmem>>, vector<1x8x8x128xbf16>
    %70 = vector.shape_cast %69 : vector<1x8x8x128xbf16> to vector<8x8x128xbf16>
    %71 = vector.shape_cast %70 : vector<8x8x128xbf16> to vector<64x128xbf16>
    %c0_79 = arith.constant 0 : index
    %c0_80 = arith.constant 0 : index
    %72 = vector.load %arg5[%c0_79, %c0_80] : memref<128x128xbf16, #tpu.memory_space<vmem>>, vector<128x128xbf16>
    %cst_81 = arith.constant dense<0.000000e+00> : vector<64x128xf32>
    %73 = tpu.matmul %71, %72, %cst_81 {dimension_numbers = #tpu.dot_dimension_numbers<[1], [0], [0], [1], [0, 0, 1, 1], [], []>} : vector<64x128xbf16>, vector<128x128xbf16>, vector<64x128xf32> -> vector<64x128xf32>
    %c0_82 = arith.constant 0 : index
    %c0_83 = arith.constant 0 : index
    %74 = vector.load %arg6[%c0_82, %c0_83] : memref<1x128xf32, #tpu.memory_space<vmem>>, vector<1x128xf32>
    %75 = vector.broadcast %74 : vector<1x128xf32> to vector<64x128xf32>
    %76 = arith.addf %73, %75 : vector<64x128xf32>
    %77 = arith.addf %68, %76 : vector<64x128xf32>
    %cst_84 = arith.constant 0.000000e+00 : f32
    %78 = vector.broadcast %cst_84 : f32 to vector<64x128xf32>
    %79 = arith.maximumf %77, %78 : vector<64x128xf32>
    %c0_85 = arith.constant 0 : index
    %c0_86 = arith.constant 0 : index
    %c0_87 = arith.constant 0 : index
    %80 = vector.load %arg7[%c0_85, %c0_86, %c0_87] : memref<1x64x128xf32, #tpu.memory_space<vmem>>, vector<1x64x128xf32>
    %81 = vector.shape_cast %80 : vector<1x64x128xf32> to vector<64x128xf32>
    %82 = vector.shape_cast %79 : vector<64x128xf32> to vector<1x64x128xf32>
    tpu.vector_store %arg7[%c0_85, %c0_86, %c0_87], %82 {strides = array<i32>} : memref<1x64x128xf32, #tpu.memory_space<vmem>>, vector<1x64x128xf32>,
    return
  }
  func.func @transform_0(%arg0: i32) -> (i32, i32, i32, i32, i32) {
    %c0_i32 = arith.constant 0 : i32
    %c0_i32_0 = arith.constant 0 : i32
    %c0_i32_1 = arith.constant 0 : i32
    %c0_i32_2 = arith.constant 0 : i32
    %c0_i32_3 = arith.constant 0 : i32
    return %arg0, %c0_i32, %c0_i32_0, %c0_i32_1, %c0_i32_2 : i32, i32, i32, i32, i32
  }
  func.func @transform_1(%arg0: i32) -> (i32, i32, i32) {
    %c0_i32 = arith.constant 0 : i32
    %c0_i32_0 = arith.constant 0 : i32
    %c0_i32_1 = arith.constant 0 : i32
    %c0_i32_2 = arith.constant 0 : i32
    return %c0_i32, %c0_i32_0, %c0_i32_1 : i32, i32, i32
  }
  func.func @transform_2(%arg0: i32) -> (i32, i32) {
    %c0_i32 = arith.constant 0 : i32
    %c0_i32_0 = arith.constant 0 : i32
    %c0_i32_1 = arith.constant 0 : i32
    return %c0_i32, %c0_i32_0 : i32, i32
  }
  func.func @transform_3(%arg0: i32) -> (i32, i32, i32, i32) {
    %c0_i32 = arith.constant 0 : i32
    %c0_i32_0 = arith.constant 0 : i32
    %c0_i32_1 = arith.constant 0 : i32
    %c0_i32_2 = arith.constant 0 : i32
    return %arg0, %c0_i32, %c0_i32_0, %c0_i32_1 : i32, i32, i32, i32
  }
  func.func @transform_4(%arg0: i32) -> (i32, i32) {
    %c0_i32 = arith.constant 0 : i32
    %c0_i32_0 = arith.constant 0 : i32
    %c0_i32_1 = arith.constant 0 : i32
    return %c0_i32, %c0_i32_0 : i32, i32
  }
  func.func @transform_5(%arg0: i32) -> (i32, i32) {
    %c0_i32 = arith.constant 0 : i32
    %c0_i32_0 = arith.constant 0 : i32
    %c0_i32_1 = arith.constant 0 : i32
    return %c0_i32, %c0_i32_0 : i32, i32
  }
  func.func @transform_6(%arg0: i32) -> (i32, i32, i32) {
    %c0_i32 = arith.constant 0 : i32
    %c0_i32_0 = arith.constant 0 : i32
    %c0_i32_1 = arith.constant 0 : i32
    return %arg0, %c0_i32, %c0_i32_0 : i32, i32, i32
  }
}

</mosaic_0001>

<llo_original>
// kernel: basic_block_forward.2
$region0: #{basic_block_forward.2}
  #allocation0 [shape = 'u32[]', space=smem, size = 0x4, offset = 0x4, fixed_abs, tag = 'smem constant byte address 0x4 - core index']
  #allocation1 [shape = 'u32[72,128]{1,0:T(1,128)}', space=vmem, size = 0x9000, scoped, tag = 'internal scratch']
  %s0 = inlined_call_operand.vmem [shape: bf16[2,4,9,9,128], index: 0, kind: input, shape index: {}]
  %s1 = inlined_call_operand.vmem [shape: bf16[9,128,128], index: 1, kind: input, shape index: {}]
  %s2 = inlined_call_operand.vmem [shape: f32[1,128], index: 2, kind: input, shape index: {}]
  %s3 = inlined_call_operand.vmem [shape: bf16[2,64,128], index: 3, kind: output, shape index: {}]
  %s4 = sld [smem:[#allocation0]]
  $region45: #{basic_block_forward.2} parent=0
    _
  %s6 = ssub.s32 1, %s4
  %s7 = scalar_select 0, %s6, %s4
  loop: start=0, step=1, limit=4
  $region2: #{basic_block_forward.2} parent=0 // loop_pre_header
    _
  $region3: #{basic_block_forward.2} parent=0 // loop_header
    %s9 = sphi 0, %s13
    %p10 = scmp.ge.s32.totalorder %s9, 4
    %s19 = sphi 0, %s21
    %s22 = sphi 0, %s19
    %s23 = sphi 0, %s22
    %s39 = sphi 0, %s23
    %s43 = sphi 0, %s43
    %s45 = sphi 0, %s43
    %s46 = sphi 0, %s45
    %s60 = sphi 0, %s46
    %s64 = sphi 0, %s64
    %s66 = sphi 0, %s64
    %s67 = sphi 0, %s66
    %s81 = sphi 0, %s67
    %s87 = sphi 0, %s89
    %s90 = sphi 0, %s87
    %s91 = sphi 0, %s90
    %s107 = sphi 0, %s91
  $region4: #{basic_block_forward.2} parent=0 // loop_header_branch
    %12 = sbr.rel (%p10) target = $region8
  $region5: #{basic_block_forward.2} parent=0 // loop_body
    %s14 = ssub.s32 %s9, 1
    %s15 = ssub.s32 %s9, 2
    %s16 = sadd.s32 %s9, 1
    %s17 = ssub.s32 %s9, %s16
    %p18 = scmp.eq.s32.totalorder %s17, 0
    %s20 = sadd.s32 %s19, 1
    %s21 = scalar_select %p18, %s19, %s20
    %p24 = pneg %p18
    %p25 = scmp.eq.s32.totalorder %s9, 1
    %p26 = por %p24, %p25
    %p27 = scmp.ne.s32.totalorder %s19, %s22
    %p28 = scmp.eq.s32.totalorder %s9, 0
    %p29 = por %p27, %p28
    %p30 = scmp.ne.s32.totalorder %s19, %s22
    %p31 = scmp.eq.s32.totalorder %s14, 1
    %p32 = por %p30, %p31
    %p33 = scmp.ne.s32.totalorder %s22, %s23
    %p34 = scmp.eq.s32.totalorder %s14, 0
    %p35 = por %p33, %p34
    %p36 = scmp.ne.s32.totalorder %s22, %s23
    %p37 = scmp.eq.s32.totalorder %s15, 1
    %p38 = por %p36, %p37
    %p40 = scmp.ne.s32.totalorder %s23, %s39
    %p41 = scmp.eq.s32.totalorder %s15, 0
    %p42 = por %p40, %p41
    %s44 = sadd.s32 %s43, 1
    %p47 = scmp.eq.s32.totalorder %s9, 1
    %p48 = scmp.ne.s32.totalorder %s43, %s45
    %p49 = scmp.eq.s32.totalorder %s9, 0
    %p50 = por %p48, %p49
    %p51 = scmp.ne.s32.totalorder %s43, %s45
    %p52 = scmp.eq.s32.totalorder %s14, 1
    %p53 = por %p51, %p52
    %p54 = scmp.ne.s32.totalorder %s45, %s46
    %p55 = scmp.eq.s32.totalorder %s14, 0
    %p56 = por %p54, %p55
    %p57 = scmp.ne.s32.totalorder %s45, %s46
    %p58 = scmp.eq.s32.totalorder %s15, 1
    %p59 = por %p57, %p58
    %p61 = scmp.ne.s32.totalorder %s46, %s60
    %p62 = scmp.eq.s32.totalorder %s15, 0
    %p63 = por %p61, %p62
    %s65 = sadd.s32 %s64, 1
    %p68 = scmp.eq.s32.totalorder %s9, 1
    %p69 = scmp.ne.s32.totalorder %s64, %s66
    %p70 = scmp.eq.s32.totalorder %s9, 0
    %p71 = por %p69, %p70
    %p72 = scmp.ne.s32.totalorder %s64, %s66
    %p73 = scmp.eq.s32.totalorder %s14, 1
    %p74 = por %p72, %p73
    %p75 = scmp.ne.s32.totalorder %s66, %s67
    %p76 = scmp.eq.s32.totalorder %s14, 0
    %p77 = por %p75, %p76
    %p78 = scmp.ne.s32.totalorder %s66, %s67
    %p79 = scmp.eq.s32.totalorder %s15, 1
    %p80 = por %p78, %p79
    %p82 = scmp.ne.s32.totalorder %s67, %s81
    %p83 = scmp.eq.s32.totalorder %s15, 0
    %p84 = por %p82, %p83
    %s85 = ssub.s32 %s9, %s16
    %p86 = scmp.eq.s32.totalorder %s85, 0
    %s88 = sadd.s32 %s87, 1
    %s89 = scalar_select %p86, %s87, %s88
    %p92 = pneg %p86
    %p93 = scmp.eq.s32.totalorder %s9, 1
    %p94 = por %p92, %p93
    %p95 = scmp.ne.s32.totalorder %s87, %s90
    %p96 = scmp.eq.s32.totalorder %s9, 0
    %p97 = por %p95, %p96
    %p98 = scmp.ne.s32.totalorder %s87, %s90
    %p99 = scmp.eq.s32.totalorder %s14, 1
    %p100 = por %p98, %p99
    %p101 = scmp.ne.s32.totalorder %s90, %s91
    %p102 = scmp.eq.s32.totalorder %s14, 0
    %p103 = por %p101, %p102
    %p104 = scmp.ne.s32.totalorder %s90, %s91
    %p105 = scmp.eq.s32.totalorder %s15, 1
    %p106 = por %p104, %p105
    %p108 = scmp.ne.s32.totalorder %s91, %s107
    %p109 = scmp.eq.s32.totalorder %s15, 0
    %p110 = por %p108, %p109
    %p111 = scmp.le.s32.totalorder 1, %s9
    %p112 = scmp.lt.s32.totalorder %s9, 3
    %p113 = pnand %p111, %p112
    %p114 = pneg %p113
    // Predicated region
    $region9: #{basic_block_forward.2} parent=5 // pred_check
      _
    $region10: #{basic_block_forward.2} parent=5 // pred_check_branch
      %116 = sbr.rel (%p113) target = $region12
    $region11: #{basic_block_forward.2} parent=5 // pred_region
      %s117 = ssub.s32 %s9, 1
      // Predicated region
      $region13: #{basic_block_forward.2} parent=11 // pred_check
        %p118 = pneg %p56
      $region14: #{basic_block_forward.2} parent=11 // pred_check_branch
        %120 = sbr.rel (%p118) target = $region16
      $region15: #{basic_block_forward.2} parent=11 // pred_region
        _
      $region16: #{basic_block_forward.2} parent=11 // pred_fallthru
        _
      // Predicated region
      $region17: #{basic_block_forward.2} parent=11 // pred_check
        %p121 = pneg %p77
      $region18: #{basic_block_forward.2} parent=11 // pred_check_branch
        %123 = sbr.rel (%p121) target = $region20
      $region19: #{basic_block_forward.2} parent=11 // pred_region
        _
      $region20: #{basic_block_forward.2} parent=11 // pred_fallthru
        _
    $region12: #{basic_block_forward.2} parent=5 // pred_fallthru
      _
    %p124 = scmp.lt.s32.totalorder %s9, 2
    // Predicated region
    $region21: #{basic_block_forward.2} parent=5 // pred_check
      %p125 = pneg %p124
    $region22: #{basic_block_forward.2} parent=5 // pred_check_branch
      %127 = sbr.rel (%p125) target = $region24
    $region23: #{basic_block_forward.2} parent=5 // pred_region
      // Predicated region
      $region25: #{basic_block_forward.2} parent=23 // pred_check
        %p128 = pneg %p29
      $region26: #{basic_block_forward.2} parent=23 // pred_check_branch
        %130 = sbr.rel (%p128) target = $region28
      $region27: #{basic_block_forward.2} parent=23 // pred_region
        %p131 = scmp.lt.s32.totalorder %s9, 1
        %s132 = scalar_select %p131, %s9, 1
        %s133 = smul.addr %s132, 72
        %s134 = smul.addr %s133, 4
        %s135 = scalar_lea.vmem %s0, %s134
      $region28: #{basic_block_forward.2} parent=23 // pred_fallthru
        _
    $region24: #{basic_block_forward.2} parent=5 // pred_fallthru
      _
    %p136 = scmp.le.s32.totalorder 1, %s9
    %p137 = scmp.lt.s32.totalorder %s9, 3
    %p138 = pnand %p136, %p137
    %p139 = pneg %p138
    // Predicated region
    $region29: #{basic_block_forward.2} parent=5 // pred_check
      _
    $region30: #{basic_block_forward.2} parent=5 // pred_check_branch
      %141 = sbr.rel (%p138) target = $region32
    $region31: #{basic_block_forward.2} parent=5 // pred_region
      %s142 = ssub.s32 %s9, 1
      %p143 = scmp.lt.s32.totalorder %s14, 1
      %s144 = scalar_select %p143, %s14, 1
      %s145 = smul.addr %s144, 72
      %s146 = smul.addr %s145, 4
      %s147 = scalar_lea.vmem %s0, %s146
      %p148 = pneg %p35
      %p149 = pneg %p32
      %p150 = pneg %p56
      %p151 = pneg %p53
      %p152 = pneg %p77
      %p153 = pneg %p74
      %p154 = pneg %p103
      %p155 = pneg %p100
      %p156 = scmp.lt.s32.totalorder %s14, 1
      %s157 = scalar_select %p156, %s14, 1
      %s158 = smul.addr %s157, 8
      %s159 = smul.addr %s158, 4
      %s160 = scalar_lea.vmem %s3, %s159
      %p161 = scmp.lt.s32.totalorder %s14, 1
      %s162 = scalar_select %p161, %s14, 1
      %s163 = smul.addr %s162, 72
      %s164 = smul.addr %s163, 4
      %s165 = scalar_lea.vmem %s0, %s164
      %p166 = scmp.lt.s32.totalorder %s14, 1
      %s167 = scalar_select %p166, %s14, 1
      %s168 = smul.addr %s167, 8
      %s169 = smul.addr %s168, 4
      %s170 = scalar_lea.vmem %s3, %s169
      %v171 = vld [vmem:[%s165] sm:$0xf]
      %v172 = vld [vmem:[%s165 + $0x8] sm:$0xf]
      %v173 = vld [vmem:[%s165 + $0x10] sm:$0xf]
      %v174 = vld [vmem:[%s165 + $0x18] sm:$0xf]
      %v175 = vld [vmem:[%s165 + $0x20] sm:$0xf]
      %v176 = vld [vmem:[%s165 + $0x28] sm:$0xf]
      %v177 = vld [vmem:[%s165 + $0x30] sm:$0xf]
      %v178 = vld [vmem:[%s165 + $0x38] sm:$0xf]
      %v179 = vld [vmem:[%s1] sm:$0xf]
      %v180 = vld [vmem:[%s1 + $0x4] sm:$0xf]
      %v181 = vld [vmem:[%s1 + $0x8] sm:$0xf]
      %v182 = vld [vmem:[%s1 + $0xc] sm:$0xf]
      %v183 = vld [vmem:[%s1 + $0x10] sm:$0xf]
      %v184 = vld [vmem:[%s1 + $0x14] sm:$0xf]
      %v185 = vld [vmem:[%s1 + $0x18] sm:$0xf]
      %v186 = vld [vmem:[%s1 + $0x1c] sm:$0xf]
      %v187 = vld [vmem:[%s1 + $0x20] sm:$0xf]
      %v188 = vld [vmem:[%s1 + $0x24] sm:$0xf]
      %v189 = vld [vmem:[%s1 + $0x28] sm:$0xf]
      %v190 = vld [vmem:[%s1 + $0x2c] sm:$0xf]
      %v191 = vld [vmem:[%s1 + $0x30] sm:$0xf]
      %v192 = vld [vmem:[%s1 + $0x34] sm:$0xf]
      %v193 = vld [vmem:[%s1 + $0x38] sm:$0xf]
      %v194 = vld [vmem:[%s1 + $0x3c] sm:$0xf]
      %s195 = scalar_lea.vmem %s165, 72
      %v196 = vld [vmem:[%s195] sm:$0xf]
      %v197 = vld [vmem:[%s195 + $0x8] sm:$0xf]
      %v198 = vld [vmem:[%s195 + $0x10] sm:$0xf]
      %v199 = vld [vmem:[%s195 + $0x18] sm:$0xf]
      %v200 = vld [vmem:[%s195 + $0x20] sm:$0xf]
      %v201 = vld [vmem:[%s195 + $0x28] sm:$0xf]
      %v202 = vld [vmem:[%s195 + $0x30] sm:$0xf]
      %v203 = vld [vmem:[%s195 + $0x38] sm:$0xf]
      %s204 = scalar_lea.vmem %s1, 64
      %v205 = vld [vmem:[%s204] sm:$0xf]
      %v206 = vld [vmem:[%s204 + $0x4] sm:$0xf]
      %v207 = vld [vmem:[%s204 + $0x8] sm:$0xf]
      %v208 = vld [vmem:[%s204 + $0xc] sm:$0xf]
      %v209 = vld [vmem:[%s204 + $0x10] sm:$0xf]
      %v210 = vld [vmem:[%s204 + $0x14] sm:$0xf]
      %v211 = vld [vmem:[%s204 + $0x18] sm:$0xf]
      %v212 = vld [vmem:[%s204 + $0x1c] sm:$0xf]
      %v213 = vld [vmem:[%s204 + $0x20] sm:$0xf]
      %v214 = vld [vmem:[%s204 + $0x24] sm:$0xf]
      %v215 = vld [vmem:[%s204 + $0x28] sm:$0xf]
      %v216 = vld [vmem:[%s204 + $0x2c] sm:$0xf]
      %v217 = vld [vmem:[%s204 + $0x30] sm:$0xf]
      %v218 = vld [vmem:[%s204 + $0x34] sm:$0xf]
      %v219 = vld [vmem:[%s204 + $0x38] sm:$0xf]
      %v220 = vld [vmem:[%s204 + $0x3c] sm:$0xf]
      %v229 = vunpack.c.l.b16 %v196
      %v230 = vunpack.c.l.b16 %v197
      %v231 = vunpack.c.l.b16 %v198
      %v232 = vunpack.c.l.b16 %v199
      %v233 = vunpack.c.l.b16 %v200
      %v234 = vunpack.c.l.b16 %v201
      %v235 = vunpack.c.l.b16 %v202
      %v236 = vunpack.c.l.b16 %v203
      %v237 = vpack.c.b16 %v230, %v229
      %v238 = vpack.c.b16 %v232, %v231
      %v239 = vpack.c.b16 %v234, %v233
      %v240 = vpack.c.b16 %v236, %v235
      %v261 = vunpack.c.l.b16 %v205
      %v262 = vunpack.c.l.b16 %v206
      %v263 = vunpack.c.l.b16 %v207
      %v264 = vunpack.c.l.b16 %v208
      %v265 = vunpack.c.l.b16 %v209
      %v266 = vunpack.c.l.b16 %v210
      %v267 = vunpack.c.l.b16 %v211
      %v268 = vunpack.c.l.b16 %v212
      %v269 = vunpack.c.l.b16 %v213
      %v270 = vunpack.c.l.b16 %v214
      %v271 = vunpack.c.l.b16 %v215
      %v272 = vunpack.c.l.b16 %v216
      %v273 = vunpack.c.l.b16 %v217
      %v274 = vunpack.c.l.b16 %v218
      %v275 = vunpack.c.l.b16 %v219
      %v276 = vunpack.c.l.b16 %v220
      %v277 = vpack.c.b16 %v262, %v261
      %v278 = vpack.c.b16 %v264, %v263
      %v279 = vpack.c.b16 %v266, %v265
      %v280 = vpack.c.b16 %v268, %v267
      %v281 = vpack.c.b16 %v270, %v269
      %v282 = vpack.c.b16 %v272, %v271
      %v283 = vpack.c.b16 %v274, %v273
      %v284 = vpack.c.b16 %v276, %v275
      %293 = vmatpush.bf16.msra.mxu0 %v284
      %294 = vmatpush.bf16.msra.mxu0 %v283
      %295 = vmatpush.bf16.msra.mxu0 %v282
      %296 = vmatpush.bf16.msra.mxu0 %v281
      %297 = vmatpush.bf16.msra.mxu0 %v280
      %298 = vmatpush.bf16.msra.mxu0 %v279
      %299 = vmatpush.bf16.msra.mxu0 %v278
      %300 = vmatpush.bf16.msra.mxu0 %v277
      %301 = vmatmul.bf16.gmra.mxu0 %v237
      %v302 = vpop.f32.mrf.mxu0
      %v303 = vadd.f32 0.0, %v302
      %v304 = vpop.f32.mrf.mxu0
      %v305 = vadd.f32 0.0, %v304
      %306 = vmatmul.bf16.gmra.mxu0 %v238
      %v307 = vpop.f32.mrf.mxu0
      %v308 = vadd.f32 0.0, %v307
      %v309 = vpop.f32.mrf.mxu0
      %v310 = vadd.f32 0.0, %v309
      %311 = vmatmul.bf16.gmra.mxu0 %v239
      %v312 = vpop.f32.mrf.mxu0
      %v313 = vadd.f32 0.0, %v312
      %v314 = vpop.f32.mrf.mxu0
      %v315 = vadd.f32 0.0, %v314
      %316 = vmatmul.bf16.gmra.mxu0 %v240
      %v317 = vpop.f32.mrf.mxu0
      %v318 = vadd.f32 0.0, %v317
      %v319 = vpop.f32.mrf.mxu0
      %v320 = vadd.f32 0.0, %v319
      %321 = vdwg.mxu0
      %v330 = vunpack.c.l.b16 %v171
      %v331 = vunpack.c.l.b16 %v172
      %v332 = vunpack.c.l.b16 %v173
      %v333 = vunpack.c.l.b16 %v174
      %v334 = vunpack.c.l.b16 %v175
      %v335 = vunpack.c.l.b16 %v176
      %v336 = vunpack.c.l.b16 %v177
      %v337 = vunpack.c.l.b16 %v178
      %v338 = vpack.c.b16 %v331, %v330
      %v339 = vpack.c.b16 %v333, %v332
      %v340 = vpack.c.b16 %v335, %v334
      %v341 = vpack.c.b16 %v337, %v336
      %v362 = vunpack.c.l.b16 %v179
      %v363 = vunpack.c.l.b16 %v180
      %v364 = vunpack.c.l.b16 %v181
      %v365 = vunpack.c.l.b16 %v182
      %v366 = vunpack.c.l.b16 %v183
      %v367 = vunpack.c.l.b16 %v184
      %v368 = vunpack.c.l.b16 %v185
      %v369 = vunpack.c.l.b16 %v186
      %v370 = vunpack.c.l.b16 %v187
      %v371 = vunpack.c.l.b16 %v188
      %v372 = vunpack.c.l.b16 %v189
      %v373 = vunpack.c.l.b16 %v190
      %v374 = vunpack.c.l.b16 %v191
      %v375 = vunpack.c.l.b16 %v192
      %v376 = vunpack.c.l.b16 %v193
      %v377 = vunpack.c.l.b16 %v194
      %v378 = vpack.c.b16 %v363, %v362
      %v379 = vpack.c.b16 %v365, %v364
      %v380 = vpack.c.b16 %v367, %v366
      %v381 = vpack.c.b16 %v369, %v368
      %v382 = vpack.c.b16 %v371, %v370
      %v383 = vpack.c.b16 %v373, %v372
      %v384 = vpack.c.b16 %v375, %v374
      %v385 = vpack.c.b16 %v377, %v376
      %394 = vmatpush.bf16.msra.mxu0 %v385
      %395 = vmatpush.bf16.msra.mxu0 %v384
      %396 = vmatpush.bf16.msra.mxu0 %v383
      %397 = vmatpush.bf16.msra.mxu0 %v382
      %398 = vmatpush.bf16.msra.mxu0 %v381
      %399 = vmatpush.bf16.msra.mxu0 %v380
      %400 = vmatpush.bf16.msra.mxu0 %v379
      %401 = vmatpush.bf16.msra.mxu0 %v378
      %402 = vmatmul.bf16.gmra.mxu0 %v338
      %v403 = vpop.f32.mrf.mxu0
      %v404 = vadd.f32 %v303, %v403
      %v405 = vpop.f32.mrf.mxu0
      %v406 = vadd.f32 %v305, %v405
      %407 = vmatmul.bf16.gmra.mxu0 %v339
      %v408 = vpop.f32.mrf.mxu0
      %v409 = vadd.f32 %v308, %v408
      %v410 = vpop.f32.mrf.mxu0
      %v411 = vadd.f32 %v310, %v410
      %412 = vmatmul.bf16.gmra.mxu0 %v340
      %v413 = vpop.f32.mrf.mxu0
      %v414 = vadd.f32 %v313, %v413
      %v415 = vpop.f32.mrf.mxu0
      %v416 = vadd.f32 %v315, %v415
      %417 = vmatmul.bf16.gmra.mxu0 %v341
      %v418 = vpop.f32.mrf.mxu0
      %v419 = vadd.f32 %v318, %v418
      %v420 = vpop.f32.mrf.mxu0
      %v421 = vadd.f32 %v320, %v420
      %422 = vdwg.mxu0
      %v423 = vld [vmem:[%s165] sm:$0xf]
      %v424 = vld [vmem:[%s165 + $0x4] sm:$0x1]
      %v425 = vld [vmem:[%s165 + $0x8] sm:$0xf]
      %v426 = vld [vmem:[%s165 + $0xc] sm:$0x1]
      %v427 = vld [vmem:[%s165 + $0x10] sm:$0xf]
      %v428 = vld [vmem:[%s165 + $0x14] sm:$0x1]
      %v429 = vld [vmem:[%s165 + $0x18] sm:$0xf]
      %v430 = vld [vmem:[%s165 + $0x1c] sm:$0x1]
      %v431 = vld [vmem:[%s165 + $0x20] sm:$0xf]
      %v432 = vld [vmem:[%s165 + $0x24] sm:$0x1]
      %v433 = vld [vmem:[%s165 + $0x28] sm:$0xf]
      %v434 = vld [vmem:[%s165 + $0x2c] sm:$0x1]
      %v435 = vld [vmem:[%s165 + $0x30] sm:$0xf]
      %v436 = vld [vmem:[%s165 + $0x34] sm:$0x1]
      %v437 = vld [vmem:[%s165 + $0x38] sm:$0xf]
      %v438 = vld [vmem:[%s165 + $0x3c] sm:$0x1]
      %vm439 = vsmask.f32 3328
      %vm440 = vsmask.f32 7440
      %vm441 = vmor %vm439, %vm440
      %v443 = vshrl.u32 %v423, 16
      %v445 = vrot.slane %v443, 4
      %v446 = vshll.u32 %v423, 16
      %v448 = vrot.slane %v446, 5
      %v449 = vor.u32 %v445, %v448
      %v450 = vrot.slane %v449, 4
      %v452 = vshll.u32 %v424, 16
      %v454 = vrot.slane %v452, 5
      %v455 = vsel %vm441, %v450, %v454
      %v457 = vshrl.u32 %v425, 16
      %v459 = vrot.slane %v457, 4
      %v460 = vshll.u32 %v425, 16
      %v462 = vrot.slane %v460, 5
      %v463 = vor.u32 %v459, %v462
      %v464 = vrot.slane %v463, 4
      %v466 = vshll.u32 %v426, 16
      %v468 = vrot.slane %v466, 5
      %v469 = vsel %vm441, %v464, %v468
      %v471 = vshrl.u32 %v427, 16
      %v473 = vrot.slane %v471, 4
      %v474 = vshll.u32 %v427, 16
      %v476 = vrot.slane %v474, 5
      %v477 = vor.u32 %v473, %v476
      %v478 = vrot.slane %v477, 4
      %v480 = vshll.u32 %v428, 16
      %v482 = vrot.slane %v480, 5
      %v483 = vsel %vm441, %v478, %v482
      %v485 = vshrl.u32 %v429, 16
      %v487 = vrot.slane %v485, 4
      %v488 = vshll.u32 %v429, 16
      %v490 = vrot.slane %v488, 5
      %v491 = vor.u32 %v487, %v490
      %v492 = vrot.slane %v491, 4
      %v494 = vshll.u32 %v430, 16
      %v496 = vrot.slane %v494, 5
      %v497 = vsel %vm441, %v492, %v496
      %v499 = vshrl.u32 %v431, 16
      %v501 = vrot.slane %v499, 4
      %v502 = vshll.u32 %v431, 16
      %v504 = vrot.slane %v502, 5
      %v505 = vor.u32 %v501, %v504
      %v506 = vrot.slane %v505, 4
      %v508 = vshll.u32 %v432, 16
      %v510 = vrot.slane %v508, 5
      %v511 = vsel %vm441, %v506, %v510
      %v513 = vshrl.u32 %v433, 16
      %v515 = vrot.slane %v513, 4
      %v516 = vshll.u32 %v433, 16
      %v518 = vrot.slane %v516, 5
      %v519 = vor.u32 %v515, %v518
      %v520 = vrot.slane %v519, 4
      %v522 = vshll.u32 %v434, 16
      %v524 = vrot.slane %v522, 5
      %v525 = vsel %vm441, %v520, %v524
      %v527 = vshrl.u32 %v435, 16
      %v529 = vrot.slane %v527, 4
      %v530 = vshll.u32 %v435, 16
      %v532 = vrot.slane %v530, 5
      %v533 = vor.u32 %v529, %v532
      %v534 = vrot.slane %v533, 4
      %v536 = vshll.u32 %v436, 16
      %v538 = vrot.slane %v536, 5
      %v539 = vsel %vm441, %v534, %v538
      %v541 = vshrl.u32 %v437, 16
      %v543 = vrot.slane %v541, 4
      %v544 = vshll.u32 %v437, 16
      %v546 = vrot.slane %v544, 5
      %v547 = vor.u32 %v543, %v546
      %v548 = vrot.slane %v547, 4
      %v550 = vshll.u32 %v438, 16
      %v552 = vrot.slane %v550, 5
      %v553 = vsel %vm441, %v548, %v552
      %s554 = scalar_lea.vmem %s1, 128
      %v555 = vld [vmem:[%s554] sm:$0xf]
      %v556 = vld [vmem:[%s554 + $0x4] sm:$0xf]
      %v557 = vld [vmem:[%s554 + $0x8] sm:$0xf]
      %v558 = vld [vmem:[%s554 + $0xc] sm:$0xf]
      %v559 = vld [vmem:[%s554 + $0x10] sm:$0xf]
      %v560 = vld [vmem:[%s554 + $0x14] sm:$0xf]
      %v561 = vld [vmem:[%s554 + $0x18] sm:$0xf]
      %v562 = vld [vmem:[%s554 + $0x1c] sm:$0xf]
      %v563 = vld [vmem:[%s554 + $0x20] sm:$0xf]
      %v564 = vld [vmem:[%s554 + $0x24] sm:$0xf]
      %v565 = vld [vmem:[%s554 + $0x28] sm:$0xf]
      %v566 = vld [vmem:[%s554 + $0x2c] sm:$0xf]
      %v567 = vld [vmem:[%s554 + $0x30] sm:$0xf]
      %v568 = vld [vmem:[%s554 + $0x34] sm:$0xf]
      %v569 = vld [vmem:[%s554 + $0x38] sm:$0xf]
      %v570 = vld [vmem:[%s554 + $0x3c] sm:$0xf]
      %v571 = vunpack.c.l.b16 %v455
      %v572 = vunpack.c.l.b16 %v469
      %v573 = vunpack.c.l.b16 %v483
      %v574 = vunpack.c.l.b16 %v497
      %v575 = vunpack.c.l.b16 %v511
      %v576 = vunpack.c.l.b16 %v525
      %v577 = vunpack.c.l.b16 %v539
      %v578 = vunpack.c.l.b16 %v553
      %v579 = vpack.c.b16 %v572, %v571
      %v580 = vpack.c.b16 %v574, %v573
      %v581 = vpack.c.b16 %v576, %v575
      %v582 = vpack.c.b16 %v578, %v577
      %v603 = vunpack.c.l.b16 %v555
      %v604 = vunpack.c.l.b16 %v556
      %v605 = vunpack.c.l.b16 %v557
      %v606 = vunpack.c.l.b16 %v558
      %v607 = vunpack.c.l.b16 %v559
      %v608 = vunpack.c.l.b16 %v560
      %v609 = vunpack.c.l.b16 %v561
      %v610 = vunpack.c.l.b16 %v562
      %v611 = vunpack.c.l.b16 %v563
      %v612 = vunpack.c.l.b16 %v564
      %v613 = vunpack.c.l.b16 %v565
      %v614 = vunpack.c.l.b16 %v566
      %v615 = vunpack.c.l.b16 %v567
      %v616 = vunpack.c.l.b16 %v568
      %v617 = vunpack.c.l.b16 %v569
      %v618 = vunpack.c.l.b16 %v570
      %v619 = vpack.c.b16 %v604, %v603
      %v620 = vpack.c.b16 %v606, %v605
      %v621 = vpack.c.b16 %v608, %v607
      %v622 = vpack.c.b16 %v610, %v609
      %v623 = vpack.c.b16 %v612, %v611
      %v624 = vpack.c.b16 %v614, %v613
      %v625 = vpack.c.b16 %v616, %v615
      %v626 = vpack.c.b16 %v618, %v617
      %635 = vmatpush.bf16.msra.mxu0 %v626
      %636 = vmatpush.bf16.msra.mxu0 %v625
      %637 = vmatpush.bf16.msra.mxu0 %v624
      %638 = vmatpush.bf16.msra.mxu0 %v623
      %639 = vmatpush.bf16.msra.mxu0 %v622
      %640 = vmatpush.bf16.msra.mxu0 %v621
      %641 = vmatpush.bf16.msra.mxu0 %v620
      %642 = vmatpush.bf16.msra.mxu0 %v619
      %643 = vmatmul.bf16.gmra.mxu0 %v579
      %v644 = vpop.f32.mrf.mxu0
      %v645 = vadd.f32 0.0, %v644
      %v646 = vpop.f32.mrf.mxu0
      %v647 = vadd.f32 0.0, %v646
      %648 = vmatmul.bf16.gmra.mxu0 %v580
      %v649 = vpop.f32.mrf.mxu0
      %v650 = vadd.f32 0.0, %v649
      %v651 = vpop.f32.mrf.mxu0
      %v652 = vadd.f32 0.0, %v651
      %653 = vmatmul.bf16.gmra.mxu0 %v581
      %v654 = vpop.f32.mrf.mxu0
      %v655 = vadd.f32 0.0, %v654
      %v656 = vpop.f32.mrf.mxu0
      %v657 = vadd.f32 0.0, %v656
      %658 = vmatmul.bf16.gmra.mxu0 %v582
      %v659 = vpop.f32.mrf.mxu0
      %v660 = vadd.f32 0.0, %v659
      %v661 = vpop.f32.mrf.mxu0
      %v662 = vadd.f32 0.0, %v661
      %663 = vdwg.mxu0
      %v664 = vadd.f32 %v404, %v645
      %v665 = vadd.f32 %v406, %v647
      %v666 = vadd.f32 %v409, %v650
      %v667 = vadd.f32 %v411, %v652
      %v668 = vadd.f32 %v414, %v655
      %v669 = vadd.f32 %v416, %v657
      %v670 = vadd.f32 %v419, %v660
      %v671 = vadd.f32 %v421, %v662
      %s672 = scalar_lea.vmem %s165, 144
      %v673 = vld [vmem:[%s672] sm:$0xf]
      %v674 = vld [vmem:[%s672 + $0x8] sm:$0xf]
      %v675 = vld [vmem:[%s672 + $0x10] sm:$0xf]
      %v676 = vld [vmem:[%s672 + $0x18] sm:$0xf]
      %v677 = vld [vmem:[%s672 + $0x20] sm:$0xf]
      %v678 = vld [vmem:[%s672 + $0x28] sm:$0xf]
      %v679 = vld [vmem:[%s672 + $0x30] sm:$0xf]
      %v680 = vld [vmem:[%s672 + $0x38] sm:$0xf]
      %s681 = scalar_lea.vmem %s1, 192
      %v682 = vld [vmem:[%s681] sm:$0xf]
      %v683 = vld [vmem:[%s681 + $0x4] sm:$0xf]
      %v684 = vld [vmem:[%s681 + $0x8] sm:$0xf]
      %v685 = vld [vmem:[%s681 + $0xc] sm:$0xf]
      %v686 = vld [vmem:[%s681 + $0x10] sm:$0xf]
      %v687 = vld [vmem:[%s681 + $0x14] sm:$0xf]
      %v688 = vld [vmem:[%s681 + $0x18] sm:$0xf]
      %v689 = vld [vmem:[%s681 + $0x1c] sm:$0xf]
      %v690 = vld [vmem:[%s681 + $0x20] sm:$0xf]
      %v691 = vld [vmem:[%s681 + $0x24] sm:$0xf]
      %v692 = vld [vmem:[%s681 + $0x28] sm:$0xf]
      %v693 = vld [vmem:[%s681 + $0x2c] sm:$0xf]
      %v694 = vld [vmem:[%s681 + $0x30] sm:$0xf]
      %v695 = vld [vmem:[%s681 + $0x34] sm:$0xf]
      %v696 = vld [vmem:[%s681 + $0x38] sm:$0xf]
      %v697 = vld [vmem:[%s681 + $0x3c] sm:$0xf]
      %v706 = vunpack.c.l.b16 %v673
      %v707 = vunpack.c.l.b16 %v674
      %v708 = vunpack.c.l.b16 %v675
      %v709 = vunpack.c.l.b16 %v676
      %v710 = vunpack.c.l.b16 %v677
      %v711 = vunpack.c.l.b16 %v678
      %v712 = vunpack.c.l.b16 %v679
      %v713 = vunpack.c.l.b16 %v680
      %v714 = vpack.c.b16 %v707, %v706
      %v715 = vpack.c.b16 %v709, %v708
      %v716 = vpack.c.b16 %v711, %v710
      %v717 = vpack.c.b16 %v713, %v712
      %v738 = vunpack.c.l.b16 %v682
      %v739 = vunpack.c.l.b16 %v683
      %v740 = vunpack.c.l.b16 %v684
      %v741 = vunpack.c.l.b16 %v685
      %v742 = vunpack.c.l.b16 %v686
      %v743 = vunpack.c.l.b16 %v687
      %v744 = vunpack.c.l.b16 %v688
      %v745 = vunpack.c.l.b16 %v689
      %v746 = vunpack.c.l.b16 %v690
      %v747 = vunpack.c.l.b16 %v691
      %v748 = vunpack.c.l.b16 %v692
      %v749 = vunpack.c.l.b16 %v693
      %v750 = vunpack.c.l.b16 %v694
      %v751 = vunpack.c.l.b16 %v695
      %v752 = vunpack.c.l.b16 %v696
      %v753 = vunpack.c.l.b16 %v697
      %v754 = vpack.c.b16 %v739, %v738
      %v755 = vpack.c.b16 %v741, %v740
      %v756 = vpack.c.b16 %v743, %v742
      %v757 = vpack.c.b16 %v745, %v744
      %v758 = vpack.c.b16 %v747, %v746
      %v759 = vpack.c.b16 %v749, %v748
      %v760 = vpack.c.b16 %v751, %v750
      %v761 = vpack.c.b16 %v753, %v752
      %770 = vmatpush.bf16.msra.mxu0 %v761
      %771 = vmatpush.bf16.msra.mxu0 %v760
      %772 = vmatpush.bf16.msra.mxu0 %v759
      %773 = vmatpush.bf16.msra.mxu0 %v758
      %774 = vmatpush.bf16.msra.mxu0 %v757
      %775 = vmatpush.bf16.msra.mxu0 %v756
      %776 = vmatpush.bf16.msra.mxu0 %v755
      %777 = vmatpush.bf16.msra.mxu0 %v754
      %778 = vmatmul.bf16.gmra.mxu0 %v714
      %v779 = vpop.f32.mrf.mxu0
      %v780 = vadd.f32 0.0, %v779
      %v781 = vpop.f32.mrf.mxu0
      %v782 = vadd.f32 0.0, %v781
      %783 = vmatmul.bf16.gmra.mxu0 %v715
      %v784 = vpop.f32.mrf.mxu0
      %v785 = vadd.f32 0.0, %v784
      %v786 = vpop.f32.mrf.mxu0
      %v787 = vadd.f32 0.0, %v786
      %788 = vmatmul.bf16.gmra.mxu0 %v716
      %v789 = vpop.f32.mrf.mxu0
      %v790 = vadd.f32 0.0, %v789
      %v791 = vpop.f32.mrf.mxu0
      %v792 = vadd.f32 0.0, %v791
      %793 = vmatmul.bf16.gmra.mxu0 %v717
      %v794 = vpop.f32.mrf.mxu0
      %v795 = vadd.f32 0.0, %v794
      %v796 = vpop.f32.mrf.mxu0
      %v797 = vadd.f32 0.0, %v796
      %798 = vdwg.mxu0
      %v799 = vadd.f32 %v664, %v780
      %v800 = vadd.f32 %v665, %v782
      %v801 = vadd.f32 %v666, %v785
      %v802 = vadd.f32 %v667, %v787
      %v803 = vadd.f32 %v668, %v790
      %v804 = vadd.f32 %v669, %v792
      %v805 = vadd.f32 %v670, %v795
      %v806 = vadd.f32 %v671, %v797
      %s807 = scalar_lea.vmem %s165, 216
      %v808 = vld [vmem:[%s807] sm:$0xf]
      %v809 = vld [vmem:[%s807 + $0x8] sm:$0xf]
      %v810 = vld [vmem:[%s807 + $0x10] sm:$0xf]
      %v811 = vld [vmem:[%s807 + $0x18] sm:$0xf]
      %v812 = vld [vmem:[%s807 + $0x20] sm:$0xf]
      %v813 = vld [vmem:[%s807 + $0x28] sm:$0xf]
      %v814 = vld [vmem:[%s807 + $0x30] sm:$0xf]
      %v815 = vld [vmem:[%s807 + $0x38] sm:$0xf]
      %s816 = scalar_lea.vmem %s1, 256
      %v817 = vld [vmem:[%s816] sm:$0xf]
      %v818 = vld [vmem:[%s816 + $0x4] sm:$0xf]
      %v819 = vld [vmem:[%s816 + $0x8] sm:$0xf]
      %v820 = vld [vmem:[%s816 + $0xc] sm:$0xf]
      %v821 = vld [vmem:[%s816 + $0x10] sm:$0xf]
      %v822 = vld [vmem:[%s816 + $0x14] sm:$0xf]
      %v823 = vld [vmem:[%s816 + $0x18] sm:$0xf]
      %v824 = vld [vmem:[%s816 + $0x1c] sm:$0xf]
      %v825 = vld [vmem:[%s816 + $0x20] sm:$0xf]
      %v826 = vld [vmem:[%s816 + $0x24] sm:$0xf]
      %v827 = vld [vmem:[%s816 + $0x28] sm:$0xf]
      %v828 = vld [vmem:[%s816 + $0x2c] sm:$0xf]
      %v829 = vld [vmem:[%s816 + $0x30] sm:$0xf]
      %v830 = vld [vmem:[%s816 + $0x34] sm:$0xf]
      %v831 = vld [vmem:[%s816 + $0x38] sm:$0xf]
      %v832 = vld [vmem:[%s816 + $0x3c] sm:$0xf]
      %v841 = vunpack.c.l.b16 %v808
      %v842 = vunpack.c.l.b16 %v809
      %v843 = vunpack.c.l.b16 %v810
      %v844 = vunpack.c.l.b16 %v811
      %v845 = vunpack.c.l.b16 %v812
      %v846 = vunpack.c.l.b16 %v813
      %v847 = vunpack.c.l.b16 %v814
      %v848 = vunpack.c.l.b16 %v815
      %v849 = vpack.c.b16 %v842, %v841
      %v850 = vpack.c.b16 %v844, %v843
      %v851 = vpack.c.b16 %v846, %v845
      %v852 = vpack.c.b16 %v848, %v847
      %v873 = vunpack.c.l.b16 %v817
      %v874 = vunpack.c.l.b16 %v818
      %v875 = vunpack.c.l.b16 %v819
      %v876 = vunpack.c.l.b16 %v820
      %v877 = vunpack.c.l.b16 %v821
      %v878 = vunpack.c.l.b16 %v822
      %v879 = vunpack.c.l.b16 %v823
      %v880 = vunpack.c.l.b16 %v824
      %v881 = vunpack.c.l.b16 %v825
      %v882 = vunpack.c.l.b16 %v826
      %v883 = vunpack.c.l.b16 %v827
      %v884 = vunpack.c.l.b16 %v828
      %v885 = vunpack.c.l.b16 %v829
      %v886 = vunpack.c.l.b16 %v830
      %v887 = vunpack.c.l.b16 %v831
      %v888 = vunpack.c.l.b16 %v832
      %v889 = vpack.c.b16 %v874, %v873
      %v890 = vpack.c.b16 %v876, %v875
      %v891 = vpack.c.b16 %v878, %v877
      %v892 = vpack.c.b16 %v880, %v879
      %v893 = vpack.c.b16 %v882, %v881
      %v894 = vpack.c.b16 %v884, %v883
      %v895 = vpack.c.b16 %v886, %v885
      %v896 = vpack.c.b16 %v888, %v887
      %905 = vmatpush.bf16.msra.mxu0 %v896
      %906 = vmatpush.bf16.msra.mxu0 %v895
      %907 = vmatpush.bf16.msra.mxu0 %v894
      %908 = vmatpush.bf16.msra.mxu0 %v893
      %909 = vmatpush.bf16.msra.mxu0 %v892
      %910 = vmatpush.bf16.msra.mxu0 %v891
      %911 = vmatpush.bf16.msra.mxu0 %v890
      %912 = vmatpush.bf16.msra.mxu0 %v889
      %913 = vmatmul.bf16.gmra.mxu0 %v849
      %v914 = vpop.f32.mrf.mxu0
      %v915 = vadd.f32 0.0, %v914
      %v916 = vpop.f32.mrf.mxu0
      %v917 = vadd.f32 0.0, %v916
      %918 = vmatmul.bf16.gmra.mxu0 %v850
      %v919 = vpop.f32.mrf.mxu0
      %v920 = vadd.f32 0.0, %v919
      %v921 = vpop.f32.mrf.mxu0
      %v922 = vadd.f32 0.0, %v921
      %923 = vmatmul.bf16.gmra.mxu0 %v851
      %v924 = vpop.f32.mrf.mxu0
      %v925 = vadd.f32 0.0, %v924
      %v926 = vpop.f32.mrf.mxu0
      %v927 = vadd.f32 0.0, %v926
      %928 = vmatmul.bf16.gmra.mxu0 %v852
      %v929 = vpop.f32.mrf.mxu0
      %v930 = vadd.f32 0.0, %v929
      %v931 = vpop.f32.mrf.mxu0
      %v932 = vadd.f32 0.0, %v931
      %933 = vdwg.mxu0
      %v934 = vadd.f32 %v799, %v915
      %v935 = vadd.f32 %v800, %v917
      %v936 = vadd.f32 %v801, %v920
      %v937 = vadd.f32 %v802, %v922
      %v938 = vadd.f32 %v803, %v925
      %v939 = vadd.f32 %v804, %v927
      %v940 = vadd.f32 %v805, %v930
      %v941 = vadd.f32 %v806, %v932
      %v942 = vld [vmem:[%s672] sm:$0xf]
      %v943 = vld [vmem:[%s672 + $0x4] sm:$0x1]
      %v944 = vld [vmem:[%s672 + $0x8] sm:$0xf]
      %v945 = vld [vmem:[%s672 + $0xc] sm:$0x1]
      %v946 = vld [vmem:[%s672 + $0x10] sm:$0xf]
      %v947 = vld [vmem:[%s672 + $0x14] sm:$0x1]
      %v948 = vld [vmem:[%s672 + $0x18] sm:$0xf]
      %v949 = vld [vmem:[%s672 + $0x1c] sm:$0x1]
      %v950 = vld [vmem:[%s672 + $0x20] sm:$0xf]
      %v951 = vld [vmem:[%s672 + $0x24] sm:$0x1]
      %v952 = vld [vmem:[%s672 + $0x28] sm:$0xf]
      %v953 = vld [vmem:[%s672 + $0x2c] sm:$0x1]
      %v954 = vld [vmem:[%s672 + $0x30] sm:$0xf]
      %v955 = vld [vmem:[%s672 + $0x34] sm:$0x1]
      %v956 = vld [vmem:[%s672 + $0x38] sm:$0xf]
      %v957 = vld [vmem:[%s672 + $0x3c] sm:$0x1]
      %v959 = vshrl.u32 %v942, 16
      %v961 = vrot.slane %v959, 4
      %v962 = vshll.u32 %v942, 16
      %v964 = vrot.slane %v962, 5
      %v965 = vor.u32 %v961, %v964
      %v966 = vrot.slane %v965, 4
      %v968 = vshll.u32 %v943, 16
      %v970 = vrot.slane %v968, 5
      %v971 = vsel %vm441, %v966, %v970
      %v973 = vshrl.u32 %v944, 16
      %v975 = vrot.slane %v973, 4
      %v976 = vshll.u32 %v944, 16
      %v978 = vrot.slane %v976, 5
      %v979 = vor.u32 %v975, %v978
      %v980 = vrot.slane %v979, 4
      %v982 = vshll.u32 %v945, 16
      %v984 = vrot.slane %v982, 5
      %v985 = vsel %vm441, %v980, %v984
      %v987 = vshrl.u32 %v946, 16
      %v989 = vrot.slane %v987, 4
      %v990 = vshll.u32 %v946, 16
      %v992 = vrot.slane %v990, 5
      %v993 = vor.u32 %v989, %v992
      %v994 = vrot.slane %v993, 4
      %v996 = vshll.u32 %v947, 16
      %v998 = vrot.slane %v996, 5
      %v999 = vsel %vm441, %v994, %v998
      %v1001 = vshrl.u32 %v948, 16
      %v1003 = vrot.slane %v1001, 4
      %v1004 = vshll.u32 %v948, 16
      %v1006 = vrot.slane %v1004, 5
      %v1007 = vor.u32 %v1003, %v1006
      %v1008 = vrot.slane %v1007, 4
      %v1010 = vshll.u32 %v949, 16
      %v1012 = vrot.slane %v1010, 5
      %v1013 = vsel %vm441, %v1008, %v1012
      %v1015 = vshrl.u32 %v950, 16
      %v1017 = vrot.slane %v1015, 4
      %v1018 = vshll.u32 %v950, 16
      %v1020 = vrot.slane %v1018, 5
      %v1021 = vor.u32 %v1017, %v1020
      %v1022 = vrot.slane %v1021, 4
      %v1024 = vshll.u32 %v951, 16
      %v1026 = vrot.slane %v1024, 5
      %v1027 = vsel %vm441, %v1022, %v1026
      %v1029 = vshrl.u32 %v952, 16
      %v1031 = vrot.slane %v1029, 4
      %v1032 = vshll.u32 %v952, 16
      %v1034 = vrot.slane %v1032, 5
      %v1035 = vor.u32 %v1031, %v1034
      %v1036 = vrot.slane %v1035, 4
      %v1038 = vshll.u32 %v953, 16
      %v1040 = vrot.slane %v1038, 5
      %v1041 = vsel %vm441, %v1036, %v1040
      %v1043 = vshrl.u32 %v954, 16
      %v1045 = vrot.slane %v1043, 4
      %v1046 = vshll.u32 %v954, 16
      %v1048 = vrot.slane %v1046, 5
      %v1049 = vor.u32 %v1045, %v1048
      %v1050 = vrot.slane %v1049, 4
      %v1052 = vshll.u32 %v955, 16
      %v1054 = vrot.slane %v1052, 5
      %v1055 = vsel %vm441, %v1050, %v1054
      %v1057 = vshrl.u32 %v956, 16
      %v1059 = vrot.slane %v1057, 4
      %v1060 = vshll.u32 %v956, 16
      %v1062 = vrot.slane %v1060, 5
      %v1063 = vor.u32 %v1059, %v1062
      %v1064 = vrot.slane %v1063, 4
      %v1066 = vshll.u32 %v957, 16
      %v1068 = vrot.slane %v1066, 5
      %v1069 = vsel %vm441, %v1064, %v1068
      %s1070 = scalar_lea.vmem %s1, 320
      %v1071 = vld [vmem:[%s1070] sm:$0xf]
      %v1072 = vld [vmem:[%s1070 + $0x4] sm:$0xf]
      %v1073 = vld [vmem:[%s1070 + $0x8] sm:$0xf]
      %v1074 = vld [vmem:[%s1070 + $0xc] sm:$0xf]
      %v1075 = vld [vmem:[%s1070 + $0x10] sm:$0xf]
      %v1076 = vld [vmem:[%s1070 + $0x14] sm:$0xf]
      %v1077 = vld [vmem:[%s1070 + $0x18] sm:$0xf]
      %v1078 = vld [vmem:[%s1070 + $0x1c] sm:$0xf]
      %v1079 = vld [vmem:[%s1070 + $0x20] sm:$0xf]
      %v1080 = vld [vmem:[%s1070 + $0x24] sm:$0xf]
      %v1081 = vld [vmem:[%s1070 + $0x28] sm:$0xf]
      %v1082 = vld [vmem:[%s1070 + $0x2c] sm:$0xf]
      %v1083 = vld [vmem:[%s1070 + $0x30] sm:$0xf]
      %v1084 = vld [vmem:[%s1070 + $0x34] sm:$0xf]
      %v1085 = vld [vmem:[%s1070 + $0x38] sm:$0xf]
      %v1086 = vld [vmem:[%s1070 + $0x3c] sm:$0xf]
      %v1087 = vunpack.c.l.b16 %v971
      %v1088 = vunpack.c.l.b16 %v985
      %v1089 = vunpack.c.l.b16 %v999
      %v1090 = vunpack.c.l.b16 %v1013
      %v1091 = vunpack.c.l.b16 %v1027
      %v1092 = vunpack.c.l.b16 %v1041
      %v1093 = vunpack.c.l.b16 %v1055
      %v1094 = vunpack.c.l.b16 %v1069
      %v1095 = vpack.c.b16 %v1088, %v1087
      %v1096 = vpack.c.b16 %v1090, %v1089
      %v1097 = vpack.c.b16 %v1092, %v1091
      %v1098 = vpack.c.b16 %v1094, %v1093
      %v1119 = vunpack.c.l.b16 %v1071
      %v1120 = vunpack.c.l.b16 %v1072
      %v1121 = vunpack.c.l.b16 %v1073
      %v1122 = vunpack.c.l.b16 %v1074
      %v1123 = vunpack.c.l.b16 %v1075
      %v1124 = vunpack.c.l.b16 %v1076
      %v1125 = vunpack.c.l.b16 %v1077
      %v1126 = vunpack.c.l.b16 %v1078
      %v1127 = vunpack.c.l.b16 %v1079
      %v1128 = vunpack.c.l.b16 %v1080
      %v1129 = vunpack.c.l.b16 %v1081
      %v1130 = vunpack.c.l.b16 %v1082
      %v1131 = vunpack.c.l.b16 %v1083
      %v1132 = vunpack.c.l.b16 %v1084
      %v1133 = vunpack.c.l.b16 %v1085
      %v1134 = vunpack.c.l.b16 %v1086
      %v1135 = vpack.c.b16 %v1120, %v1119
      %v1136 = vpack.c.b16 %v1122, %v1121
      %v1137 = vpack.c.b16 %v1124, %v1123
      %v1138 = vpack.c.b16 %v1126, %v1125
      %v1139 = vpack.c.b16 %v1128, %v1127
      %v1140 = vpack.c.b16 %v1130, %v1129
      %v1141 = vpack.c.b16 %v1132, %v1131
      %v1142 = vpack.c.b16 %v1134, %v1133
      %1151 = vmatpush.bf16.msra.mxu0 %v1142
      %1152 = vmatpush.bf16.msra.mxu0 %v1141
      %1153 = vmatpush.bf16.msra.mxu0 %v1140
      %1154 = vmatpush.bf16.msra.mxu0 %v1139
      %1155 = vmatpush.bf16.msra.mxu0 %v1138
      %1156 = vmatpush.bf16.msra.mxu0 %v1137
      %1157 = vmatpush.bf16.msra.mxu0 %v1136
      %1158 = vmatpush.bf16.msra.mxu0 %v1135
      %1159 = vmatmul.bf16.gmra.mxu0 %v1095
      %v1160 = vpop.f32.mrf.mxu0
      %v1161 = vadd.f32 0.0, %v1160
      %v1162 = vpop.f32.mrf.mxu0
      %v1163 = vadd.f32 0.0, %v1162
      %1164 = vmatmul.bf16.gmra.mxu0 %v1096
      %v1165 = vpop.f32.mrf.mxu0
      %v1166 = vadd.f32 0.0, %v1165
      %v1167 = vpop.f32.mrf.mxu0
      %v1168 = vadd.f32 0.0, %v1167
      %1169 = vmatmul.bf16.gmra.mxu0 %v1097
      %v1170 = vpop.f32.mrf.mxu0
      %v1171 = vadd.f32 0.0, %v1170
      %v1172 = vpop.f32.mrf.mxu0
      %v1173 = vadd.f32 0.0, %v1172
      %1174 = vmatmul.bf16.gmra.mxu0 %v1098
      %v1175 = vpop.f32.mrf.mxu0
      %v1176 = vadd.f32 0.0, %v1175
      %v1177 = vpop.f32.mrf.mxu0
      %v1178 = vadd.f32 0.0, %v1177
      %1179 = vdwg.mxu0
      %v1180 = vadd.f32 %v934, %v1161
      %v1181 = vadd.f32 %v935, %v1163
      %v1182 = vadd.f32 %v936, %v1166
      %v1183 = vadd.f32 %v937, %v1168
      %v1184 = vadd.f32 %v938, %v1171
      %v1185 = vadd.f32 %v939, %v1173
      %v1186 = vadd.f32 %v940, %v1176
      %v1187 = vadd.f32 %v941, %v1178
      %s1188 = scalar_lea.vmem %s165, 8
      %v1189 = vld [vmem:[%s1188] sm:$0xf]
      %v1190 = vld [vmem:[%s1188 + $0x8] sm:$0xf]
      %v1191 = vld [vmem:[%s1188 + $0x10] sm:$0xf]
      %v1192 = vld [vmem:[%s1188 + $0x18] sm:$0xf]
      %v1193 = vld [vmem:[%s1188 + $0x20] sm:$0xf]
      %v1194 = vld [vmem:[%s1188 + $0x28] sm:$0xf]
      %v1195 = vld [vmem:[%s1188 + $0x30] sm:$0xf]
      %v1196 = vld [vmem:[%s1188 + $0x38] sm:$0xf]
      %s1197 = scalar_lea.vmem %s1, 384
      %v1198 = vld [vmem:[%s1197] sm:$0xf]
      %v1199 = vld [vmem:[%s1197 + $0x4] sm:$0xf]
      %v1200 = vld [vmem:[%s1197 + $0x8] sm:$0xf]
      %v1201 = vld [vmem:[%s1197 + $0xc] sm:$0xf]
      %v1202 = vld [vmem:[%s1197 + $0x10] sm:$0xf]
      %v1203 = vld [vmem:[%s1197 + $0x14] sm:$0xf]
      %v1204 = vld [vmem:[%s1197 + $0x18] sm:$0xf]
      %v1205 = vld [vmem:[%s1197 + $0x1c] sm:$0xf]
      %v1206 = vld [vmem:[%s1197 + $0x20] sm:$0xf]
      %v1207 = vld [vmem:[%s1197 + $0x24] sm:$0xf]
      %v1208 = vld [vmem:[%s1197 + $0x28] sm:$0xf]
      %v1209 = vld [vmem:[%s1197 + $0x2c] sm:$0xf]
      %v1210 = vld [vmem:[%s1197 + $0x30] sm:$0xf]
      %v1211 = vld [vmem:[%s1197 + $0x34] sm:$0xf]
      %v1212 = vld [vmem:[%s1197 + $0x38] sm:$0xf]
      %v1213 = vld [vmem:[%s1197 + $0x3c] sm:$0xf]
      %v1222 = vunpack.c.l.b16 %v1189
      %v1223 = vunpack.c.l.b16 %v1190
      %v1224 = vunpack.c.l.b16 %v1191
      %v1225 = vunpack.c.l.b16 %v1192
      %v1226 = vunpack.c.l.b16 %v1193
      %v1227 = vunpack.c.l.b16 %v1194
      %v1228 = vunpack.c.l.b16 %v1195
      %v1229 = vunpack.c.l.b16 %v1196
      %v1230 = vpack.c.b16 %v1223, %v1222
      %v1231 = vpack.c.b16 %v1225, %v1224
      %v1232 = vpack.c.b16 %v1227, %v1226
      %v1233 = vpack.c.b16 %v1229, %v1228
      %v1254 = vunpack.c.l.b16 %v1198
      %v1255 = vunpack.c.l.b16 %v1199
      %v1256 = vunpack.c.l.b16 %v1200
      %v1257 = vunpack.c.l.b16 %v1201
      %v1258 = vunpack.c.l.b16 %v1202
      %v1259 = vunpack.c.l.b16 %v1203
      %v1260 = vunpack.c.l.b16 %v1204
      %v1261 = vunpack.c.l.b16 %v1205
      %v1262 = vunpack.c.l.b16 %v1206
      %v1263 = vunpack.c.l.b16 %v1207
      %v1264 = vunpack.c.l.b16 %v1208
      %v1265 = vunpack.c.l.b16 %v1209
      %v1266 = vunpack.c.l.b16 %v1210
      %v1267 = vunpack.c.l.b16 %v1211
      %v1268 = vunpack.c.l.b16 %v1212
      %v1269 = vunpack.c.l.b16 %v1213
      %v1270 = vpack.c.b16 %v1255, %v1254
      %v1271 = vpack.c.b16 %v1257, %v1256
      %v1272 = vpack.c.b16 %v1259, %v1258
      %v1273 = vpack.c.b16 %v1261, %v1260
      %v1274 = vpack.c.b16 %v1263, %v1262
      %v1275 = vpack.c.b16 %v1265, %v1264
      %v1276 = vpack.c.b16 %v1267, %v1266
      %v1277 = vpack.c.b16 %v1269, %v1268
      %1286 = vmatpush.bf16.msra.mxu0 %v1277
      %1287 = vmatpush.bf16.msra.mxu0 %v1276
      %1288 = vmatpush.bf16.msra.mxu0 %v1275
      %1289 = vmatpush.bf16.msra.mxu0 %v1274
      %1290 = vmatpush.bf16.msra.mxu0 %v1273
      %1291 = vmatpush.bf16.msra.mxu0 %v1272
      %1292 = vmatpush.bf16.msra.mxu0 %v1271
      %1293 = vmatpush.bf16.msra.mxu0 %v1270
      %1294 = vmatmul.bf16.gmra.mxu0 %v1230
      %v1295 = vpop.f32.mrf.mxu0
      %v1296 = vadd.f32 0.0, %v1295
      %v1297 = vpop.f32.mrf.mxu0
      %v1298 = vadd.f32 0.0, %v1297
      %1299 = vmatmul.bf16.gmra.mxu0 %v1231
      %v1300 = vpop.f32.mrf.mxu0
      %v1301 = vadd.f32 0.0, %v1300
      %v1302 = vpop.f32.mrf.mxu0
      %v1303 = vadd.f32 0.0, %v1302
      %1304 = vmatmul.bf16.gmra.mxu0 %v1232
      %v1305 = vpop.f32.mrf.mxu0
      %v1306 = vadd.f32 0.0, %v1305
      %v1307 = vpop.f32.mrf.mxu0
      %v1308 = vadd.f32 0.0, %v1307
      %1309 = vmatmul.bf16.gmra.mxu0 %v1233
      %v1310 = vpop.f32.mrf.mxu0
      %v1311 = vadd.f32 0.0, %v1310
      %v1312 = vpop.f32.mrf.mxu0
      %v1313 = vadd.f32 0.0, %v1312
      %1314 = vdwg.mxu0
      %v1315 = vadd.f32 %v1180, %v1296
      %v1316 = vadd.f32 %v1181, %v1298
      %v1317 = vadd.f32 %v1182, %v1301
      %v1318 = vadd.f32 %v1183, %v1303
      %v1319 = vadd.f32 %v1184, %v1306
      %v1320 = vadd.f32 %v1185, %v1308
      %v1321 = vadd.f32 %v1186, %v1311
      %v1322 = vadd.f32 %v1187, %v1313
      %s1323 = scalar_lea.vmem %s165, 80
      %v1324 = vld [vmem:[%s1323] sm:$0xf]
      %v1325 = vld [vmem:[%s1323 + $0x8] sm:$0xf]
      %v1326 = vld [vmem:[%s1323 + $0x10] sm:$0xf]
      %v1327 = vld [vmem:[%s1323 + $0x18] sm:$0xf]
      %v1328 = vld [vmem:[%s1323 + $0x20] sm:$0xf]
      %v1329 = vld [vmem:[%s1323 + $0x28] sm:$0xf]
      %v1330 = vld [vmem:[%s1323 + $0x30] sm:$0xf]
      %v1331 = vld [vmem:[%s1323 + $0x38] sm:$0xf]
      %s1332 = scalar_lea.vmem %s1, 448
      %v1333 = vld [vmem:[%s1332] sm:$0xf]
      %v1334 = vld [vmem:[%s1332 + $0x4] sm:$0xf]
      %v1335 = vld [vmem:[%s1332 + $0x8] sm:$0xf]
      %v1336 = vld [vmem:[%s1332 + $0xc] sm:$0xf]
      %v1337 = vld [vmem:[%s1332 + $0x10] sm:$0xf]
      %v1338 = vld [vmem:[%s1332 + $0x14] sm:$0xf]
      %v1339 = vld [vmem:[%s1332 + $0x18] sm:$0xf]
      %v1340 = vld [vmem:[%s1332 + $0x1c] sm:$0xf]
      %v1341 = vld [vmem:[%s1332 + $0x20] sm:$0xf]
      %v1342 = vld [vmem:[%s1332 + $0x24] sm:$0xf]
      %v1343 = vld [vmem:[%s1332 + $0x28] sm:$0xf]
      %v1344 = vld [vmem:[%s1332 + $0x2c] sm:$0xf]
      %v1345 = vld [vmem:[%s1332 + $0x30] sm:$0xf]
      %v1346 = vld [vmem:[%s1332 + $0x34] sm:$0xf]
      %v1347 = vld [vmem:[%s1332 + $0x38] sm:$0xf]
      %v1348 = vld [vmem:[%s1332 + $0x3c] sm:$0xf]
      %v1357 = vunpack.c.l.b16 %v1324
      %v1358 = vunpack.c.l.b16 %v1325
      %v1359 = vunpack.c.l.b16 %v1326
      %v1360 = vunpack.c.l.b16 %v1327
      %v1361 = vunpack.c.l.b16 %v1328
      %v1362 = vunpack.c.l.b16 %v1329
      %v1363 = vunpack.c.l.b16 %v1330
      %v1364 = vunpack.c.l.b16 %v1331
      %v1365 = vpack.c.b16 %v1358, %v1357
      %v1366 = vpack.c.b16 %v1360, %v1359
      %v1367 = vpack.c.b16 %v1362, %v1361
      %v1368 = vpack.c.b16 %v1364, %v1363
      %v1389 = vunpack.c.l.b16 %v1333
      %v1390 = vunpack.c.l.b16 %v1334
      %v1391 = vunpack.c.l.b16 %v1335
      %v1392 = vunpack.c.l.b16 %v1336
      %v1393 = vunpack.c.l.b16 %v1337
      %v1394 = vunpack.c.l.b16 %v1338
      %v1395 = vunpack.c.l.b16 %v1339
      %v1396 = vunpack.c.l.b16 %v1340
      %v1397 = vunpack.c.l.b16 %v1341
      %v1398 = vunpack.c.l.b16 %v1342
      %v1399 = vunpack.c.l.b16 %v1343
      %v1400 = vunpack.c.l.b16 %v1344
      %v1401 = vunpack.c.l.b16 %v1345
      %v1402 = vunpack.c.l.b16 %v1346
      %v1403 = vunpack.c.l.b16 %v1347
      %v1404 = vunpack.c.l.b16 %v1348
      %v1405 = vpack.c.b16 %v1390, %v1389
      %v1406 = vpack.c.b16 %v1392, %v1391
      %v1407 = vpack.c.b16 %v1394, %v1393
      %v1408 = vpack.c.b16 %v1396, %v1395
      %v1409 = vpack.c.b16 %v1398, %v1397
      %v1410 = vpack.c.b16 %v1400, %v1399
      %v1411 = vpack.c.b16 %v1402, %v1401
      %v1412 = vpack.c.b16 %v1404, %v1403
      %1421 = vmatpush.bf16.msra.mxu0 %v1412
      %1422 = vmatpush.bf16.msra.mxu0 %v1411
      %1423 = vmatpush.bf16.msra.mxu0 %v1410
      %1424 = vmatpush.bf16.msra.mxu0 %v1409
      %1425 = vmatpush.bf16.msra.mxu0 %v1408
      %1426 = vmatpush.bf16.msra.mxu0 %v1407
      %1427 = vmatpush.bf16.msra.mxu0 %v1406
      %1428 = vmatpush.bf16.msra.mxu0 %v1405
      %1429 = vmatmul.bf16.gmra.mxu0 %v1365
      %v1430 = vpop.f32.mrf.mxu0
      %v1431 = vadd.f32 0.0, %v1430
      %v1432 = vpop.f32.mrf.mxu0
      %v1433 = vadd.f32 0.0, %v1432
      %1434 = vmatmul.bf16.gmra.mxu0 %v1366
      %v1435 = vpop.f32.mrf.mxu0
      %v1436 = vadd.f32 0.0, %v1435
      %v1437 = vpop.f32.mrf.mxu0
      %v1438 = vadd.f32 0.0, %v1437
      %1439 = vmatmul.bf16.gmra.mxu0 %v1367
      %v1440 = vpop.f32.mrf.mxu0
      %v1441 = vadd.f32 0.0, %v1440
      %v1442 = vpop.f32.mrf.mxu0
      %v1443 = vadd.f32 0.0, %v1442
      %1444 = vmatmul.bf16.gmra.mxu0 %v1368
      %v1445 = vpop.f32.mrf.mxu0
      %v1446 = vadd.f32 0.0, %v1445
      %v1447 = vpop.f32.mrf.mxu0
      %v1448 = vadd.f32 0.0, %v1447
      %1449 = vdwg.mxu0
      %v1450 = vadd.f32 %v1315, %v1431
      %v1451 = vadd.f32 %v1316, %v1433
      %v1452 = vadd.f32 %v1317, %v1436
      %v1453 = vadd.f32 %v1318, %v1438
      %v1454 = vadd.f32 %v1319, %v1441
      %v1455 = vadd.f32 %v1320, %v1443
      %v1456 = vadd.f32 %v1321, %v1446
      %v1457 = vadd.f32 %v1322, %v1448
      %v1458 = vld [vmem:[%s1188] sm:$0xf]
      %v1459 = vld [vmem:[%s1188 + $0x4] sm:$0x1]
      %v1460 = vld [vmem:[%s1188 + $0x8] sm:$0xf]
      %v1461 = vld [vmem:[%s1188 + $0xc] sm:$0x1]
      %v1462 = vld [vmem:[%s1188 + $0x10] sm:$0xf]
      %v1463 = vld [vmem:[%s1188 + $0x14] sm:$0x1]
      %v1464 = vld [vmem:[%s1188 + $0x18] sm:$0xf]
      %v1465 = vld [vmem:[%s1188 + $0x1c] sm:$0x1]
      %v1466 = vld [vmem:[%s1188 + $0x20] sm:$0xf]
      %v1467 = vld [vmem:[%s1188 + $0x24] sm:$0x1]
      %v1468 = vld [vmem:[%s1188 + $0x28] sm:$0xf]
      %v1469 = vld [vmem:[%s1188 + $0x2c] sm:$0x1]
      %v1470 = vld [vmem:[%s1188 + $0x30] sm:$0xf]
      %v1471 = vld [vmem:[%s1188 + $0x34] sm:$0x1]
      %v1472 = vld [vmem:[%s1188 + $0x38] sm:$0xf]
      %v1473 = vld [vmem:[%s1188 + $0x3c] sm:$0x1]
      %v1475 = vshrl.u32 %v1458, 16
      %v1477 = vrot.slane %v1475, 4
      %v1478 = vshll.u32 %v1458, 16
      %v1480 = vrot.slane %v1478, 5
      %v1481 = vor.u32 %v1477, %v1480
      %v1482 = vrot.slane %v1481, 4
      %v1484 = vshll.u32 %v1459, 16
      %v1486 = vrot.slane %v1484, 5
      %v1487 = vsel %vm441, %v1482, %v1486
      %v1489 = vshrl.u32 %v1460, 16
      %v1491 = vrot.slane %v1489, 4
      %v1492 = vshll.u32 %v1460, 16
      %v1494 = vrot.slane %v1492, 5
      %v1495 = vor.u32 %v1491, %v1494
      %v1496 = vrot.slane %v1495, 4
      %v1498 = vshll.u32 %v1461, 16
      %v1500 = vrot.slane %v1498, 5
      %v1501 = vsel %vm441, %v1496, %v1500
      %v1503 = vshrl.u32 %v1462, 16
      %v1505 = vrot.slane %v1503, 4
      %v1506 = vshll.u32 %v1462, 16
      %v1508 = vrot.slane %v1506, 5
      %v1509 = vor.u32 %v1505, %v1508
      %v1510 = vrot.slane %v1509, 4
      %v1512 = vshll.u32 %v1463, 16
      %v1514 = vrot.slane %v1512, 5
      %v1515 = vsel %vm441, %v1510, %v1514
      %v1517 = vshrl.u32 %v1464, 16
      %v1519 = vrot.slane %v1517, 4
      %v1520 = vshll.u32 %v1464, 16
      %v1522 = vrot.slane %v1520, 5
      %v1523 = vor.u32 %v1519, %v1522
      %v1524 = vrot.slane %v1523, 4
      %v1526 = vshll.u32 %v1465, 16
      %v1528 = vrot.slane %v1526, 5
      %v1529 = vsel %vm441, %v1524, %v1528
      %v1531 = vshrl.u32 %v1466, 16
      %v1533 = vrot.slane %v1531, 4
      %v1534 = vshll.u32 %v1466, 16
      %v1536 = vrot.slane %v1534, 5
      %v1537 = vor.u32 %v1533, %v1536
      %v1538 = vrot.slane %v1537, 4
      %v1540 = vshll.u32 %v1467, 16
      %v1542 = vrot.slane %v1540, 5
      %v1543 = vsel %vm441, %v1538, %v1542
      %v1545 = vshrl.u32 %v1468, 16
      %v1547 = vrot.slane %v1545, 4
      %v1548 = vshll.u32 %v1468, 16
      %v1550 = vrot.slane %v1548, 5
      %v1551 = vor.u32 %v1547, %v1550
      %v1552 = vrot.slane %v1551, 4
      %v1554 = vshll.u32 %v1469, 16
      %v1556 = vrot.slane %v1554, 5
      %v1557 = vsel %vm441, %v1552, %v1556
      %v1559 = vshrl.u32 %v1470, 16
      %v1561 = vrot.slane %v1559, 4
      %v1562 = vshll.u32 %v1470, 16
      %v1564 = vrot.slane %v1562, 5
      %v1565 = vor.u32 %v1561, %v1564
      %v1566 = vrot.slane %v1565, 4
      %v1568 = vshll.u32 %v1471, 16
      %v1570 = vrot.slane %v1568, 5
      %v1571 = vsel %vm441, %v1566, %v1570
      %v1573 = vshrl.u32 %v1472, 16
      %v1575 = vrot.slane %v1573, 4
      %v1576 = vshll.u32 %v1472, 16
      %v1578 = vrot.slane %v1576, 5
      %v1579 = vor.u32 %v1575, %v1578
      %v1580 = vrot.slane %v1579, 4
      %v1582 = vshll.u32 %v1473, 16
      %v1584 = vrot.slane %v1582, 5
      %v1585 = vsel %vm441, %v1580, %v1584
      %s1586 = scalar_lea.vmem %s1, 512
      %v1587 = vld [vmem:[%s1586] sm:$0xf]
      %v1588 = vld [vmem:[%s1586 + $0x4] sm:$0xf]
      %v1589 = vld [vmem:[%s1586 + $0x8] sm:$0xf]
      %v1590 = vld [vmem:[%s1586 + $0xc] sm:$0xf]
      %v1591 = vld [vmem:[%s1586 + $0x10] sm:$0xf]
      %v1592 = vld [vmem:[%s1586 + $0x14] sm:$0xf]
      %v1593 = vld [vmem:[%s1586 + $0x18] sm:$0xf]
      %v1594 = vld [vmem:[%s1586 + $0x1c] sm:$0xf]
      %v1595 = vld [vmem:[%s1586 + $0x20] sm:$0xf]
      %v1596 = vld [vmem:[%s1586 + $0x24] sm:$0xf]
      %v1597 = vld [vmem:[%s1586 + $0x28] sm:$0xf]
      %v1598 = vld [vmem:[%s1586 + $0x2c] sm:$0xf]
      %v1599 = vld [vmem:[%s1586 + $0x30] sm:$0xf]
      %v1600 = vld [vmem:[%s1586 + $0x34] sm:$0xf]
      %v1601 = vld [vmem:[%s1586 + $0x38] sm:$0xf]
      %v1602 = vld [vmem:[%s1586 + $0x3c] sm:$0xf]
      %v1603 = vunpack.c.l.b16 %v1487
      %v1604 = vunpack.c.l.b16 %v1501
      %v1605 = vunpack.c.l.b16 %v1515
      %v1606 = vunpack.c.l.b16 %v1529
      %v1607 = vunpack.c.l.b16 %v1543
      %v1608 = vunpack.c.l.b16 %v1557
      %v1609 = vunpack.c.l.b16 %v1571
      %v1610 = vunpack.c.l.b16 %v1585
      %v1611 = vpack.c.b16 %v1604, %v1603
      %v1612 = vpack.c.b16 %v1606, %v1605
      %v1613 = vpack.c.b16 %v1608, %v1607
      %v1614 = vpack.c.b16 %v1610, %v1609
      %v1635 = vunpack.c.l.b16 %v1587
      %v1636 = vunpack.c.l.b16 %v1588
      %v1637 = vunpack.c.l.b16 %v1589
      %v1638 = vunpack.c.l.b16 %v1590
      %v1639 = vunpack.c.l.b16 %v1591
      %v1640 = vunpack.c.l.b16 %v1592
      %v1641 = vunpack.c.l.b16 %v1593
      %v1642 = vunpack.c.l.b16 %v1594
      %v1643 = vunpack.c.l.b16 %v1595
      %v1644 = vunpack.c.l.b16 %v1596
      %v1645 = vunpack.c.l.b16 %v1597
      %v1646 = vunpack.c.l.b16 %v1598
      %v1647 = vunpack.c.l.b16 %v1599
      %v1648 = vunpack.c.l.b16 %v1600
      %v1649 = vunpack.c.l.b16 %v1601
      %v1650 = vunpack.c.l.b16 %v1602
      %v1651 = vpack.c.b16 %v1636, %v1635
      %v1652 = vpack.c.b16 %v1638, %v1637
      %v1653 = vpack.c.b16 %v1640, %v1639
      %v1654 = vpack.c.b16 %v1642, %v1641
      %v1655 = vpack.c.b16 %v1644, %v1643
      %v1656 = vpack.c.b16 %v1646, %v1645
      %v1657 = vpack.c.b16 %v1648, %v1647
      %v1658 = vpack.c.b16 %v1650, %v1649
      %1667 = vmatpush.bf16.msra.mxu0 %v1658
      %1668 = vmatpush.bf16.msra.mxu0 %v1657
      %1669 = vmatpush.bf16.msra.mxu0 %v1656
      %1670 = vmatpush.bf16.msra.mxu0 %v1655
      %1671 = vmatpush.bf16.msra.mxu0 %v1654
      %1672 = vmatpush.bf16.msra.mxu0 %v1653
      %1673 = vmatpush.bf16.msra.mxu0 %v1652
      %1674 = vmatpush.bf16.msra.mxu0 %v1651
      %1675 = vmatmul.bf16.gmra.mxu0 %v1611
      %v1676 = vpop.f32.mrf.mxu0
      %v1677 = vadd.f32 0.0, %v1676
      %v1678 = vpop.f32.mrf.mxu0
      %v1679 = vadd.f32 0.0, %v1678
      %1680 = vmatmul.bf16.gmra.mxu0 %v1612
      %v1681 = vpop.f32.mrf.mxu0
      %v1682 = vadd.f32 0.0, %v1681
      %v1683 = vpop.f32.mrf.mxu0
      %v1684 = vadd.f32 0.0, %v1683
      %1685 = vmatmul.bf16.gmra.mxu0 %v1613
      %v1686 = vpop.f32.mrf.mxu0
      %v1687 = vadd.f32 0.0, %v1686
      %v1688 = vpop.f32.mrf.mxu0
      %v1689 = vadd.f32 0.0, %v1688
      %1690 = vmatmul.bf16.gmra.mxu0 %v1614
      %v1691 = vpop.f32.mrf.mxu0
      %v1692 = vadd.f32 0.0, %v1691
      %v1693 = vpop.f32.mrf.mxu0
      %v1694 = vadd.f32 0.0, %v1693
      %1695 = vdwg.mxu0
      %v1696 = vadd.f32 %v1450, %v1677
      %v1697 = vadd.f32 %v1451, %v1679
      %v1698 = vadd.f32 %v1452, %v1682
      %v1699 = vadd.f32 %v1453, %v1684
      %v1700 = vadd.f32 %v1454, %v1687
      %v1701 = vadd.f32 %v1455, %v1689
      %v1702 = vadd.f32 %v1456, %v1692
      %v1703 = vadd.f32 %v1457, %v1694
      %v1704 = vld [vmem:[%s2] sm:$0x1]
      %v1706 = vperm.slane %v1704, 0
      %v1708 = vadd.f32 %v1696, %v1706
      %v1709 = vadd.f32 %v1697, %v1706
      %v1710 = vadd.f32 %v1698, %v1706
      %v1711 = vadd.f32 %v1699, %v1706
      %v1712 = vadd.f32 %v1700, %v1706
      %v1713 = vadd.f32 %v1701, %v1706
      %v1714 = vadd.f32 %v1702, %v1706
      %v1715 = vadd.f32 %v1703, %v1706
      %v1716 = vmax.f32 %v1708, 0.0
      %v1717 = vmax.f32 %v1709, 0.0
      %v1718 = vmax.f32 %v1710, 0.0
      %v1719 = vmax.f32 %v1711, 0.0
      %v1720 = vmax.f32 %v1712, 0.0
      %v1721 = vmax.f32 %v1713, 0.0
      %v1722 = vmax.f32 %v1714, 0.0
      %v1723 = vmax.f32 %v1715, 0.0
      %v1724 = vpack.c.bf16 %v1716, %v1716
      %v1725 = vpack.c.bf16 %v1717, %v1717
      %v1726 = vpack.c.bf16 %v1718, %v1718
      %v1727 = vpack.c.bf16 %v1719, %v1719
      %v1728 = vpack.c.bf16 %v1720, %v1720
      %v1729 = vpack.c.bf16 %v1721, %v1721
      %v1730 = vpack.c.bf16 %v1722, %v1722
      %v1731 = vpack.c.bf16 %v1723, %v1723
      %1732 = vst [vmem:[%s170] sm:$0xf] %v1724
      %1733 = vst [vmem:[%s170 + $0x4] sm:$0xf] %v1725
      %1734 = vst [vmem:[%s170 + $0x8] sm:$0xf] %v1726
      %1735 = vst [vmem:[%s170 + $0xc] sm:$0xf] %v1727
      %1736 = vst [vmem:[%s170 + $0x10] sm:$0xf] %v1728
      %1737 = vst [vmem:[%s170 + $0x14] sm:$0xf] %v1729
      %1738 = vst [vmem:[%s170 + $0x18] sm:$0xf] %v1730
      %1739 = vst [vmem:[%s170 + $0x1c] sm:$0xf] %v1731
      %p1740 = scmp.lt.s32.totalorder %s14, 1
      %s1741 = scalar_select %p1740, %s14, 1
      %s1742 = smul.addr %s1741, 8
      %s1743 = smul.addr %s1742, 4
      %s1744 = scalar_lea.vmem %s3, %s1743
      // Predicated region
      $region33: #{basic_block_forward.2} parent=31 // pred_check
        %p1745 = pneg %p100
      $region34: #{basic_block_forward.2} parent=31 // pred_check_branch
        %1747 = sbr.rel (%p1745) target = $region36
      $region35: #{basic_block_forward.2} parent=31 // pred_region
        _
      $region36: #{basic_block_forward.2} parent=31 // pred_fallthru
        _
    $region32: #{basic_block_forward.2} parent=5 // pred_fallthru
      _
    %p1748 = scmp.le.s32.totalorder 2, %s9
    // Predicated region
    $region37: #{basic_block_forward.2} parent=5 // pred_check
      %p1749 = pneg %p1748
    $region38: #{basic_block_forward.2} parent=5 // pred_check_branch
      %1751 = sbr.rel (%p1749) target = $region40
    $region39: #{basic_block_forward.2} parent=5 // pred_region
      %s1752 = ssub.s32 %s9, 2
      // Predicated region
      $region41: #{basic_block_forward.2} parent=39 // pred_check
        %p1753 = pneg %p106
      $region42: #{basic_block_forward.2} parent=39 // pred_check_branch
        %1755 = sbr.rel (%p1753) target = $region44
      $region43: #{basic_block_forward.2} parent=39 // pred_region
        %p1756 = scmp.lt.s32.totalorder %s15, 1
        %s1757 = scalar_select %p1756, %s15, 1
        %s1758 = smul.addr %s1757, 8
        %s1759 = smul.addr %s1758, 4
        %s1760 = scalar_lea.vmem %s3, %s1759
      $region44: #{basic_block_forward.2} parent=39 // pred_fallthru
        _
    $region40: #{basic_block_forward.2} parent=5 // pred_fallthru
      _
  $region6: #{basic_block_forward.2} parent=0 // loop_footer
    %s13 = sadd.s32 1, %s9
  $region7: #{basic_block_forward.2} parent=0 // loop_footer_branch
    %8 = sbr.rel target = $region3
  $region8: #{basic_block_forward.2} parent=0 // loop_exit
    _

// kernel: basic_block_forward.3
$region0: #{basic_block_forward.3}
  #allocation0 [shape = 'u32[]', space=smem, size = 0x4, offset = 0x4, fixed_abs, tag = 'smem constant byte address 0x4 - core index']
  #allocation1 [shape = 'u32[72,128]{1,0:T(1,128)}', space=vmem, size = 0x9000, scoped, tag = 'internal scratch']
  %s0 = inlined_call_operand.vmem [shape: bf16[2,1,10,10,128], index: 0, kind: input, shape index: {}]
  %s1 = inlined_call_operand.vmem [shape: bf16[9,128,128], index: 1, kind: input, shape index: {}]
  %s2 = inlined_call_operand.vmem [shape: f32[1,128], index: 2, kind: input, shape index: {}]
  %s3 = inlined_call_operand.vmem [shape: bf16[2,8,8,128], index: 3, kind: input, shape index: {}]
  %s4 = inlined_call_operand.vmem [shape: bf16[128,128], index: 4, kind: input, shape index: {}]
  %s5 = inlined_call_operand.vmem [shape: f32[1,128], index: 5, kind: input, shape index: {}]
  %s6 = inlined_call_operand.vmem [shape: f32[2,64,128], index: 6, kind: output, shape index: {}]
  %s7 = sld [smem:[#allocation0]]
  $region57: #{basic_block_forward.3} parent=0
    _
  %s9 = ssub.s32 1, %s7
  %s10 = scalar_select 0, %s9, %s7
  loop: start=0, step=1, limit=4
  $region2: #{basic_block_forward.3} parent=0 // loop_pre_header
    _
  $region3: #{basic_block_forward.3} parent=0 // loop_header
    %s12 = sphi 0, %s16
    %p13 = scmp.ge.s32.totalorder %s12, 4
    %s22 = sphi 0, %s24
    %s25 = sphi 0, %s22
    %s26 = sphi 0, %s25
    %s42 = sphi 0, %s26
    %s46 = sphi 0, %s46
    %s48 = sphi 0, %s46
    %s49 = sphi 0, %s48
    %s63 = sphi 0, %s49
    %s67 = sphi 0, %s67
    %s69 = sphi 0, %s67
    %s70 = sphi 0, %s69
    %s84 = sphi 0, %s70
    %s90 = sphi 0, %s92
    %s93 = sphi 0, %s90
    %s94 = sphi 0, %s93
    %s110 = sphi 0, %s94
    %s114 = sphi 0, %s114
    %s116 = sphi 0, %s114
    %s117 = sphi 0, %s116
    %s131 = sphi 0, %s117
    %s135 = sphi 0, %s135
    %s137 = sphi 0, %s135
    %s138 = sphi 0, %s137
    %s152 = sphi 0, %s138
    %s158 = sphi 0, %s160
    %s161 = sphi 0, %s158
    %s162 = sphi 0, %s161
    %s178 = sphi 0, %s162
  $region4: #{basic_block_forward.3} parent=0 // loop_header_branch
    %15 = sbr.rel (%p13) target = $region8
  $region5: #{basic_block_forward.3} parent=0 // loop_body
    %s17 = ssub.s32 %s12, 1
    %s18 = ssub.s32 %s12, 2
    %s19 = sadd.s32 %s12, 1
    %s20 = ssub.s32 %s12, %s19
    %p21 = scmp.eq.s32.totalorder %s20, 0
    %s23 = sadd.s32 %s22, 1
    %s24 = scalar_select %p21, %s22, %s23
    %p27 = pneg %p21
    %p28 = scmp.eq.s32.totalorder %s12, 1
    %p29 = por %p27, %p28
    %p30 = scmp.ne.s32.totalorder %s22, %s25
    %p31 = scmp.eq.s32.totalorder %s12, 0
    %p32 = por %p30, %p31
    %p33 = scmp.ne.s32.totalorder %s22, %s25
    %p34 = scmp.eq.s32.totalorder %s17, 1
    %p35 = por %p33, %p34
    %p36 = scmp.ne.s32.totalorder %s25, %s26
    %p37 = scmp.eq.s32.totalorder %s17, 0
    %p38 = por %p36, %p37
    %p39 = scmp.ne.s32.totalorder %s25, %s26
    %p40 = scmp.eq.s32.totalorder %s18, 1
    %p41 = por %p39, %p40
    %p43 = scmp.ne.s32.totalorder %s26, %s42
    %p44 = scmp.eq.s32.totalorder %s18, 0
    %p45 = por %p43, %p44
    %s47 = sadd.s32 %s46, 1
    %p50 = scmp.eq.s32.totalorder %s12, 1
    %p51 = scmp.ne.s32.totalorder %s46, %s48
    %p52 = scmp.eq.s32.totalorder %s12, 0
    %p53 = por %p51, %p52
    %p54 = scmp.ne.s32.totalorder %s46, %s48
    %p55 = scmp.eq.s32.totalorder %s17, 1
    %p56 = por %p54, %p55
    %p57 = scmp.ne.s32.totalorder %s48, %s49
    %p58 = scmp.eq.s32.totalorder %s17, 0
    %p59 = por %p57, %p58
    %p60 = scmp.ne.s32.totalorder %s48, %s49
    %p61 = scmp.eq.s32.totalorder %s18, 1
    %p62 = por %p60, %p61
    %p64 = scmp.ne.s32.totalorder %s49, %s63
    %p65 = scmp.eq.s32.totalorder %s18, 0
    %p66 = por %p64, %p65
    %s68 = sadd.s32 %s67, 1
    %p71 = scmp.eq.s32.totalorder %s12, 1
    %p72 = scmp.ne.s32.totalorder %s67, %s69
    %p73 = scmp.eq.s32.totalorder %s12, 0
    %p74 = por %p72, %p73
    %p75 = scmp.ne.s32.totalorder %s67, %s69
    %p76 = scmp.eq.s32.totalorder %s17, 1
    %p77 = por %p75, %p76
    %p78 = scmp.ne.s32.totalorder %s69, %s70
    %p79 = scmp.eq.s32.totalorder %s17, 0
    %p80 = por %p78, %p79
    %p81 = scmp.ne.s32.totalorder %s69, %s70
    %p82 = scmp.eq.s32.totalorder %s18, 1
    %p83 = por %p81, %p82
    %p85 = scmp.ne.s32.totalorder %s70, %s84
    %p86 = scmp.eq.s32.totalorder %s18, 0
    %p87 = por %p85, %p86
    %s88 = ssub.s32 %s12, %s19
    %p89 = scmp.eq.s32.totalorder %s88, 0
    %s91 = sadd.s32 %s90, 1
    %s92 = scalar_select %p89, %s90, %s91
    %p95 = pneg %p89
    %p96 = scmp.eq.s32.totalorder %s12, 1
    %p97 = por %p95, %p96
    %p98 = scmp.ne.s32.totalorder %s90, %s93
    %p99 = scmp.eq.s32.totalorder %s12, 0
    %p100 = por %p98, %p99
    %p101 = scmp.ne.s32.totalorder %s90, %s93
    %p102 = scmp.eq.s32.totalorder %s17, 1
    %p103 = por %p101, %p102
    %p104 = scmp.ne.s32.totalorder %s93, %s94
    %p105 = scmp.eq.s32.totalorder %s17, 0
    %p106 = por %p104, %p105
    %p107 = scmp.ne.s32.totalorder %s93, %s94
    %p108 = scmp.eq.s32.totalorder %s18, 1
    %p109 = por %p107, %p108
    %p111 = scmp.ne.s32.totalorder %s94, %s110
    %p112 = scmp.eq.s32.totalorder %s18, 0
    %p113 = por %p111, %p112
    %s115 = sadd.s32 %s114, 1
    %p118 = scmp.eq.s32.totalorder %s12, 1
    %p119 = scmp.ne.s32.totalorder %s114, %s116
    %p120 = scmp.eq.s32.totalorder %s12, 0
    %p121 = por %p119, %p120
    %p122 = scmp.ne.s32.totalorder %s114, %s116
    %p123 = scmp.eq.s32.totalorder %s17, 1
    %p124 = por %p122, %p123
    %p125 = scmp.ne.s32.totalorder %s116, %s117
    %p126 = scmp.eq.s32.totalorder %s17, 0
    %p127 = por %p125, %p126
    %p128 = scmp.ne.s32.totalorder %s116, %s117
    %p129 = scmp.eq.s32.totalorder %s18, 1
    %p130 = por %p128, %p129
    %p132 = scmp.ne.s32.totalorder %s117, %s131
    %p133 = scmp.eq.s32.totalorder %s18, 0
    %p134 = por %p132, %p133
    %s136 = sadd.s32 %s135, 1
    %p139 = scmp.eq.s32.totalorder %s12, 1
    %p140 = scmp.ne.s32.totalorder %s135, %s137
    %p141 = scmp.eq.s32.totalorder %s12, 0
    %p142 = por %p140, %p141
    %p143 = scmp.ne.s32.totalorder %s135, %s137
    %p144 = scmp.eq.s32.totalorder %s17, 1
    %p145 = por %p143, %p144
    %p146 = scmp.ne.s32.totalorder %s137, %s138
    %p147 = scmp.eq.s32.totalorder %s17, 0
    %p148 = por %p146, %p147
    %p149 = scmp.ne.s32.totalorder %s137, %s138
    %p150 = scmp.eq.s32.totalorder %s18, 1
    %p151 = por %p149, %p150
    %p153 = scmp.ne.s32.totalorder %s138, %s152
    %p154 = scmp.eq.s32.totalorder %s18, 0
    %p155 = por %p153, %p154
    %s156 = ssub.s32 %s12, %s19
    %p157 = scmp.eq.s32.totalorder %s156, 0
    %s159 = sadd.s32 %s158, 1
    %s160 = scalar_select %p157, %s158, %s159
    %p163 = pneg %p157
    %p164 = scmp.eq.s32.totalorder %s12, 1
    %p165 = por %p163, %p164
    %p166 = scmp.ne.s32.totalorder %s158, %s161
    %p167 = scmp.eq.s32.totalorder %s12, 0
    %p168 = por %p166, %p167
    %p169 = scmp.ne.s32.totalorder %s158, %s161
    %p170 = scmp.eq.s32.totalorder %s17, 1
    %p171 = por %p169, %p170
    %p172 = scmp.ne.s32.totalorder %s161, %s162
    %p173 = scmp.eq.s32.totalorder %s17, 0
    %p174 = por %p172, %p173
    %p175 = scmp.ne.s32.totalorder %s161, %s162
    %p176 = scmp.eq.s32.totalorder %s18, 1
    %p177 = por %p175, %p176
    %p179 = scmp.ne.s32.totalorder %s162, %s178
    %p180 = scmp.eq.s32.totalorder %s18, 0
    %p181 = por %p179, %p180
    %p182 = scmp.le.s32.totalorder 1, %s12
    %p183 = scmp.lt.s32.totalorder %s12, 3
    %p184 = pnand %p182, %p183
    %p185 = pneg %p184
    // Predicated region
    $region9: #{basic_block_forward.3} parent=5 // pred_check
      _
    $region10: #{basic_block_forward.3} parent=5 // pred_check_branch
      %187 = sbr.rel (%p184) target = $region12
    $region11: #{basic_block_forward.3} parent=5 // pred_region
      %s188 = ssub.s32 %s12, 1
      // Predicated region
      $region13: #{basic_block_forward.3} parent=11 // pred_check
        %p189 = pneg %p59
      $region14: #{basic_block_forward.3} parent=11 // pred_check_branch
        %191 = sbr.rel (%p189) target = $region16
      $region15: #{basic_block_forward.3} parent=11 // pred_region
        _
      $region16: #{basic_block_forward.3} parent=11 // pred_fallthru
        _
      // Predicated region
      $region17: #{basic_block_forward.3} parent=11 // pred_check
        %p192 = pneg %p80
      $region18: #{basic_block_forward.3} parent=11 // pred_check_branch
        %194 = sbr.rel (%p192) target = $region20
      $region19: #{basic_block_forward.3} parent=11 // pred_region
        _
      $region20: #{basic_block_forward.3} parent=11 // pred_fallthru
        _
      // Predicated region
      $region21: #{basic_block_forward.3} parent=11 // pred_check
        %p195 = pneg %p127
      $region22: #{basic_block_forward.3} parent=11 // pred_check_branch
        %197 = sbr.rel (%p195) target = $region24
      $region23: #{basic_block_forward.3} parent=11 // pred_region
        _
      $region24: #{basic_block_forward.3} parent=11 // pred_fallthru
        _
      // Predicated region
      $region25: #{basic_block_forward.3} parent=11 // pred_check
        %p198 = pneg %p148
      $region26: #{basic_block_forward.3} parent=11 // pred_check_branch
        %200 = sbr.rel (%p198) target = $region28
      $region27: #{basic_block_forward.3} parent=11 // pred_region
        _
      $region28: #{basic_block_forward.3} parent=11 // pred_fallthru
        _
    $region12: #{basic_block_forward.3} parent=5 // pred_fallthru
      _
    %p201 = scmp.lt.s32.totalorder %s12, 2
    // Predicated region
    $region29: #{basic_block_forward.3} parent=5 // pred_check
      %p202 = pneg %p201
    $region30: #{basic_block_forward.3} parent=5 // pred_check_branch
      %204 = sbr.rel (%p202) target = $region32
    $region31: #{basic_block_forward.3} parent=5 // pred_region
      // Predicated region
      $region33: #{basic_block_forward.3} parent=31 // pred_check
        %p205 = pneg %p32
      $region34: #{basic_block_forward.3} parent=31 // pred_check_branch
        %207 = sbr.rel (%p205) target = $region36
      $region35: #{basic_block_forward.3} parent=31 // pred_region
        %p208 = scmp.lt.s32.totalorder %s12, 1
        %s209 = scalar_select %p208, %s12, 1
        %s210 = smul.addr %s209, 20
        %s211 = smul.addr %s210, 4
        %s212 = scalar_lea.vmem %s0, %s211
      $region36: #{basic_block_forward.3} parent=31 // pred_fallthru
        _
      // Predicated region
      $region37: #{basic_block_forward.3} parent=31 // pred_check
        %p213 = pneg %p100
      $region38: #{basic_block_forward.3} parent=31 // pred_check_branch
        %215 = sbr.rel (%p213) target = $region40
      $region39: #{basic_block_forward.3} parent=31 // pred_region
        %p216 = scmp.lt.s32.totalorder %s12, 1
        %s217 = scalar_select %p216, %s12, 1
        %s218 = smul.addr %s217, 8
        %s219 = smul.addr %s218, 4
        %s220 = scalar_lea.vmem %s3, %s219
      $region40: #{basic_block_forward.3} parent=31 // pred_fallthru
        _
    $region32: #{basic_block_forward.3} parent=5 // pred_fallthru
      _
    %p221 = scmp.le.s32.totalorder 1, %s12
    %p222 = scmp.lt.s32.totalorder %s12, 3
    %p223 = pnand %p221, %p222
    %p224 = pneg %p223
    // Predicated region
    $region41: #{basic_block_forward.3} parent=5 // pred_check
      _
    $region42: #{basic_block_forward.3} parent=5 // pred_check_branch
      %226 = sbr.rel (%p223) target = $region44
    $region43: #{basic_block_forward.3} parent=5 // pred_region
      %s227 = ssub.s32 %s12, 1
      %p228 = scmp.lt.s32.totalorder %s17, 1
      %s229 = scalar_select %p228, %s17, 1
      %s230 = smul.addr %s229, 20
      %s231 = smul.addr %s230, 4
      %s232 = scalar_lea.vmem %s0, %s231
      %p233 = pneg %p38
      %p234 = pneg %p35
      %p235 = pneg %p59
      %p236 = pneg %p56
      %p237 = pneg %p80
      %p238 = pneg %p77
      %p239 = scmp.lt.s32.totalorder %s17, 1
      %s240 = scalar_select %p239, %s17, 1
      %s241 = smul.addr %s240, 8
      %s242 = smul.addr %s241, 4
      %s243 = scalar_lea.vmem %s3, %s242
      %p244 = pneg %p106
      %p245 = pneg %p103
      %p246 = pneg %p127
      %p247 = pneg %p124
      %p248 = pneg %p148
      %p249 = pneg %p145
      %p250 = pneg %p174
      %p251 = pneg %p171
      %p252 = scmp.lt.s32.totalorder %s17, 1
      %s253 = scalar_select %p252, %s17, 1
      %s254 = smul.addr %s253, 8
      %s255 = smul.addr %s254, 8
      %s256 = scalar_lea.vmem %s6, %s255
      %p257 = scmp.lt.s32.totalorder %s17, 1
      %s258 = scalar_select %p257, %s17, 1
      %s259 = smul.addr %s258, 20
      %s260 = smul.addr %s259, 4
      %s261 = scalar_lea.vmem %s0, %s260
      %p262 = scmp.lt.s32.totalorder %s17, 1
      %s263 = scalar_select %p262, %s17, 1
      %s264 = smul.addr %s263, 8
      %s265 = smul.addr %s264, 4
      %s266 = scalar_lea.vmem %s3, %s265
      %p267 = scmp.lt.s32.totalorder %s17, 1
      %s268 = scalar_select %p267, %s17, 1
      %s269 = smul.addr %s268, 8
      %s270 = smul.addr %s269, 8
      %s271 = scalar_lea.vmem %s6, %s270
      %v272 = vld [vmem:[%s261] sm:$0xf]
      %v273 = vld [vmem:[%s261 + $0x8] sm:$0xf]
      %v274 = vld [vmem:[%s261 + $0x10] sm:$0xf]
      %v275 = vld [vmem:[%s261 + $0x18] sm:$0xf]
      %v276 = vld [vmem:[%s261 + $0x20] sm:$0xf]
      %v277 = vld [vmem:[%s261 + $0x28] sm:$0xf]
      %v278 = vld [vmem:[%s261 + $0x30] sm:$0xf]
      %v279 = vld [vmem:[%s261 + $0x38] sm:$0xf]
      %v280 = vld [vmem:[%s1] sm:$0xf]
      %v281 = vld [vmem:[%s1 + $0x4] sm:$0xf]
      %v282 = vld [vmem:[%s1 + $0x8] sm:$0xf]
      %v283 = vld [vmem:[%s1 + $0xc] sm:$0xf]
      %v284 = vld [vmem:[%s1 + $0x10] sm:$0xf]
      %v285 = vld [vmem:[%s1 + $0x14] sm:$0xf]
      %v286 = vld [vmem:[%s1 + $0x18] sm:$0xf]
      %v287 = vld [vmem:[%s1 + $0x1c] sm:$0xf]
      %v288 = vld [vmem:[%s1 + $0x20] sm:$0xf]
      %v289 = vld [vmem:[%s1 + $0x24] sm:$0xf]
      %v290 = vld [vmem:[%s1 + $0x28] sm:$0xf]
      %v291 = vld [vmem:[%s1 + $0x2c] sm:$0xf]
      %v292 = vld [vmem:[%s1 + $0x30] sm:$0xf]
      %v293 = vld [vmem:[%s1 + $0x34] sm:$0xf]
      %v294 = vld [vmem:[%s1 + $0x38] sm:$0xf]
      %v295 = vld [vmem:[%s1 + $0x3c] sm:$0xf]
      %v296 = vld [vmem:[%s261 + $0x4] sm:$0x1]
      %v297 = vld [vmem:[%s261 + $0xc] sm:$0x1]
      %v298 = vld [vmem:[%s261 + $0x14] sm:$0x1]
      %v299 = vld [vmem:[%s261 + $0x1c] sm:$0x1]
      %v300 = vld [vmem:[%s261 + $0x24] sm:$0x1]
      %v301 = vld [vmem:[%s261 + $0x2c] sm:$0x1]
      %v302 = vld [vmem:[%s261 + $0x34] sm:$0x1]
      %v303 = vld [vmem:[%s261 + $0x3c] sm:$0x1]
      %vm304 = vsmask.f32 3328
      %vm305 = vsmask.f32 7440
      %vm306 = vmor %vm304, %vm305
      %v308 = vshrl.u32 %v272, 16
      %v310 = vrot.slane %v308, 4
      %v311 = vshll.u32 %v272, 16
      %v313 = vrot.slane %v311, 5
      %v314 = vor.u32 %v310, %v313
      %v315 = vrot.slane %v314, 4
      %v317 = vshll.u32 %v296, 16
      %v319 = vrot.slane %v317, 5
      %v320 = vsel %vm306, %v315, %v319
      %v322 = vshrl.u32 %v273, 16
      %v324 = vrot.slane %v322, 4
      %v325 = vshll.u32 %v273, 16
      %v327 = vrot.slane %v325, 5
      %v328 = vor.u32 %v324, %v327
      %v329 = vrot.slane %v328, 4
      %v331 = vshll.u32 %v297, 16
      %v333 = vrot.slane %v331, 5
      %v334 = vsel %vm306, %v329, %v333
      %v336 = vshrl.u32 %v274, 16
      %v338 = vrot.slane %v336, 4
      %v339 = vshll.u32 %v274, 16
      %v341 = vrot.slane %v339, 5
      %v342 = vor.u32 %v338, %v341
      %v343 = vrot.slane %v342, 4
      %v345 = vshll.u32 %v298, 16
      %v347 = vrot.slane %v345, 5
      %v348 = vsel %vm306, %v343, %v347
      %v350 = vshrl.u32 %v275, 16
      %v352 = vrot.slane %v350, 4
      %v353 = vshll.u32 %v275, 16
      %v355 = vrot.slane %v353, 5
      %v356 = vor.u32 %v352, %v355
      %v357 = vrot.slane %v356, 4
      %v359 = vshll.u32 %v299, 16
      %v361 = vrot.slane %v359, 5
      %v362 = vsel %vm306, %v357, %v361
      %v364 = vshrl.u32 %v276, 16
      %v366 = vrot.slane %v364, 4
      %v367 = vshll.u32 %v276, 16
      %v369 = vrot.slane %v367, 5
      %v370 = vor.u32 %v366, %v369
      %v371 = vrot.slane %v370, 4
      %v373 = vshll.u32 %v300, 16
      %v375 = vrot.slane %v373, 5
      %v376 = vsel %vm306, %v371, %v375
      %v378 = vshrl.u32 %v277, 16
      %v380 = vrot.slane %v378, 4
      %v381 = vshll.u32 %v277, 16
      %v383 = vrot.slane %v381, 5
      %v384 = vor.u32 %v380, %v383
      %v385 = vrot.slane %v384, 4
      %v387 = vshll.u32 %v301, 16
      %v389 = vrot.slane %v387, 5
      %v390 = vsel %vm306, %v385, %v389
      %v392 = vshrl.u32 %v278, 16
      %v394 = vrot.slane %v392, 4
      %v395 = vshll.u32 %v278, 16
      %v397 = vrot.slane %v395, 5
      %v398 = vor.u32 %v394, %v397
      %v399 = vrot.slane %v398, 4
      %v401 = vshll.u32 %v302, 16
      %v403 = vrot.slane %v401, 5
      %v404 = vsel %vm306, %v399, %v403
      %v406 = vshrl.u32 %v279, 16
      %v408 = vrot.slane %v406, 4
      %v409 = vshll.u32 %v279, 16
      %v411 = vrot.slane %v409, 5
      %v412 = vor.u32 %v408, %v411
      %v413 = vrot.slane %v412, 4
      %v415 = vshll.u32 %v303, 16
      %v417 = vrot.slane %v415, 5
      %v418 = vsel %vm306, %v413, %v417
      %s419 = scalar_lea.vmem %s1, 64
      %v420 = vld [vmem:[%s419] sm:$0xf]
      %v421 = vld [vmem:[%s419 + $0x4] sm:$0xf]
      %v422 = vld [vmem:[%s419 + $0x8] sm:$0xf]
      %v423 = vld [vmem:[%s419 + $0xc] sm:$0xf]
      %v424 = vld [vmem:[%s419 + $0x10] sm:$0xf]
      %v425 = vld [vmem:[%s419 + $0x14] sm:$0xf]
      %v426 = vld [vmem:[%s419 + $0x18] sm:$0xf]
      %v427 = vld [vmem:[%s419 + $0x1c] sm:$0xf]
      %v428 = vld [vmem:[%s419 + $0x20] sm:$0xf]
      %v429 = vld [vmem:[%s419 + $0x24] sm:$0xf]
      %v430 = vld [vmem:[%s419 + $0x28] sm:$0xf]
      %v431 = vld [vmem:[%s419 + $0x2c] sm:$0xf]
      %v432 = vld [vmem:[%s419 + $0x30] sm:$0xf]
      %v433 = vld [vmem:[%s419 + $0x34] sm:$0xf]
      %v434 = vld [vmem:[%s419 + $0x38] sm:$0xf]
      %v435 = vld [vmem:[%s419 + $0x3c] sm:$0xf]
      %v436 = vunpack.c.l.b16 %v320
      %v437 = vunpack.c.l.b16 %v334
      %v438 = vunpack.c.l.b16 %v348
      %v439 = vunpack.c.l.b16 %v362
      %v440 = vunpack.c.l.b16 %v376
      %v441 = vunpack.c.l.b16 %v390
      %v442 = vunpack.c.l.b16 %v404
      %v443 = vunpack.c.l.b16 %v418
      %v444 = vpack.c.b16 %v437, %v436
      %v445 = vpack.c.b16 %v439, %v438
      %v446 = vpack.c.b16 %v441, %v440
      %v447 = vpack.c.b16 %v443, %v442
      %v468 = vunpack.c.l.b16 %v420
      %v469 = vunpack.c.l.b16 %v421
      %v470 = vunpack.c.l.b16 %v422
      %v471 = vunpack.c.l.b16 %v423
      %v472 = vunpack.c.l.b16 %v424
      %v473 = vunpack.c.l.b16 %v425
      %v474 = vunpack.c.l.b16 %v426
      %v475 = vunpack.c.l.b16 %v427
      %v476 = vunpack.c.l.b16 %v428
      %v477 = vunpack.c.l.b16 %v429
      %v478 = vunpack.c.l.b16 %v430
      %v479 = vunpack.c.l.b16 %v431
      %v480 = vunpack.c.l.b16 %v432
      %v481 = vunpack.c.l.b16 %v433
      %v482 = vunpack.c.l.b16 %v434
      %v483 = vunpack.c.l.b16 %v435
      %v484 = vpack.c.b16 %v469, %v468
      %v485 = vpack.c.b16 %v471, %v470
      %v486 = vpack.c.b16 %v473, %v472
      %v487 = vpack.c.b16 %v475, %v474
      %v488 = vpack.c.b16 %v477, %v476
      %v489 = vpack.c.b16 %v479, %v478
      %v490 = vpack.c.b16 %v481, %v480
      %v491 = vpack.c.b16 %v483, %v482
      %500 = vmatpush.bf16.msra.mxu0 %v491
      %501 = vmatpush.bf16.msra.mxu0 %v490
      %502 = vmatpush.bf16.msra.mxu0 %v489
      %503 = vmatpush.bf16.msra.mxu0 %v488
      %504 = vmatpush.bf16.msra.mxu0 %v487
      %505 = vmatpush.bf16.msra.mxu0 %v486
      %506 = vmatpush.bf16.msra.mxu0 %v485
      %507 = vmatpush.bf16.msra.mxu0 %v484
      %508 = vmatmul.bf16.gmra.mxu0 %v444
      %v509 = vpop.f32.mrf.mxu0
      %v510 = vadd.f32 0.0, %v509
      %v511 = vpop.f32.mrf.mxu0
      %v512 = vadd.f32 0.0, %v511
      %513 = vmatmul.bf16.gmra.mxu0 %v445
      %v514 = vpop.f32.mrf.mxu0
      %v515 = vadd.f32 0.0, %v514
      %v516 = vpop.f32.mrf.mxu0
      %v517 = vadd.f32 0.0, %v516
      %518 = vmatmul.bf16.gmra.mxu0 %v446
      %v519 = vpop.f32.mrf.mxu0
      %v520 = vadd.f32 0.0, %v519
      %v521 = vpop.f32.mrf.mxu0
      %v522 = vadd.f32 0.0, %v521
      %523 = vmatmul.bf16.gmra.mxu0 %v447
      %v524 = vpop.f32.mrf.mxu0
      %v525 = vadd.f32 0.0, %v524
      %v526 = vpop.f32.mrf.mxu0
      %v527 = vadd.f32 0.0, %v526
      %528 = vdwg.mxu0
      %v537 = vunpack.c.l.b16 %v272
      %v538 = vunpack.c.l.b16 %v273
      %v539 = vunpack.c.l.b16 %v274
      %v540 = vunpack.c.l.b16 %v275
      %v541 = vunpack.c.l.b16 %v276
      %v542 = vunpack.c.l.b16 %v277
      %v543 = vunpack.c.l.b16 %v278
      %v544 = vunpack.c.l.b16 %v279
      %v545 = vpack.c.b16 %v538, %v537
      %v546 = vpack.c.b16 %v540, %v539
      %v547 = vpack.c.b16 %v542, %v541
      %v548 = vpack.c.b16 %v544, %v543
      %v569 = vunpack.c.l.b16 %v280
      %v570 = vunpack.c.l.b16 %v281
      %v571 = vunpack.c.l.b16 %v282
      %v572 = vunpack.c.l.b16 %v283
      %v573 = vunpack.c.l.b16 %v284
      %v574 = vunpack.c.l.b16 %v285
      %v575 = vunpack.c.l.b16 %v286
      %v576 = vunpack.c.l.b16 %v287
      %v577 = vunpack.c.l.b16 %v288
      %v578 = vunpack.c.l.b16 %v289
      %v579 = vunpack.c.l.b16 %v290
      %v580 = vunpack.c.l.b16 %v291
      %v581 = vunpack.c.l.b16 %v292
      %v582 = vunpack.c.l.b16 %v293
      %v583 = vunpack.c.l.b16 %v294
      %v584 = vunpack.c.l.b16 %v295
      %v585 = vpack.c.b16 %v570, %v569
      %v586 = vpack.c.b16 %v572, %v571
      %v587 = vpack.c.b16 %v574, %v573
      %v588 = vpack.c.b16 %v576, %v575
      %v589 = vpack.c.b16 %v578, %v577
      %v590 = vpack.c.b16 %v580, %v579
      %v591 = vpack.c.b16 %v582, %v581
      %v592 = vpack.c.b16 %v584, %v583
      %601 = vmatpush.bf16.msra.mxu0 %v592
      %602 = vmatpush.bf16.msra.mxu0 %v591
      %603 = vmatpush.bf16.msra.mxu0 %v590
      %604 = vmatpush.bf16.msra.mxu0 %v589
      %605 = vmatpush.bf16.msra.mxu0 %v588
      %606 = vmatpush.bf16.msra.mxu0 %v587
      %607 = vmatpush.bf16.msra.mxu0 %v586
      %608 = vmatpush.bf16.msra.mxu0 %v585
      %609 = vmatmul.bf16.gmra.mxu0 %v545
      %v610 = vpop.f32.mrf.mxu0
      %v611 = vadd.f32 %v510, %v610
      %v612 = vpop.f32.mrf.mxu0
      %v613 = vadd.f32 %v512, %v612
      %614 = vmatmul.bf16.gmra.mxu0 %v546
      %v615 = vpop.f32.mrf.mxu0
      %v616 = vadd.f32 %v515, %v615
      %v617 = vpop.f32.mrf.mxu0
      %v618 = vadd.f32 %v517, %v617
      %619 = vmatmul.bf16.gmra.mxu0 %v547
      %v620 = vpop.f32.mrf.mxu0
      %v621 = vadd.f32 %v520, %v620
      %v622 = vpop.f32.mrf.mxu0
      %v623 = vadd.f32 %v522, %v622
      %624 = vmatmul.bf16.gmra.mxu0 %v548
      %v625 = vpop.f32.mrf.mxu0
      %v626 = vadd.f32 %v525, %v625
      %v627 = vpop.f32.mrf.mxu0
      %v628 = vadd.f32 %v527, %v627
      %629 = vdwg.mxu0
      %v630 = vld [vmem:[%s261] sm:$0xe]
      %v631 = vld [vmem:[%s261 + $0x8] sm:$0xe]
      %v632 = vld [vmem:[%s261 + $0x10] sm:$0xe]
      %v633 = vld [vmem:[%s261 + $0x18] sm:$0xe]
      %v634 = vld [vmem:[%s261 + $0x20] sm:$0xe]
      %v635 = vld [vmem:[%s261 + $0x28] sm:$0xe]
      %v636 = vld [vmem:[%s261 + $0x30] sm:$0xe]
      %v637 = vld [vmem:[%s261 + $0x38] sm:$0xe]
      %vm654 = vcmask 1042432
      %vm655 = vcmask 1046532
      %vm656 = vmor %vm654, %vm655
      %v657 = vrot.slane %v630, 5
      %v658 = vrot.slane %v657, 4
      %v659 = vrot.slane %v296, 5
      %v660 = vsel %vm656, %v658, %v659
      %v661 = vrot.slane %v631, 5
      %v662 = vrot.slane %v661, 4
      %v663 = vrot.slane %v297, 5
      %v664 = vsel %vm656, %v662, %v663
      %v665 = vrot.slane %v632, 5
      %v666 = vrot.slane %v665, 4
      %v667 = vrot.slane %v298, 5
      %v668 = vsel %vm656, %v666, %v667
      %v669 = vrot.slane %v633, 5
      %v670 = vrot.slane %v669, 4
      %v671 = vrot.slane %v299, 5
      %v672 = vsel %vm656, %v670, %v671
      %v673 = vrot.slane %v634, 5
      %v674 = vrot.slane %v673, 4
      %v675 = vrot.slane %v300, 5
      %v676 = vsel %vm656, %v674, %v675
      %v677 = vrot.slane %v635, 5
      %v678 = vrot.slane %v677, 4
      %v679 = vrot.slane %v301, 5
      %v680 = vsel %vm656, %v678, %v679
      %v681 = vrot.slane %v636, 5
      %v682 = vrot.slane %v681, 4
      %v683 = vrot.slane %v302, 5
      %v684 = vsel %vm656, %v682, %v683
      %v685 = vrot.slane %v637, 5
      %v686 = vrot.slane %v685, 4
      %v687 = vrot.slane %v303, 5
      %v688 = vsel %vm656, %v686, %v687
      %s689 = scalar_lea.vmem %s1, 128
      %v690 = vld [vmem:[%s689] sm:$0xf]
      %v691 = vld [vmem:[%s689 + $0x4] sm:$0xf]
      %v692 = vld [vmem:[%s689 + $0x8] sm:$0xf]
      %v693 = vld [vmem:[%s689 + $0xc] sm:$0xf]
      %v694 = vld [vmem:[%s689 + $0x10] sm:$0xf]
      %v695 = vld [vmem:[%s689 + $0x14] sm:$0xf]
      %v696 = vld [vmem:[%s689 + $0x18] sm:$0xf]
      %v697 = vld [vmem:[%s689 + $0x1c] sm:$0xf]
      %v698 = vld [vmem:[%s689 + $0x20] sm:$0xf]
      %v699 = vld [vmem:[%s689 + $0x24] sm:$0xf]
      %v700 = vld [vmem:[%s689 + $0x28] sm:$0xf]
      %v701 = vld [vmem:[%s689 + $0x2c] sm:$0xf]
      %v702 = vld [vmem:[%s689 + $0x30] sm:$0xf]
      %v703 = vld [vmem:[%s689 + $0x34] sm:$0xf]
      %v704 = vld [vmem:[%s689 + $0x38] sm:$0xf]
      %v705 = vld [vmem:[%s689 + $0x3c] sm:$0xf]
      %v706 = vunpack.c.l.b16 %v660
      %v707 = vunpack.c.l.b16 %v664
      %v708 = vunpack.c.l.b16 %v668
      %v709 = vunpack.c.l.b16 %v672
      %v710 = vunpack.c.l.b16 %v676
      %v711 = vunpack.c.l.b16 %v680
      %v712 = vunpack.c.l.b16 %v684
      %v713 = vunpack.c.l.b16 %v688
      %v714 = vpack.c.b16 %v707, %v706
      %v715 = vpack.c.b16 %v709, %v708
      %v716 = vpack.c.b16 %v711, %v710
      %v717 = vpack.c.b16 %v713, %v712
      %v738 = vunpack.c.l.b16 %v690
      %v739 = vunpack.c.l.b16 %v691
      %v740 = vunpack.c.l.b16 %v692
      %v741 = vunpack.c.l.b16 %v693
      %v742 = vunpack.c.l.b16 %v694
      %v743 = vunpack.c.l.b16 %v695
      %v744 = vunpack.c.l.b16 %v696
      %v745 = vunpack.c.l.b16 %v697
      %v746 = vunpack.c.l.b16 %v698
      %v747 = vunpack.c.l.b16 %v699
      %v748 = vunpack.c.l.b16 %v700
      %v749 = vunpack.c.l.b16 %v701
      %v750 = vunpack.c.l.b16 %v702
      %v751 = vunpack.c.l.b16 %v703
      %v752 = vunpack.c.l.b16 %v704
      %v753 = vunpack.c.l.b16 %v705
      %v754 = vpack.c.b16 %v739, %v738
      %v755 = vpack.c.b16 %v741, %v740
      %v756 = vpack.c.b16 %v743, %v742
      %v757 = vpack.c.b16 %v745, %v744
      %v758 = vpack.c.b16 %v747, %v746
      %v759 = vpack.c.b16 %v749, %v748
      %v760 = vpack.c.b16 %v751, %v750
      %v761 = vpack.c.b16 %v753, %v752
      %770 = vmatpush.bf16.msra.mxu0 %v761
      %771 = vmatpush.bf16.msra.mxu0 %v760
      %772 = vmatpush.bf16.msra.mxu0 %v759
      %773 = vmatpush.bf16.msra.mxu0 %v758
      %774 = vmatpush.bf16.msra.mxu0 %v757
      %775 = vmatpush.bf16.msra.mxu0 %v756
      %776 = vmatpush.bf16.msra.mxu0 %v755
      %777 = vmatpush.bf16.msra.mxu0 %v754
      %778 = vmatmul.bf16.gmra.mxu0 %v714
      %v779 = vpop.f32.mrf.mxu0
      %v780 = vadd.f32 0.0, %v779
      %v781 = vpop.f32.mrf.mxu0
      %v782 = vadd.f32 0.0, %v781
      %783 = vmatmul.bf16.gmra.mxu0 %v715
      %v784 = vpop.f32.mrf.mxu0
      %v785 = vadd.f32 0.0, %v784
      %v786 = vpop.f32.mrf.mxu0
      %v787 = vadd.f32 0.0, %v786
      %788 = vmatmul.bf16.gmra.mxu0 %v716
      %v789 = vpop.f32.mrf.mxu0
      %v790 = vadd.f32 0.0, %v789
      %v791 = vpop.f32.mrf.mxu0
      %v792 = vadd.f32 0.0, %v791
      %793 = vmatmul.bf16.gmra.mxu0 %v717
      %v794 = vpop.f32.mrf.mxu0
      %v795 = vadd.f32 0.0, %v794
      %v796 = vpop.f32.mrf.mxu0
      %v797 = vadd.f32 0.0, %v796
      %798 = vdwg.mxu0
      %v799 = vadd.f32 %v611, %v780
      %v800 = vadd.f32 %v613, %v782
      %v801 = vadd.f32 %v616, %v785
      %v802 = vadd.f32 %v618, %v787
      %v803 = vadd.f32 %v621, %v790
      %v804 = vadd.f32 %v623, %v792
      %v805 = vadd.f32 %v626, %v795
      %v806 = vadd.f32 %v628, %v797
      %s807 = scalar_lea.vmem %s261, 8
      %v808 = vld [vmem:[%s807] sm:$0xf]
      %v809 = vld [vmem:[%s807 + $0x8] sm:$0xf]
      %v810 = vld [vmem:[%s807 + $0x10] sm:$0xf]
      %v811 = vld [vmem:[%s807 + $0x18] sm:$0xf]
      %v812 = vld [vmem:[%s807 + $0x20] sm:$0xf]
      %v813 = vld [vmem:[%s807 + $0x28] sm:$0xf]
      %v814 = vld [vmem:[%s807 + $0x30] sm:$0xf]
      %v815 = vld [vmem:[%s807 + $0x38] sm:$0xf]
      %s816 = scalar_lea.vmem %s1, 192
      %v817 = vld [vmem:[%s816] sm:$0xf]
      %v818 = vld [vmem:[%s816 + $0x4] sm:$0xf]
      %v819 = vld [vmem:[%s816 + $0x8] sm:$0xf]
      %v820 = vld [vmem:[%s816 + $0xc] sm:$0xf]
      %v821 = vld [vmem:[%s816 + $0x10] sm:$0xf]
      %v822 = vld [vmem:[%s816 + $0x14] sm:$0xf]
      %v823 = vld [vmem:[%s816 + $0x18] sm:$0xf]
      %v824 = vld [vmem:[%s816 + $0x1c] sm:$0xf]
      %v825 = vld [vmem:[%s816 + $0x20] sm:$0xf]
      %v826 = vld [vmem:[%s816 + $0x24] sm:$0xf]
      %v827 = vld [vmem:[%s816 + $0x28] sm:$0xf]
      %v828 = vld [vmem:[%s816 + $0x2c] sm:$0xf]
      %v829 = vld [vmem:[%s816 + $0x30] sm:$0xf]
      %v830 = vld [vmem:[%s816 + $0x34] sm:$0xf]
      %v831 = vld [vmem:[%s816 + $0x38] sm:$0xf]
      %v832 = vld [vmem:[%s816 + $0x3c] sm:$0xf]
      %v841 = vunpack.c.l.b16 %v808
      %v842 = vunpack.c.l.b16 %v809
      %v843 = vunpack.c.l.b16 %v810
      %v844 = vunpack.c.l.b16 %v811
      %v845 = vunpack.c.l.b16 %v812
      %v846 = vunpack.c.l.b16 %v813
      %v847 = vunpack.c.l.b16 %v814
      %v848 = vunpack.c.l.b16 %v815
      %v849 = vpack.c.b16 %v842, %v841
      %v850 = vpack.c.b16 %v844, %v843
      %v851 = vpack.c.b16 %v846, %v845
      %v852 = vpack.c.b16 %v848, %v847
      %v873 = vunpack.c.l.b16 %v817
      %v874 = vunpack.c.l.b16 %v818
      %v875 = vunpack.c.l.b16 %v819
      %v876 = vunpack.c.l.b16 %v820
      %v877 = vunpack.c.l.b16 %v821
      %v878 = vunpack.c.l.b16 %v822
      %v879 = vunpack.c.l.b16 %v823
      %v880 = vunpack.c.l.b16 %v824
      %v881 = vunpack.c.l.b16 %v825
      %v882 = vunpack.c.l.b16 %v826
      %v883 = vunpack.c.l.b16 %v827
      %v884 = vunpack.c.l.b16 %v828
      %v885 = vunpack.c.l.b16 %v829
      %v886 = vunpack.c.l.b16 %v830
      %v887 = vunpack.c.l.b16 %v831
      %v888 = vunpack.c.l.b16 %v832
      %v889 = vpack.c.b16 %v874, %v873
      %v890 = vpack.c.b16 %v876, %v875
      %v891 = vpack.c.b16 %v878, %v877
      %v892 = vpack.c.b16 %v880, %v879
      %v893 = vpack.c.b16 %v882, %v881
      %v894 = vpack.c.b16 %v884, %v883
      %v895 = vpack.c.b16 %v886, %v885
      %v896 = vpack.c.b16 %v888, %v887
      %905 = vmatpush.bf16.msra.mxu0 %v896
      %906 = vmatpush.bf16.msra.mxu0 %v895
      %907 = vmatpush.bf16.msra.mxu0 %v894
      %908 = vmatpush.bf16.msra.mxu0 %v893
      %909 = vmatpush.bf16.msra.mxu0 %v892
      %910 = vmatpush.bf16.msra.mxu0 %v891
      %911 = vmatpush.bf16.msra.mxu0 %v890
      %912 = vmatpush.bf16.msra.mxu0 %v889
      %913 = vmatmul.bf16.gmra.mxu0 %v849
      %v914 = vpop.f32.mrf.mxu0
      %v915 = vadd.f32 0.0, %v914
      %v916 = vpop.f32.mrf.mxu0
      %v917 = vadd.f32 0.0, %v916
      %918 = vmatmul.bf16.gmra.mxu0 %v850
      %v919 = vpop.f32.mrf.mxu0
      %v920 = vadd.f32 0.0, %v919
      %v921 = vpop.f32.mrf.mxu0
      %v922 = vadd.f32 0.0, %v921
      %923 = vmatmul.bf16.gmra.mxu0 %v851
      %v924 = vpop.f32.mrf.mxu0
      %v925 = vadd.f32 0.0, %v924
      %v926 = vpop.f32.mrf.mxu0
      %v927 = vadd.f32 0.0, %v926
      %928 = vmatmul.bf16.gmra.mxu0 %v852
      %v929 = vpop.f32.mrf.mxu0
      %v930 = vadd.f32 0.0, %v929
      %v931 = vpop.f32.mrf.mxu0
      %v932 = vadd.f32 0.0, %v931
      %933 = vdwg.mxu0
      %v934 = vadd.f32 %v799, %v915
      %v935 = vadd.f32 %v800, %v917
      %v936 = vadd.f32 %v801, %v920
      %v937 = vadd.f32 %v802, %v922
      %v938 = vadd.f32 %v803, %v925
      %v939 = vadd.f32 %v804, %v927
      %v940 = vadd.f32 %v805, %v930
      %v941 = vadd.f32 %v806, %v932
      %v942 = vld [vmem:[%s807] sm:$0xf]
      %v943 = vld [vmem:[%s807 + $0x4] sm:$0x1]
      %v944 = vld [vmem:[%s807 + $0x8] sm:$0xf]
      %v945 = vld [vmem:[%s807 + $0xc] sm:$0x1]
      %v946 = vld [vmem:[%s807 + $0x10] sm:$0xf]
      %v947 = vld [vmem:[%s807 + $0x14] sm:$0x1]
      %v948 = vld [vmem:[%s807 + $0x18] sm:$0xf]
      %v949 = vld [vmem:[%s807 + $0x1c] sm:$0x1]
      %v950 = vld [vmem:[%s807 + $0x20] sm:$0xf]
      %v951 = vld [vmem:[%s807 + $0x24] sm:$0x1]
      %v952 = vld [vmem:[%s807 + $0x28] sm:$0xf]
      %v953 = vld [vmem:[%s807 + $0x2c] sm:$0x1]
      %v954 = vld [vmem:[%s807 + $0x30] sm:$0xf]
      %v955 = vld [vmem:[%s807 + $0x34] sm:$0x1]
      %v956 = vld [vmem:[%s807 + $0x38] sm:$0xf]
      %v957 = vld [vmem:[%s807 + $0x3c] sm:$0x1]
      %v959 = vshrl.u32 %v942, 16
      %v961 = vrot.slane %v959, 4
      %v962 = vshll.u32 %v942, 16
      %v964 = vrot.slane %v962, 5
      %v965 = vor.u32 %v961, %v964
      %v966 = vrot.slane %v965, 4
      %v968 = vshll.u32 %v943, 16
      %v970 = vrot.slane %v968, 5
      %v971 = vsel %vm306, %v966, %v970
      %v973 = vshrl.u32 %v944, 16
      %v975 = vrot.slane %v973, 4
      %v976 = vshll.u32 %v944, 16
      %v978 = vrot.slane %v976, 5
      %v979 = vor.u32 %v975, %v978
      %v980 = vrot.slane %v979, 4
      %v982 = vshll.u32 %v945, 16
      %v984 = vrot.slane %v982, 5
      %v985 = vsel %vm306, %v980, %v984
      %v987 = vshrl.u32 %v946, 16
      %v989 = vrot.slane %v987, 4
      %v990 = vshll.u32 %v946, 16
      %v992 = vrot.slane %v990, 5
      %v993 = vor.u32 %v989, %v992
      %v994 = vrot.slane %v993, 4
      %v996 = vshll.u32 %v947, 16
      %v998 = vrot.slane %v996, 5
      %v999 = vsel %vm306, %v994, %v998
      %v1001 = vshrl.u32 %v948, 16
      %v1003 = vrot.slane %v1001, 4
      %v1004 = vshll.u32 %v948, 16
      %v1006 = vrot.slane %v1004, 5
      %v1007 = vor.u32 %v1003, %v1006
      %v1008 = vrot.slane %v1007, 4
      %v1010 = vshll.u32 %v949, 16
      %v1012 = vrot.slane %v1010, 5
      %v1013 = vsel %vm306, %v1008, %v1012
      %v1015 = vshrl.u32 %v950, 16
      %v1017 = vrot.slane %v1015, 4
      %v1018 = vshll.u32 %v950, 16
      %v1020 = vrot.slane %v1018, 5
      %v1021 = vor.u32 %v1017, %v1020
      %v1022 = vrot.slane %v1021, 4
      %v1024 = vshll.u32 %v951, 16
      %v1026 = vrot.slane %v1024, 5
      %v1027 = vsel %vm306, %v1022, %v1026
      %v1029 = vshrl.u32 %v952, 16
      %v1031 = vrot.slane %v1029, 4
      %v1032 = vshll.u32 %v952, 16
      %v1034 = vrot.slane %v1032, 5
      %v1035 = vor.u32 %v1031, %v1034
      %v1036 = vrot.slane %v1035, 4
      %v1038 = vshll.u32 %v953, 16
      %v1040 = vrot.slane %v1038, 5
      %v1041 = vsel %vm306, %v1036, %v1040
      %v1043 = vshrl.u32 %v954, 16
      %v1045 = vrot.slane %v1043, 4
      %v1046 = vshll.u32 %v954, 16
      %v1048 = vrot.slane %v1046, 5
      %v1049 = vor.u32 %v1045, %v1048
      %v1050 = vrot.slane %v1049, 4
      %v1052 = vshll.u32 %v955, 16
      %v1054 = vrot.slane %v1052, 5
      %v1055 = vsel %vm306, %v1050, %v1054
      %v1057 = vshrl.u32 %v956, 16
      %v1059 = vrot.slane %v1057, 4
      %v1060 = vshll.u32 %v956, 16
      %v1062 = vrot.slane %v1060, 5
      %v1063 = vor.u32 %v1059, %v1062
      %v1064 = vrot.slane %v1063, 4
      %v1066 = vshll.u32 %v957, 16
      %v1068 = vrot.slane %v1066, 5
      %v1069 = vsel %vm306, %v1064, %v1068
      %s1070 = scalar_lea.vmem %s1, 256
      %v1071 = vld [vmem:[%s1070] sm:$0xf]
      %v1072 = vld [vmem:[%s1070 + $0x4] sm:$0xf]
      %v1073 = vld [vmem:[%s1070 + $0x8] sm:$0xf]
      %v1074 = vld [vmem:[%s1070 + $0xc] sm:$0xf]
      %v1075 = vld [vmem:[%s1070 + $0x10] sm:$0xf]
      %v1076 = vld [vmem:[%s1070 + $0x14] sm:$0xf]
      %v1077 = vld [vmem:[%s1070 + $0x18] sm:$0xf]
      %v1078 = vld [vmem:[%s1070 + $0x1c] sm:$0xf]
      %v1079 = vld [vmem:[%s1070 + $0x20] sm:$0xf]
      %v1080 = vld [vmem:[%s1070 + $0x24] sm:$0xf]
      %v1081 = vld [vmem:[%s1070 + $0x28] sm:$0xf]
      %v1082 = vld [vmem:[%s1070 + $0x2c] sm:$0xf]
      %v1083 = vld [vmem:[%s1070 + $0x30] sm:$0xf]
      %v1084 = vld [vmem:[%s1070 + $0x34] sm:$0xf]
      %v1085 = vld [vmem:[%s1070 + $0x38] sm:$0xf]
      %v1086 = vld [vmem:[%s1070 + $0x3c] sm:$0xf]
      %v1087 = vunpack.c.l.b16 %v971
      %v1088 = vunpack.c.l.b16 %v985
      %v1089 = vunpack.c.l.b16 %v999
      %v1090 = vunpack.c.l.b16 %v1013
      %v1091 = vunpack.c.l.b16 %v1027
      %v1092 = vunpack.c.l.b16 %v1041
      %v1093 = vunpack.c.l.b16 %v1055
      %v1094 = vunpack.c.l.b16 %v1069
      %v1095 = vpack.c.b16 %v1088, %v1087
      %v1096 = vpack.c.b16 %v1090, %v1089
      %v1097 = vpack.c.b16 %v1092, %v1091
      %v1098 = vpack.c.b16 %v1094, %v1093
      %v1119 = vunpack.c.l.b16 %v1071
      %v1120 = vunpack.c.l.b16 %v1072
      %v1121 = vunpack.c.l.b16 %v1073
      %v1122 = vunpack.c.l.b16 %v1074
      %v1123 = vunpack.c.l.b16 %v1075
      %v1124 = vunpack.c.l.b16 %v1076
      %v1125 = vunpack.c.l.b16 %v1077
      %v1126 = vunpack.c.l.b16 %v1078
      %v1127 = vunpack.c.l.b16 %v1079
      %v1128 = vunpack.c.l.b16 %v1080
      %v1129 = vunpack.c.l.b16 %v1081
      %v1130 = vunpack.c.l.b16 %v1082
      %v1131 = vunpack.c.l.b16 %v1083
      %v1132 = vunpack.c.l.b16 %v1084
      %v1133 = vunpack.c.l.b16 %v1085
      %v1134 = vunpack.c.l.b16 %v1086
      %v1135 = vpack.c.b16 %v1120, %v1119
      %v1136 = vpack.c.b16 %v1122, %v1121
      %v1137 = vpack.c.b16 %v1124, %v1123
      %v1138 = vpack.c.b16 %v1126, %v1125
      %v1139 = vpack.c.b16 %v1128, %v1127
      %v1140 = vpack.c.b16 %v1130, %v1129
      %v1141 = vpack.c.b16 %v1132, %v1131
      %v1142 = vpack.c.b16 %v1134, %v1133
      %1151 = vmatpush.bf16.msra.mxu0 %v1142
      %1152 = vmatpush.bf16.msra.mxu0 %v1141
      %1153 = vmatpush.bf16.msra.mxu0 %v1140
      %1154 = vmatpush.bf16.msra.mxu0 %v1139
      %1155 = vmatpush.bf16.msra.mxu0 %v1138
      %1156 = vmatpush.bf16.msra.mxu0 %v1137
      %1157 = vmatpush.bf16.msra.mxu0 %v1136
      %1158 = vmatpush.bf16.msra.mxu0 %v1135
      %1159 = vmatmul.bf16.gmra.mxu0 %v1095
      %v1160 = vpop.f32.mrf.mxu0
      %v1161 = vadd.f32 0.0, %v1160
      %v1162 = vpop.f32.mrf.mxu0
      %v1163 = vadd.f32 0.0, %v1162
      %1164 = vmatmul.bf16.gmra.mxu0 %v1096
      %v1165 = vpop.f32.mrf.mxu0
      %v1166 = vadd.f32 0.0, %v1165
      %v1167 = vpop.f32.mrf.mxu0
      %v1168 = vadd.f32 0.0, %v1167
      %1169 = vmatmul.bf16.gmra.mxu0 %v1097
      %v1170 = vpop.f32.mrf.mxu0
      %v1171 = vadd.f32 0.0, %v1170
      %v1172 = vpop.f32.mrf.mxu0
      %v1173 = vadd.f32 0.0, %v1172
      %1174 = vmatmul.bf16.gmra.mxu0 %v1098
      %v1175 = vpop.f32.mrf.mxu0
      %v1176 = vadd.f32 0.0, %v1175
      %v1177 = vpop.f32.mrf.mxu0
      %v1178 = vadd.f32 0.0, %v1177
      %1179 = vdwg.mxu0
      %v1180 = vadd.f32 %v934, %v1161
      %v1181 = vadd.f32 %v935, %v1163
      %v1182 = vadd.f32 %v936, %v1166
      %v1183 = vadd.f32 %v937, %v1168
      %v1184 = vadd.f32 %v938, %v1171
      %v1185 = vadd.f32 %v939, %v1173
      %v1186 = vadd.f32 %v940, %v1176
      %v1187 = vadd.f32 %v941, %v1178
      %v1188 = vld [vmem:[%s807] sm:$0xe]
      %v1189 = vld [vmem:[%s807 + $0x8] sm:$0xe]
      %v1190 = vld [vmem:[%s807 + $0x10] sm:$0xe]
      %v1191 = vld [vmem:[%s807 + $0x18] sm:$0xe]
      %v1192 = vld [vmem:[%s807 + $0x20] sm:$0xe]
      %v1193 = vld [vmem:[%s807 + $0x28] sm:$0xe]
      %v1194 = vld [vmem:[%s807 + $0x30] sm:$0xe]
      %v1195 = vld [vmem:[%s807 + $0x38] sm:$0xe]
      %v1212 = vrot.slane %v1188, 5
      %v1213 = vrot.slane %v1212, 4
      %v1214 = vrot.slane %v943, 5
      %v1215 = vsel %vm656, %v1213, %v1214
      %v1216 = vrot.slane %v1189, 5
      %v1217 = vrot.slane %v1216, 4
      %v1218 = vrot.slane %v945, 5
      %v1219 = vsel %vm656, %v1217, %v1218
      %v1220 = vrot.slane %v1190, 5
      %v1221 = vrot.slane %v1220, 4
      %v1222 = vrot.slane %v947, 5
      %v1223 = vsel %vm656, %v1221, %v1222
      %v1224 = vrot.slane %v1191, 5
      %v1225 = vrot.slane %v1224, 4
      %v1226 = vrot.slane %v949, 5
      %v1227 = vsel %vm656, %v1225, %v1226
      %v1228 = vrot.slane %v1192, 5
      %v1229 = vrot.slane %v1228, 4
      %v1230 = vrot.slane %v951, 5
      %v1231 = vsel %vm656, %v1229, %v1230
      %v1232 = vrot.slane %v1193, 5
      %v1233 = vrot.slane %v1232, 4
      %v1234 = vrot.slane %v953, 5
      %v1235 = vsel %vm656, %v1233, %v1234
      %v1236 = vrot.slane %v1194, 5
      %v1237 = vrot.slane %v1236, 4
      %v1238 = vrot.slane %v955, 5
      %v1239 = vsel %vm656, %v1237, %v1238
      %v1240 = vrot.slane %v1195, 5
      %v1241 = vrot.slane %v1240, 4
      %v1242 = vrot.slane %v957, 5
      %v1243 = vsel %vm656, %v1241, %v1242
      %s1244 = scalar_lea.vmem %s1, 320
      %v1245 = vld [vmem:[%s1244] sm:$0xf]
      %v1246 = vld [vmem:[%s1244 + $0x4] sm:$0xf]
      %v1247 = vld [vmem:[%s1244 + $0x8] sm:$0xf]
      %v1248 = vld [vmem:[%s1244 + $0xc] sm:$0xf]
      %v1249 = vld [vmem:[%s1244 + $0x10] sm:$0xf]
      %v1250 = vld [vmem:[%s1244 + $0x14] sm:$0xf]
      %v1251 = vld [vmem:[%s1244 + $0x18] sm:$0xf]
      %v1252 = vld [vmem:[%s1244 + $0x1c] sm:$0xf]
      %v1253 = vld [vmem:[%s1244 + $0x20] sm:$0xf]
      %v1254 = vld [vmem:[%s1244 + $0x24] sm:$0xf]
      %v1255 = vld [vmem:[%s1244 + $0x28] sm:$0xf]
      %v1256 = vld [vmem:[%s1244 + $0x2c] sm:$0xf]
      %v1257 = vld [vmem:[%s1244 + $0x30] sm:$0xf]
      %v1258 = vld [vmem:[%s1244 + $0x34] sm:$0xf]
      %v1259 = vld [vmem:[%s1244 + $0x38] sm:$0xf]
      %v1260 = vld [vmem:[%s1244 + $0x3c] sm:$0xf]
      %v1261 = vunpack.c.l.b16 %v1215
      %v1262 = vunpack.c.l.b16 %v1219
      %v1263 = vunpack.c.l.b16 %v1223
      %v1264 = vunpack.c.l.b16 %v1227
      %v1265 = vunpack.c.l.b16 %v1231
      %v1266 = vunpack.c.l.b16 %v1235
      %v1267 = vunpack.c.l.b16 %v1239
      %v1268 = vunpack.c.l.b16 %v1243
      %v1269 = vpack.c.b16 %v1262, %v1261
      %v1270 = vpack.c.b16 %v1264, %v1263
      %v1271 = vpack.c.b16 %v1266, %v1265
      %v1272 = vpack.c.b16 %v1268, %v1267
      %v1293 = vunpack.c.l.b16 %v1245
      %v1294 = vunpack.c.l.b16 %v1246
      %v1295 = vunpack.c.l.b16 %v1247
      %v1296 = vunpack.c.l.b16 %v1248
      %v1297 = vunpack.c.l.b16 %v1249
      %v1298 = vunpack.c.l.b16 %v1250
      %v1299 = vunpack.c.l.b16 %v1251
      %v1300 = vunpack.c.l.b16 %v1252
      %v1301 = vunpack.c.l.b16 %v1253
      %v1302 = vunpack.c.l.b16 %v1254
      %v1303 = vunpack.c.l.b16 %v1255
      %v1304 = vunpack.c.l.b16 %v1256
      %v1305 = vunpack.c.l.b16 %v1257
      %v1306 = vunpack.c.l.b16 %v1258
      %v1307 = vunpack.c.l.b16 %v1259
      %v1308 = vunpack.c.l.b16 %v1260
      %v1309 = vpack.c.b16 %v1294, %v1293
      %v1310 = vpack.c.b16 %v1296, %v1295
      %v1311 = vpack.c.b16 %v1298, %v1297
      %v1312 = vpack.c.b16 %v1300, %v1299
      %v1313 = vpack.c.b16 %v1302, %v1301
      %v1314 = vpack.c.b16 %v1304, %v1303
      %v1315 = vpack.c.b16 %v1306, %v1305
      %v1316 = vpack.c.b16 %v1308, %v1307
      %1325 = vmatpush.bf16.msra.mxu0 %v1316
      %1326 = vmatpush.bf16.msra.mxu0 %v1315
      %1327 = vmatpush.bf16.msra.mxu0 %v1314
      %1328 = vmatpush.bf16.msra.mxu0 %v1313
      %1329 = vmatpush.bf16.msra.mxu0 %v1312
      %1330 = vmatpush.bf16.msra.mxu0 %v1311
      %1331 = vmatpush.bf16.msra.mxu0 %v1310
      %1332 = vmatpush.bf16.msra.mxu0 %v1309
      %1333 = vmatmul.bf16.gmra.mxu0 %v1269
      %v1334 = vpop.f32.mrf.mxu0
      %v1335 = vadd.f32 0.0, %v1334
      %v1336 = vpop.f32.mrf.mxu0
      %v1337 = vadd.f32 0.0, %v1336
      %1338 = vmatmul.bf16.gmra.mxu0 %v1270
      %v1339 = vpop.f32.mrf.mxu0
      %v1340 = vadd.f32 0.0, %v1339
      %v1341 = vpop.f32.mrf.mxu0
      %v1342 = vadd.f32 0.0, %v1341
      %1343 = vmatmul.bf16.gmra.mxu0 %v1271
      %v1344 = vpop.f32.mrf.mxu0
      %v1345 = vadd.f32 0.0, %v1344
      %v1346 = vpop.f32.mrf.mxu0
      %v1347 = vadd.f32 0.0, %v1346
      %1348 = vmatmul.bf16.gmra.mxu0 %v1272
      %v1349 = vpop.f32.mrf.mxu0
      %v1350 = vadd.f32 0.0, %v1349
      %v1351 = vpop.f32.mrf.mxu0
      %v1352 = vadd.f32 0.0, %v1351
      %1353 = vdwg.mxu0
      %v1354 = vadd.f32 %v1180, %v1335
      %v1355 = vadd.f32 %v1181, %v1337
      %v1356 = vadd.f32 %v1182, %v1340
      %v1357 = vadd.f32 %v1183, %v1342
      %v1358 = vadd.f32 %v1184, %v1345
      %v1359 = vadd.f32 %v1185, %v1347
      %v1360 = vadd.f32 %v1186, %v1350
      %v1361 = vadd.f32 %v1187, %v1352
      %s1362 = scalar_lea.vmem %s261, 16
      %v1363 = vld [vmem:[%s1362] sm:$0xf]
      %v1364 = vld [vmem:[%s1362 + $0x8] sm:$0xf]
      %v1365 = vld [vmem:[%s1362 + $0x10] sm:$0xf]
      %v1366 = vld [vmem:[%s1362 + $0x18] sm:$0xf]
      %v1367 = vld [vmem:[%s1362 + $0x20] sm:$0xf]
      %v1368 = vld [vmem:[%s1362 + $0x28] sm:$0xf]
      %v1369 = vld [vmem:[%s1362 + $0x30] sm:$0xf]
      %v1370 = vld [vmem:[%s1362 + $0x38] sm:$0xf]
      %s1371 = scalar_lea.vmem %s1, 384
      %v1372 = vld [vmem:[%s1371] sm:$0xf]
      %v1373 = vld [vmem:[%s1371 + $0x4] sm:$0xf]
      %v1374 = vld [vmem:[%s1371 + $0x8] sm:$0xf]
      %v1375 = vld [vmem:[%s1371 + $0xc] sm:$0xf]
      %v1376 = vld [vmem:[%s1371 + $0x10] sm:$0xf]
      %v1377 = vld [vmem:[%s1371 + $0x14] sm:$0xf]
      %v1378 = vld [vmem:[%s1371 + $0x18] sm:$0xf]
      %v1379 = vld [vmem:[%s1371 + $0x1c] sm:$0xf]
      %v1380 = vld [vmem:[%s1371 + $0x20] sm:$0xf]
      %v1381 = vld [vmem:[%s1371 + $0x24] sm:$0xf]
      %v1382 = vld [vmem:[%s1371 + $0x28] sm:$0xf]
      %v1383 = vld [vmem:[%s1371 + $0x2c] sm:$0xf]
      %v1384 = vld [vmem:[%s1371 + $0x30] sm:$0xf]
      %v1385 = vld [vmem:[%s1371 + $0x34] sm:$0xf]
      %v1386 = vld [vmem:[%s1371 + $0x38] sm:$0xf]
      %v1387 = vld [vmem:[%s1371 + $0x3c] sm:$0xf]
      %v1396 = vunpack.c.l.b16 %v1363
      %v1397 = vunpack.c.l.b16 %v1364
      %v1398 = vunpack.c.l.b16 %v1365
      %v1399 = vunpack.c.l.b16 %v1366
      %v1400 = vunpack.c.l.b16 %v1367
      %v1401 = vunpack.c.l.b16 %v1368
      %v1402 = vunpack.c.l.b16 %v1369
      %v1403 = vunpack.c.l.b16 %v1370
      %v1404 = vpack.c.b16 %v1397, %v1396
      %v1405 = vpack.c.b16 %v1399, %v1398
      %v1406 = vpack.c.b16 %v1401, %v1400
      %v1407 = vpack.c.b16 %v1403, %v1402
      %v1428 = vunpack.c.l.b16 %v1372
      %v1429 = vunpack.c.l.b16 %v1373
      %v1430 = vunpack.c.l.b16 %v1374
      %v1431 = vunpack.c.l.b16 %v1375
      %v1432 = vunpack.c.l.b16 %v1376
      %v1433 = vunpack.c.l.b16 %v1377
      %v1434 = vunpack.c.l.b16 %v1378
      %v1435 = vunpack.c.l.b16 %v1379
      %v1436 = vunpack.c.l.b16 %v1380
      %v1437 = vunpack.c.l.b16 %v1381
      %v1438 = vunpack.c.l.b16 %v1382
      %v1439 = vunpack.c.l.b16 %v1383
      %v1440 = vunpack.c.l.b16 %v1384
      %v1441 = vunpack.c.l.b16 %v1385
      %v1442 = vunpack.c.l.b16 %v1386
      %v1443 = vunpack.c.l.b16 %v1387
      %v1444 = vpack.c.b16 %v1429, %v1428
      %v1445 = vpack.c.b16 %v1431, %v1430
      %v1446 = vpack.c.b16 %v1433, %v1432
      %v1447 = vpack.c.b16 %v1435, %v1434
      %v1448 = vpack.c.b16 %v1437, %v1436
      %v1449 = vpack.c.b16 %v1439, %v1438
      %v1450 = vpack.c.b16 %v1441, %v1440
      %v1451 = vpack.c.b16 %v1443, %v1442
      %1460 = vmatpush.bf16.msra.mxu0 %v1451
      %1461 = vmatpush.bf16.msra.mxu0 %v1450
      %1462 = vmatpush.bf16.msra.mxu0 %v1449
      %1463 = vmatpush.bf16.msra.mxu0 %v1448
      %1464 = vmatpush.bf16.msra.mxu0 %v1447
      %1465 = vmatpush.bf16.msra.mxu0 %v1446
      %1466 = vmatpush.bf16.msra.mxu0 %v1445
      %1467 = vmatpush.bf16.msra.mxu0 %v1444
      %1468 = vmatmul.bf16.gmra.mxu0 %v1404
      %v1469 = vpop.f32.mrf.mxu0
      %v1470 = vadd.f32 0.0, %v1469
      %v1471 = vpop.f32.mrf.mxu0
      %v1472 = vadd.f32 0.0, %v1471
      %1473 = vmatmul.bf16.gmra.mxu0 %v1405
      %v1474 = vpop.f32.mrf.mxu0
      %v1475 = vadd.f32 0.0, %v1474
      %v1476 = vpop.f32.mrf.mxu0
      %v1477 = vadd.f32 0.0, %v1476
      %1478 = vmatmul.bf16.gmra.mxu0 %v1406
      %v1479 = vpop.f32.mrf.mxu0
      %v1480 = vadd.f32 0.0, %v1479
      %v1481 = vpop.f32.mrf.mxu0
      %v1482 = vadd.f32 0.0, %v1481
      %1483 = vmatmul.bf16.gmra.mxu0 %v1407
      %v1484 = vpop.f32.mrf.mxu0
      %v1485 = vadd.f32 0.0, %v1484
      %v1486 = vpop.f32.mrf.mxu0
      %v1487 = vadd.f32 0.0, %v1486
      %1488 = vdwg.mxu0
      %v1489 = vadd.f32 %v1354, %v1470
      %v1490 = vadd.f32 %v1355, %v1472
      %v1491 = vadd.f32 %v1356, %v1475
      %v1492 = vadd.f32 %v1357, %v1477
      %v1493 = vadd.f32 %v1358, %v1480
      %v1494 = vadd.f32 %v1359, %v1482
      %v1495 = vadd.f32 %v1360, %v1485
      %v1496 = vadd.f32 %v1361, %v1487
      %v1497 = vld [vmem:[%s1362] sm:$0xf]
      %v1498 = vld [vmem:[%s1362 + $0x4] sm:$0x1]
      %v1499 = vld [vmem:[%s1362 + $0x8] sm:$0xf]
      %v1500 = vld [vmem:[%s1362 + $0xc] sm:$0x1]
      %v1501 = vld [vmem:[%s1362 + $0x10] sm:$0xf]
      %v1502 = vld [vmem:[%s1362 + $0x14] sm:$0x1]
      %v1503 = vld [vmem:[%s1362 + $0x18] sm:$0xf]
      %v1504 = vld [vmem:[%s1362 + $0x1c] sm:$0x1]
      %v1505 = vld [vmem:[%s1362 + $0x20] sm:$0xf]
      %v1506 = vld [vmem:[%s1362 + $0x24] sm:$0x1]
      %v1507 = vld [vmem:[%s1362 + $0x28] sm:$0xf]
      %v1508 = vld [vmem:[%s1362 + $0x2c] sm:$0x1]
      %v1509 = vld [vmem:[%s1362 + $0x30] sm:$0xf]
      %v1510 = vld [vmem:[%s1362 + $0x34] sm:$0x1]
      %v1511 = vld [vmem:[%s1362 + $0x38] sm:$0xf]
      %v1512 = vld [vmem:[%s1362 + $0x3c] sm:$0x1]
      %v1514 = vshrl.u32 %v1497, 16
      %v1516 = vrot.slane %v1514, 4
      %v1517 = vshll.u32 %v1497, 16
      %v1519 = vrot.slane %v1517, 5
      %v1520 = vor.u32 %v1516, %v1519
      %v1521 = vrot.slane %v1520, 4
      %v1523 = vshll.u32 %v1498, 16
      %v1525 = vrot.slane %v1523, 5
      %v1526 = vsel %vm306, %v1521, %v1525
      %v1528 = vshrl.u32 %v1499, 16
      %v1530 = vrot.slane %v1528, 4
      %v1531 = vshll.u32 %v1499, 16
      %v1533 = vrot.slane %v1531, 5
      %v1534 = vor.u32 %v1530, %v1533
      %v1535 = vrot.slane %v1534, 4
      %v1537 = vshll.u32 %v1500, 16
      %v1539 = vrot.slane %v1537, 5
      %v1540 = vsel %vm306, %v1535, %v1539
      %v1542 = vshrl.u32 %v1501, 16
      %v1544 = vrot.slane %v1542, 4
      %v1545 = vshll.u32 %v1501, 16
      %v1547 = vrot.slane %v1545, 5
      %v1548 = vor.u32 %v1544, %v1547
      %v1549 = vrot.slane %v1548, 4
      %v1551 = vshll.u32 %v1502, 16
      %v1553 = vrot.slane %v1551, 5
      %v1554 = vsel %vm306, %v1549, %v1553
      %v1556 = vshrl.u32 %v1503, 16
      %v1558 = vrot.slane %v1556, 4
      %v1559 = vshll.u32 %v1503, 16
      %v1561 = vrot.slane %v1559, 5
      %v1562 = vor.u32 %v1558, %v1561
      %v1563 = vrot.slane %v1562, 4
      %v1565 = vshll.u32 %v1504, 16
      %v1567 = vrot.slane %v1565, 5
      %v1568 = vsel %vm306, %v1563, %v1567
      %v1570 = vshrl.u32 %v1505, 16
      %v1572 = vrot.slane %v1570, 4
      %v1573 = vshll.u32 %v1505, 16
      %v1575 = vrot.slane %v1573, 5
      %v1576 = vor.u32 %v1572, %v1575
      %v1577 = vrot.slane %v1576, 4
      %v1579 = vshll.u32 %v1506, 16
      %v1581 = vrot.slane %v1579, 5
      %v1582 = vsel %vm306, %v1577, %v1581
      %v1584 = vshrl.u32 %v1507, 16
      %v1586 = vrot.slane %v1584, 4
      %v1587 = vshll.u32 %v1507, 16
      %v1589 = vrot.slane %v1587, 5
      %v1590 = vor.u32 %v1586, %v1589
      %v1591 = vrot.slane %v1590, 4
      %v1593 = vshll.u32 %v1508, 16
      %v1595 = vrot.slane %v1593, 5
      %v1596 = vsel %vm306, %v1591, %v1595
      %v1598 = vshrl.u32 %v1509, 16
      %v1600 = vrot.slane %v1598, 4
      %v1601 = vshll.u32 %v1509, 16
      %v1603 = vrot.slane %v1601, 5
      %v1604 = vor.u32 %v1600, %v1603
      %v1605 = vrot.slane %v1604, 4
      %v1607 = vshll.u32 %v1510, 16
      %v1609 = vrot.slane %v1607, 5
      %v1610 = vsel %vm306, %v1605, %v1609
      %v1612 = vshrl.u32 %v1511, 16
      %v1614 = vrot.slane %v1612, 4
      %v1615 = vshll.u32 %v1511, 16
      %v1617 = vrot.slane %v1615, 5
      %v1618 = vor.u32 %v1614, %v1617
      %v1619 = vrot.slane %v1618, 4
      %v1621 = vshll.u32 %v1512, 16
      %v1623 = vrot.slane %v1621, 5
      %v1624 = vsel %vm306, %v1619, %v1623
      %s1625 = scalar_lea.vmem %s1, 448
      %v1626 = vld [vmem:[%s1625] sm:$0xf]
      %v1627 = vld [vmem:[%s1625 + $0x4] sm:$0xf]
      %v1628 = vld [vmem:[%s1625 + $0x8] sm:$0xf]
      %v1629 = vld [vmem:[%s1625 + $0xc] sm:$0xf]
      %v1630 = vld [vmem:[%s1625 + $0x10] sm:$0xf]
      %v1631 = vld [vmem:[%s1625 + $0x14] sm:$0xf]
      %v1632 = vld [vmem:[%s1625 + $0x18] sm:$0xf]
      %v1633 = vld [vmem:[%s1625 + $0x1c] sm:$0xf]
      %v1634 = vld [vmem:[%s1625 + $0x20] sm:$0xf]
      %v1635 = vld [vmem:[%s1625 + $0x24] sm:$0xf]
      %v1636 = vld [vmem:[%s1625 + $0x28] sm:$0xf]
      %v1637 = vld [vmem:[%s1625 + $0x2c] sm:$0xf]
      %v1638 = vld [vmem:[%s1625 + $0x30] sm:$0xf]
      %v1639 = vld [vmem:[%s1625 + $0x34] sm:$0xf]
      %v1640 = vld [vmem:[%s1625 + $0x38] sm:$0xf]
      %v1641 = vld [vmem:[%s1625 + $0x3c] sm:$0xf]
      %v1642 = vunpack.c.l.b16 %v1526
      %v1643 = vunpack.c.l.b16 %v1540
      %v1644 = vunpack.c.l.b16 %v1554
      %v1645 = vunpack.c.l.b16 %v1568
      %v1646 = vunpack.c.l.b16 %v1582
      %v1647 = vunpack.c.l.b16 %v1596
      %v1648 = vunpack.c.l.b16 %v1610
      %v1649 = vunpack.c.l.b16 %v1624
      %v1650 = vpack.c.b16 %v1643, %v1642
      %v1651 = vpack.c.b16 %v1645, %v1644
      %v1652 = vpack.c.b16 %v1647, %v1646
      %v1653 = vpack.c.b16 %v1649, %v1648
      %v1674 = vunpack.c.l.b16 %v1626
      %v1675 = vunpack.c.l.b16 %v1627
      %v1676 = vunpack.c.l.b16 %v1628
      %v1677 = vunpack.c.l.b16 %v1629
      %v1678 = vunpack.c.l.b16 %v1630
      %v1679 = vunpack.c.l.b16 %v1631
      %v1680 = vunpack.c.l.b16 %v1632
      %v1681 = vunpack.c.l.b16 %v1633
      %v1682 = vunpack.c.l.b16 %v1634
      %v1683 = vunpack.c.l.b16 %v1635
      %v1684 = vunpack.c.l.b16 %v1636
      %v1685 = vunpack.c.l.b16 %v1637
      %v1686 = vunpack.c.l.b16 %v1638
      %v1687 = vunpack.c.l.b16 %v1639
      %v1688 = vunpack.c.l.b16 %v1640
      %v1689 = vunpack.c.l.b16 %v1641
      %v1690 = vpack.c.b16 %v1675, %v1674
      %v1691 = vpack.c.b16 %v1677, %v1676
      %v1692 = vpack.c.b16 %v1679, %v1678
      %v1693 = vpack.c.b16 %v1681, %v1680
      %v1694 = vpack.c.b16 %v1683, %v1682
      %v1695 = vpack.c.b16 %v1685, %v1684
      %v1696 = vpack.c.b16 %v1687, %v1686
      %v1697 = vpack.c.b16 %v1689, %v1688
      %1706 = vmatpush.bf16.msra.mxu0 %v1697
      %1707 = vmatpush.bf16.msra.mxu0 %v1696
      %1708 = vmatpush.bf16.msra.mxu0 %v1695
      %1709 = vmatpush.bf16.msra.mxu0 %v1694
      %1710 = vmatpush.bf16.msra.mxu0 %v1693
      %1711 = vmatpush.bf16.msra.mxu0 %v1692
      %1712 = vmatpush.bf16.msra.mxu0 %v1691
      %1713 = vmatpush.bf16.msra.mxu0 %v1690
      %1714 = vmatmul.bf16.gmra.mxu0 %v1650
      %v1715 = vpop.f32.mrf.mxu0
      %v1716 = vadd.f32 0.0, %v1715
      %v1717 = vpop.f32.mrf.mxu0
      %v1718 = vadd.f32 0.0, %v1717
      %1719 = vmatmul.bf16.gmra.mxu0 %v1651
      %v1720 = vpop.f32.mrf.mxu0
      %v1721 = vadd.f32 0.0, %v1720
      %v1722 = vpop.f32.mrf.mxu0
      %v1723 = vadd.f32 0.0, %v1722
      %1724 = vmatmul.bf16.gmra.mxu0 %v1652
      %v1725 = vpop.f32.mrf.mxu0
      %v1726 = vadd.f32 0.0, %v1725
      %v1727 = vpop.f32.mrf.mxu0
      %v1728 = vadd.f32 0.0, %v1727
      %1729 = vmatmul.bf16.gmra.mxu0 %v1653
      %v1730 = vpop.f32.mrf.mxu0
      %v1731 = vadd.f32 0.0, %v1730
      %v1732 = vpop.f32.mrf.mxu0
      %v1733 = vadd.f32 0.0, %v1732
      %1734 = vdwg.mxu0
      %v1735 = vadd.f32 %v1489, %v1716
      %v1736 = vadd.f32 %v1490, %v1718
      %v1737 = vadd.f32 %v1491, %v1721
      %v1738 = vadd.f32 %v1492, %v1723
      %v1739 = vadd.f32 %v1493, %v1726
      %v1740 = vadd.f32 %v1494, %v1728
      %v1741 = vadd.f32 %v1495, %v1731
      %v1742 = vadd.f32 %v1496, %v1733
      %v1743 = vld [vmem:[%s1362] sm:$0xe]
      %v1744 = vld [vmem:[%s1362 + $0x8] sm:$0xe]
      %v1745 = vld [vmem:[%s1362 + $0x10] sm:$0xe]
      %v1746 = vld [vmem:[%s1362 + $0x18] sm:$0xe]
      %v1747 = vld [vmem:[%s1362 + $0x20] sm:$0xe]
      %v1748 = vld [vmem:[%s1362 + $0x28] sm:$0xe]
      %v1749 = vld [vmem:[%s1362 + $0x30] sm:$0xe]
      %v1750 = vld [vmem:[%s1362 + $0x38] sm:$0xe]
      %v1767 = vrot.slane %v1743, 5
      %v1768 = vrot.slane %v1767, 4
      %v1769 = vrot.slane %v1498, 5
      %v1770 = vsel %vm656, %v1768, %v1769
      %v1771 = vrot.slane %v1744, 5
      %v1772 = vrot.slane %v1771, 4
      %v1773 = vrot.slane %v1500, 5
      %v1774 = vsel %vm656, %v1772, %v1773
      %v1775 = vrot.slane %v1745, 5
      %v1776 = vrot.slane %v1775, 4
      %v1777 = vrot.slane %v1502, 5
      %v1778 = vsel %vm656, %v1776, %v1777
      %v1779 = vrot.slane %v1746, 5
      %v1780 = vrot.slane %v1779, 4
      %v1781 = vrot.slane %v1504, 5
      %v1782 = vsel %vm656, %v1780, %v1781
      %v1783 = vrot.slane %v1747, 5
      %v1784 = vrot.slane %v1783, 4
      %v1785 = vrot.slane %v1506, 5
      %v1786 = vsel %vm656, %v1784, %v1785
      %v1787 = vrot.slane %v1748, 5
      %v1788 = vrot.slane %v1787, 4
      %v1789 = vrot.slane %v1508, 5
      %v1790 = vsel %vm656, %v1788, %v1789
      %v1791 = vrot.slane %v1749, 5
      %v1792 = vrot.slane %v1791, 4
      %v1793 = vrot.slane %v1510, 5
      %v1794 = vsel %vm656, %v1792, %v1793
      %v1795 = vrot.slane %v1750, 5
      %v1796 = vrot.slane %v1795, 4
      %v1797 = vrot.slane %v1512, 5
      %v1798 = vsel %vm656, %v1796, %v1797
      %s1799 = scalar_lea.vmem %s1, 512
      %v1800 = vld [vmem:[%s1799] sm:$0xf]
      %v1801 = vld [vmem:[%s1799 + $0x4] sm:$0xf]
      %v1802 = vld [vmem:[%s1799 + $0x8] sm:$0xf]
      %v1803 = vld [vmem:[%s1799 + $0xc] sm:$0xf]
      %v1804 = vld [vmem:[%s1799 + $0x10] sm:$0xf]
      %v1805 = vld [vmem:[%s1799 + $0x14] sm:$0xf]
      %v1806 = vld [vmem:[%s1799 + $0x18] sm:$0xf]
      %v1807 = vld [vmem:[%s1799 + $0x1c] sm:$0xf]
      %v1808 = vld [vmem:[%s1799 + $0x20] sm:$0xf]
      %v1809 = vld [vmem:[%s1799 + $0x24] sm:$0xf]
      %v1810 = vld [vmem:[%s1799 + $0x28] sm:$0xf]
      %v1811 = vld [vmem:[%s1799 + $0x2c] sm:$0xf]
      %v1812 = vld [vmem:[%s1799 + $0x30] sm:$0xf]
      %v1813 = vld [vmem:[%s1799 + $0x34] sm:$0xf]
      %v1814 = vld [vmem:[%s1799 + $0x38] sm:$0xf]
      %v1815 = vld [vmem:[%s1799 + $0x3c] sm:$0xf]
      %v1816 = vunpack.c.l.b16 %v1770
      %v1817 = vunpack.c.l.b16 %v1774
      %v1818 = vunpack.c.l.b16 %v1778
      %v1819 = vunpack.c.l.b16 %v1782
      %v1820 = vunpack.c.l.b16 %v1786
      %v1821 = vunpack.c.l.b16 %v1790
      %v1822 = vunpack.c.l.b16 %v1794
      %v1823 = vunpack.c.l.b16 %v1798
      %v1824 = vpack.c.b16 %v1817, %v1816
      %v1825 = vpack.c.b16 %v1819, %v1818
      %v1826 = vpack.c.b16 %v1821, %v1820
      %v1827 = vpack.c.b16 %v1823, %v1822
      %v1848 = vunpack.c.l.b16 %v1800
      %v1849 = vunpack.c.l.b16 %v1801
      %v1850 = vunpack.c.l.b16 %v1802
      %v1851 = vunpack.c.l.b16 %v1803
      %v1852 = vunpack.c.l.b16 %v1804
      %v1853 = vunpack.c.l.b16 %v1805
      %v1854 = vunpack.c.l.b16 %v1806
      %v1855 = vunpack.c.l.b16 %v1807
      %v1856 = vunpack.c.l.b16 %v1808
      %v1857 = vunpack.c.l.b16 %v1809
      %v1858 = vunpack.c.l.b16 %v1810
      %v1859 = vunpack.c.l.b16 %v1811
      %v1860 = vunpack.c.l.b16 %v1812
      %v1861 = vunpack.c.l.b16 %v1813
      %v1862 = vunpack.c.l.b16 %v1814
      %v1863 = vunpack.c.l.b16 %v1815
      %v1864 = vpack.c.b16 %v1849, %v1848
      %v1865 = vpack.c.b16 %v1851, %v1850
      %v1866 = vpack.c.b16 %v1853, %v1852
      %v1867 = vpack.c.b16 %v1855, %v1854
      %v1868 = vpack.c.b16 %v1857, %v1856
      %v1869 = vpack.c.b16 %v1859, %v1858
      %v1870 = vpack.c.b16 %v1861, %v1860
      %v1871 = vpack.c.b16 %v1863, %v1862
      %1880 = vmatpush.bf16.msra.mxu0 %v1871
      %1881 = vmatpush.bf16.msra.mxu0 %v1870
      %1882 = vmatpush.bf16.msra.mxu0 %v1869
      %1883 = vmatpush.bf16.msra.mxu0 %v1868
      %1884 = vmatpush.bf16.msra.mxu0 %v1867
      %1885 = vmatpush.bf16.msra.mxu0 %v1866
      %1886 = vmatpush.bf16.msra.mxu0 %v1865
      %1887 = vmatpush.bf16.msra.mxu0 %v1864
      %1888 = vmatmul.bf16.gmra.mxu0 %v1824
      %v1889 = vpop.f32.mrf.mxu0
      %v1890 = vadd.f32 0.0, %v1889
      %v1891 = vpop.f32.mrf.mxu0
      %v1892 = vadd.f32 0.0, %v1891
      %1893 = vmatmul.bf16.gmra.mxu0 %v1825
      %v1894 = vpop.f32.mrf.mxu0
      %v1895 = vadd.f32 0.0, %v1894
      %v1896 = vpop.f32.mrf.mxu0
      %v1897 = vadd.f32 0.0, %v1896
      %1898 = vmatmul.bf16.gmra.mxu0 %v1826
      %v1899 = vpop.f32.mrf.mxu0
      %v1900 = vadd.f32 0.0, %v1899
      %v1901 = vpop.f32.mrf.mxu0
      %v1902 = vadd.f32 0.0, %v1901
      %1903 = vmatmul.bf16.gmra.mxu0 %v1827
      %v1904 = vpop.f32.mrf.mxu0
      %v1905 = vadd.f32 0.0, %v1904
      %v1906 = vpop.f32.mrf.mxu0
      %v1907 = vadd.f32 0.0, %v1906
      %1908 = vdwg.mxu0
      %v1909 = vadd.f32 %v1735, %v1890
      %v1910 = vadd.f32 %v1736, %v1892
      %v1911 = vadd.f32 %v1737, %v1895
      %v1912 = vadd.f32 %v1738, %v1897
      %v1913 = vadd.f32 %v1739, %v1900
      %v1914 = vadd.f32 %v1740, %v1902
      %v1915 = vadd.f32 %v1741, %v1905
      %v1916 = vadd.f32 %v1742, %v1907
      %v1917 = vld [vmem:[%s2] sm:$0x1]
      %v1919 = vperm.slane %v1917, 0
      %v1921 = vadd.f32 %v1909, %v1919
      %v1922 = vadd.f32 %v1910, %v1919
      %v1923 = vadd.f32 %v1911, %v1919
      %v1924 = vadd.f32 %v1912, %v1919
      %v1925 = vadd.f32 %v1913, %v1919
      %v1926 = vadd.f32 %v1914, %v1919
      %v1927 = vadd.f32 %v1915, %v1919
      %v1928 = vadd.f32 %v1916, %v1919
      %v1929 = vmax.f32 %v1921, 0.0
      %v1930 = vmax.f32 %v1922, 0.0
      %v1931 = vmax.f32 %v1923, 0.0
      %v1932 = vmax.f32 %v1924, 0.0
      %v1933 = vmax.f32 %v1925, 0.0
      %v1934 = vmax.f32 %v1926, 0.0
      %v1935 = vmax.f32 %v1927, 0.0
      %v1936 = vmax.f32 %v1928, 0.0
      %v1937 = vld [vmem:[%s266] sm:$0xf]
      %v1938 = vld [vmem:[%s266 + $0x4] sm:$0xf]
      %v1939 = vld [vmem:[%s266 + $0x8] sm:$0xf]
      %v1940 = vld [vmem:[%s266 + $0xc] sm:$0xf]
      %v1941 = vld [vmem:[%s266 + $0x10] sm:$0xf]
      %v1942 = vld [vmem:[%s266 + $0x14] sm:$0xf]
      %v1943 = vld [vmem:[%s266 + $0x18] sm:$0xf]
      %v1944 = vld [vmem:[%s266 + $0x1c] sm:$0xf]
      %v1945 = vld [vmem:[%s4] sm:$0xf]
      %v1946 = vld [vmem:[%s4 + $0x4] sm:$0xf]
      %v1947 = vld [vmem:[%s4 + $0x8] sm:$0xf]
      %v1948 = vld [vmem:[%s4 + $0xc] sm:$0xf]
      %v1949 = vld [vmem:[%s4 + $0x10] sm:$0xf]
      %v1950 = vld [vmem:[%s4 + $0x14] sm:$0xf]
      %v1951 = vld [vmem:[%s4 + $0x18] sm:$0xf]
      %v1952 = vld [vmem:[%s4 + $0x1c] sm:$0xf]
      %v1953 = vld [vmem:[%s4 + $0x20] sm:$0xf]
      %v1954 = vld [vmem:[%s4 + $0x24] sm:$0xf]
      %v1955 = vld [vmem:[%s4 + $0x28] sm:$0xf]
      %v1956 = vld [vmem:[%s4 + $0x2c] sm:$0xf]
      %v1957 = vld [vmem:[%s4 + $0x30] sm:$0xf]
      %v1958 = vld [vmem:[%s4 + $0x34] sm:$0xf]
      %v1959 = vld [vmem:[%s4 + $0x38] sm:$0xf]
      %v1960 = vld [vmem:[%s4 + $0x3c] sm:$0xf]
      %v1961 = vld [vmem:[%s5] sm:$0x1]
      %v1963 = vperm.slane %v1961, 0
      %v1973 = vunpack.c.l.b16 %v1937
      %v1974 = vunpack.c.l.b16 %v1938
      %v1975 = vunpack.c.l.b16 %v1939
      %v1976 = vunpack.c.l.b16 %v1940
      %v1977 = vunpack.c.l.b16 %v1941
      %v1978 = vunpack.c.l.b16 %v1942
      %v1979 = vunpack.c.l.b16 %v1943
      %v1980 = vunpack.c.l.b16 %v1944
      %v1981 = vpack.c.b16 %v1974, %v1973
      %v1982 = vpack.c.b16 %v1976, %v1975
      %v1983 = vpack.c.b16 %v1978, %v1977
      %v1984 = vpack.c.b16 %v1980, %v1979
      %v2005 = vunpack.c.l.b16 %v1945
      %v2006 = vunpack.c.l.b16 %v1946
      %v2007 = vunpack.c.l.b16 %v1947
      %v2008 = vunpack.c.l.b16 %v1948
      %v2009 = vunpack.c.l.b16 %v1949
      %v2010 = vunpack.c.l.b16 %v1950
      %v2011 = vunpack.c.l.b16 %v1951
      %v2012 = vunpack.c.l.b16 %v1952
      %v2013 = vunpack.c.l.b16 %v1953
      %v2014 = vunpack.c.l.b16 %v1954
      %v2015 = vunpack.c.l.b16 %v1955
      %v2016 = vunpack.c.l.b16 %v1956
      %v2017 = vunpack.c.l.b16 %v1957
      %v2018 = vunpack.c.l.b16 %v1958
      %v2019 = vunpack.c.l.b16 %v1959
      %v2020 = vunpack.c.l.b16 %v1960
      %v2021 = vpack.c.b16 %v2006, %v2005
      %v2022 = vpack.c.b16 %v2008, %v2007
      %v2023 = vpack.c.b16 %v2010, %v2009
      %v2024 = vpack.c.b16 %v2012, %v2011
      %v2025 = vpack.c.b16 %v2014, %v2013
      %v2026 = vpack.c.b16 %v2016, %v2015
      %v2027 = vpack.c.b16 %v2018, %v2017
      %v2028 = vpack.c.b16 %v2020, %v2019
      %2037 = vmatpush.bf16.msra.mxu0 %v2028
      %2038 = vmatpush.bf16.msra.mxu0 %v2027
      %2039 = vmatpush.bf16.msra.mxu0 %v2026
      %2040 = vmatpush.bf16.msra.mxu0 %v2025
      %2041 = vmatpush.bf16.msra.mxu0 %v2024
      %2042 = vmatpush.bf16.msra.mxu0 %v2023
      %2043 = vmatpush.bf16.msra.mxu0 %v2022
      %2044 = vmatpush.bf16.msra.mxu0 %v2021
      %2045 = vmatmul.bf16.gmra.mxu0 %v1981
      %v2046 = vpop.f32.mrf.mxu0
      %v2047 = vadd.f32 %v1963, %v2046
      %v2048 = vpop.f32.mrf.mxu0
      %v2049 = vadd.f32 %v1963, %v2048
      %2050 = vmatmul.bf16.gmra.mxu0 %v1982
      %v2051 = vpop.f32.mrf.mxu0
      %v2052 = vadd.f32 %v1963, %v2051
      %v2053 = vpop.f32.mrf.mxu0
      %v2054 = vadd.f32 %v1963, %v2053
      %2055 = vmatmul.bf16.gmra.mxu0 %v1983
      %v2056 = vpop.f32.mrf.mxu0
      %v2057 = vadd.f32 %v1963, %v2056
      %v2058 = vpop.f32.mrf.mxu0
      %v2059 = vadd.f32 %v1963, %v2058
      %2060 = vmatmul.bf16.gmra.mxu0 %v1984
      %v2061 = vpop.f32.mrf.mxu0
      %v2062 = vadd.f32 %v1963, %v2061
      %v2063 = vpop.f32.mrf.mxu0
      %v2064 = vadd.f32 %v1963, %v2063
      %2065 = vdwg.mxu0
      %v2066 = vadd.f32 %v1929, %v2047
      %v2067 = vadd.f32 %v1930, %v2049
      %v2068 = vadd.f32 %v1931, %v2052
      %v2069 = vadd.f32 %v1932, %v2054
      %v2070 = vadd.f32 %v1933, %v2057
      %v2071 = vadd.f32 %v1934, %v2059
      %v2072 = vadd.f32 %v1935, %v2062
      %v2073 = vadd.f32 %v1936, %v2064
      %v2074 = vmax.f32 %v2066, 0.0
      %v2075 = vmax.f32 %v2067, 0.0
      %v2076 = vmax.f32 %v2068, 0.0
      %v2077 = vmax.f32 %v2069, 0.0
      %v2078 = vmax.f32 %v2070, 0.0
      %v2079 = vmax.f32 %v2071, 0.0
      %v2080 = vmax.f32 %v2072, 0.0
      %v2081 = vmax.f32 %v2073, 0.0
      %2082 = vst [vmem:[%s271] sm:$0xff] %v2074
      %2083 = vst [vmem:[%s271 + $0x8] sm:$0xff] %v2075
      %2084 = vst [vmem:[%s271 + $0x10] sm:$0xff] %v2076
      %2085 = vst [vmem:[%s271 + $0x18] sm:$0xff] %v2077
      %2086 = vst [vmem:[%s271 + $0x20] sm:$0xff] %v2078
      %2087 = vst [vmem:[%s271 + $0x28] sm:$0xff] %v2079
      %2088 = vst [vmem:[%s271 + $0x30] sm:$0xff] %v2080
      %2089 = vst [vmem:[%s271 + $0x38] sm:$0xff] %v2081
      %p2090 = scmp.lt.s32.totalorder %s17, 1
      %s2091 = scalar_select %p2090, %s17, 1
      %s2092 = smul.addr %s2091, 8
      %s2093 = smul.addr %s2092, 8
      %s2094 = scalar_lea.vmem %s6, %s2093
      // Predicated region
      $region45: #{basic_block_forward.3} parent=43 // pred_check
        %p2095 = pneg %p171
      $region46: #{basic_block_forward.3} parent=43 // pred_check_branch
        %2097 = sbr.rel (%p2095) target = $region48
      $region47: #{basic_block_forward.3} parent=43 // pred_region
        _
      $region48: #{basic_block_forward.3} parent=43 // pred_fallthru
        _
    $region44: #{basic_block_forward.3} parent=5 // pred_fallthru
      _
    %p2098 = scmp.le.s32.totalorder 2, %s12
    // Predicated region
    $region49: #{basic_block_forward.3} parent=5 // pred_check
      %p2099 = pneg %p2098
    $region50: #{basic_block_forward.3} parent=5 // pred_check_branch
      %2101 = sbr.rel (%p2099) target = $region52
    $region51: #{basic_block_forward.3} parent=5 // pred_region
      %s2102 = ssub.s32 %s12, 2
      // Predicated region
      $region53: #{basic_block_forward.3} parent=51 // pred_check
        %p2103 = pneg %p177
      $region54: #{basic_block_forward.3} parent=51 // pred_check_branch
        %2105 = sbr.rel (%p2103) target = $region56
      $region55: #{basic_block_forward.3} parent=51 // pred_region
        %p2106 = scmp.lt.s32.totalorder %s18, 1
        %s2107 = scalar_select %p2106, %s18, 1
        %s2108 = smul.addr %s2107, 8
        %s2109 = smul.addr %s2108, 8
        %s2110 = scalar_lea.vmem %s6, %s2109
      $region56: #{basic_block_forward.3} parent=51 // pred_fallthru
        _
    $region52: #{basic_block_forward.3} parent=5 // pred_fallthru
      _
  $region6: #{basic_block_forward.3} parent=0 // loop_footer
    %s16 = sadd.s32 1, %s12
  $region7: #{basic_block_forward.3} parent=0 // loop_footer_branch
    %11 = sbr.rel target = $region3
  $region8: #{basic_block_forward.3} parent=0 // loop_exit
    _

</llo_original>
